<compile_context>
chip_gen: v6e
topology: v6e:2x2x1
jax: 0.10.0
libtpu: 0.0.40
codegen_flags: <defaults>
</compile_context>

<pallas_src>
import functools

import numpy as np
import jax
import jax.numpy as jnp
from jax.experimental import pallas as pl
from jax.experimental.pallas import tpu as pltpu


# ----------------------------------------------------------------------------
# Host-side interpolation-coefficient helpers.
# ----------------------------------------------------------------------------
def _interp_coeffs(n_in: int, n_out: int, spacing: float):
    """1-D linear-interp taps: output sample i reads continuous input index i/spacing."""
    c = np.arange(n_out, dtype=np.float64) / float(spacing)
    i0 = np.clip(np.floor(c).astype(np.int64), 0, max(n_in - 2, 0))
    w = np.clip(c - i0, 0.0, 1.0).astype(np.float32)
    i1 = np.minimum(i0 + 1, n_in - 1)
    return i0.astype(np.int32), i1.astype(np.int32), w


def _interp_matrix(n_in: int, n_out: int, spacing: float) -> np.ndarray:
    """(n_out, n_in) dense 1-D linear-interpolation matrix (2 nonzeros/row)."""
    i0, i1, w = _interp_coeffs(n_in, n_out, spacing)
    A = np.zeros((n_out, n_in), dtype=np.float32)
    rows = np.arange(n_out)
    A[rows, i0] += 1.0 - w
    A[rows, i1] += w
    return A


# ----------------------------------------------------------------------------
# Kernel: one batch of Bz output z-slices per grid step.
# ----------------------------------------------------------------------------
def _resample_batch_kernel(zstart_ref, rel0_ref, rel1_ref,      # scalar prefetch (SMEM)
                           wz_ref, vol_hbm, ay_ref, axt_ref,    # inputs
                           out_ref,                             # (Bz, Ho, Wo) output block
                           win_ref, sem,                        # scratch: window ring + DMA sems
                           *, bz: int, win: int, x_first: bool, mm_dtype):
    # zstart_ref: (nblk,)    first input z-slice of each batch's window
    # rel0/rel1 : (nblk*bz,) per-output-slice floor / floor+1 index, window-relative
    # wz_ref    : (1, bz, W) per-output-slice z-blend weight, lane-broadcast
    # vol_hbm   : (D, H, W)  full volume left in HBM (memory_space=pl.ANY)
    # ay_ref    : (Ho, H)    y interpolation matrix
    # axt_ref   : (W, Wo)    x interpolation matrix, transposed
    # win_ref   : (2*win, H, W) double-buffered input-slice window
    k = pl.program_id(0)
    nblk = pl.num_programs(0)
    slot = k % 2

    def start_window(blk_idx, s):
        z0 = zstart_ref[blk_idx]
        pltpu.make_async_copy(vol_hbm.at[pl.ds(z0, win)],
                              win_ref.at[pl.ds(s * win, win)],
                              sem.at[s]).start()

    # Prime the very first window (grid axis is sequential / "arbitrary").
    @pl.when(k == 0)
    def _():
        start_window(0, 0)

    # Wait for this step's window (prefetched at step k-1, or primed above).
    pltpu.make_async_copy(vol_hbm.at[pl.ds(0, win)],
                          win_ref.at[pl.ds(slot * win, win)],
                          sem.at[slot]).wait()

    # Prefetch the next step's window while this step computes.
    @pl.when(k + 1 < nblk)
    def _():
        start_window(k + 1, 1 - slot)

    ay = ay_ref[...]
    axt = axt_ref[...]
    base = slot * win
    for j in range(bz):
        idx = k * bz + j
        r0 = rel0_ref[idx]
        r1 = rel1_ref[idx]
        # 2-tap z blend on the VPU, kept in f32 (v5e has no bf16 VALU).
        s0 = win_ref[base + r0].astype(jnp.float32)          # (H, W)
        s1 = win_ref[base + r1].astype(jnp.float32)          # (H, W)
        wrow = wz_ref[0, j:j + 1, :]                         # (1, W)
        zb = (s0 + wrow * (s1 - s0)).astype(mm_dtype)        # (H, W)
        if x_first:
            # (H, W) @ (W, Wo) -> (H, Wo);  (Ho, H) @ (H, Wo) -> (Ho, Wo)
            tmp = jnp.dot(zb, axt, preferred_element_type=jnp.float32)
            res = jnp.dot(ay, tmp.astype(mm_dtype),
                          preferred_element_type=jnp.float32)
        else:
            # (Ho, H) @ (H, W) -> (Ho, W);  (Ho, W) @ (W, Wo) -> (Ho, Wo)
            tmp = jnp.dot(ay, zb, preferred_element_type=jnp.float32)
            res = jnp.dot(tmp.astype(mm_dtype), axt,
                          preferred_element_type=jnp.float32)
        out_ref[j] = res.astype(out_ref.dtype)


# ----------------------------------------------------------------------------
# Wrapper.
# ----------------------------------------------------------------------------
def resample_isotropic(vol: jax.Array, spacing, *, matmul_dtype=jnp.bfloat16) -> jax.Array:
    """Pallas equivalent of ResampleIsotropic.forward.

    vol          : (D, H, W) volume (z, y, x order).  Passing a bf16 volume
                   halves the streamed input HBM bytes (the blend is still f32).
    spacing      : (sx, sy, sz) physical spacing (SimpleITK order)
    matmul_dtype : operand dtype for the y/x MXU matmuls (f32 accumulation).
    """
    vol = jnp.asarray(vol)
    D, H, W = vol.shape
    sx, sy, sz = (float(s) for s in spacing)
    Wo, Ho, Do = int(W * sx), int(H * sy), int(D * sz)
    if min(Do, Ho, Wo) <= 0:
        return jnp.zeros((max(Do, 0), max(Ho, 0), max(Wo, 0)), vol.dtype)

    # z taps (window gather + blend) and y/x interpolation matrices.
    zi0, zi1, zw = _interp_coeffs(D, Do, sz)
    Ay = _interp_matrix(H, Ho, sy)                              # (Ho, H)
    Axt = np.ascontiguousarray(_interp_matrix(W, Wo, sx).T)     # (W, Wo)

    vol_isz = np.dtype(vol.dtype).itemsize
    mm_isz = np.dtype(matmul_dtype).itemsize

    # --- generation-aware VMEM budget --------------------------------------
    try:
        vmem_cap = int(pltpu.get_tpu_info().vmem_capacity_bytes)
    except Exception:                        # pragma: no cover - fallback
        vmem_cap = 64 * 2**20                # conservative (v7x per-TC)
    vmem_budget = min(int(vmem_cap * 0.55), 72 * 2**20)

    def _win_of(bz):                         # conservative window-slice bound
        return min(D, int(np.floor((bz - 1) / sz)) + 2)

    def _vmem_need(bz):
        wn = _win_of(bz)
        return (2 * wn * H * W * vol_isz                         # window ring
                + 2 * bz * Ho * Wo * vol_isz                     # output block (x2 buffers)
                + 2 * (Ho * H + W * Wo) * mm_isz                 # interp matrices (x2 buffers)
                + 2 * 2 * bz * W * 4                             # wz stream
                + 3 * (H * W * (4 + mm_isz)
                       + 4 * max(H * Wo, Ho * W) + 4 * Ho * Wo)  # in-flight intermediates
                + (2 << 20))                                     # slack

    bz_cap = 1
    for cand in range(1, 17):                # cap batch at 16 (bounds unroll)
        if cand > Do:
            break
        if _vmem_need(cand) <= vmem_budget:
            bz_cap = cand
        else:
            break
    # Prefer a batch size that divides Do exactly (no partial trailing block);
    # fall back to the VMEM-sized cap when Do has no reasonable divisor.
    divisors = [d for d in range(1, bz_cap + 1) if Do % d == 0]
    bz = divisors[-1] if divisors[-1] * 2 >= bz_cap else bz_cap
    nblk = (Do + bz - 1) // bz
    do_pad = nblk * bz

    # --- per-batch window + window-relative taps ----------------------------
    pad = do_pad - Do
    def _pad_edge(a):
        return np.concatenate([a, np.repeat(a[-1:], pad, axis=0)]) if pad else a
    zi0p, zi1p, zwp = _pad_edge(zi0), _pad_edge(zi1), _pad_edge(zw)
    zi0b = zi0p.reshape(nblk, bz)
    zi1b = zi1p.reshape(nblk, bz)
    wmin = zi0b.min(axis=1)
    wmax = zi1b.max(axis=1)
    win = int((wmax - wmin + 1).max())                       # exact window size (<= D)
    zstart = np.maximum(np.minimum(wmin, D - win), 0).astype(np.int32)
    rel0 = (zi0p - np.repeat(zstart, bz)).astype(np.int32)
    rel1 = (zi1p - np.repeat(zstart, bz)).astype(np.int32)
    assert rel0.min() >= 0 and rel1.min() >= 0
    assert rel0.max() < win and rel1.max() < win
    # Lane-broadcast z-blend weights: one tiny (bz, W) block per grid step.
    wz = np.ascontiguousarray(
        np.broadcast_to(zwp.reshape(nblk, bz, 1), (nblk, bz, W))).astype(np.float32)

    # --- statically pick the cheaper matmul order (MXU-tile quantized) ------
    def _tiles(n, t=256):
        return -(-max(int(n), 1) // t)
    cx = _tiles(H) * _tiles(W) * _tiles(Wo) + _tiles(Ho) * _tiles(H) * _tiles(Wo)
    cy = _tiles(Ho) * _tiles(H) * _tiles(W) + _tiles(Ho) * _tiles(W) * _tiles(Wo)
    if cx != cy:
        x_first = cx < cy
    else:
        x_first = (H * W * Wo + Ho * H * Wo) <= (Ho * H * W + Ho * W * Wo)

    vmem_limit = int(min(max(_vmem_need(bz) * 1.3, 16 * 2**20), vmem_cap * 0.75))

    kernel = functools.partial(_resample_batch_kernel, bz=bz, win=win,
                               x_first=x_first, mm_dtype=matmul_dtype)

    out = pl.pallas_call(
        kernel,
        out_shape=jax.ShapeDtypeStruct((Do, Ho, Wo), vol.dtype),
        grid_spec=pltpu.PrefetchScalarGridSpec(
            num_scalar_prefetch=3,
            grid=(nblk,),
            in_specs=[
                pl.BlockSpec((1, bz, W), lambda k, *_: (k, 0, 0)),   # z-blend weights
                pl.BlockSpec(memory_space=pl.ANY),                   # full volume (HBM)
                pl.BlockSpec((Ho, H), lambda k, *_: (0, 0)),         # Ay (constant)
                pl.BlockSpec((W, Wo), lambda k, *_: (0, 0)),         # Ax^T (constant)
            ],
            out_specs=pl.BlockSpec((bz, Ho, Wo), lambda k, *_: (k, 0, 0)),
            scratch_shapes=[
                pltpu.VMEM((2 * win, H, W), vol.dtype),              # window ring
                pltpu.SemaphoreType.DMA((2,)),
            ]),
        compiler_params=pltpu.CompilerParams(
            # Sequential grid: required by the cross-step window prefetch.
            dimension_semantics=("arbitrary",),
            vmem_limit_bytes=vmem_limit),
    )(jnp.asarray(zstart), jnp.asarray(rel0), jnp.asarray(rel1),
      jnp.asarray(wz),
      vol,
      jnp.asarray(Ay, dtype=matmul_dtype),
      jnp.asarray(Axt, dtype=matmul_dtype))

    return out


# ----------------------------------------------------------------------------
# Self-test.
# ----------------------------------------------------------------------------
if __name__ == "__main__":
    key = jax.random.PRNGKey(0)

    def _reference(vol_np, spacing):
        D, H, W = vol_np.shape
        sx, sy, sz = spacing
        Ax = _interp_matrix(W, int(W * sx), sx)
        Ay = _interp_matrix(H, int(H * sy), sy)
        Az = _interp_matrix(D, int(D * sz), sz)
        return np.einsum("kd,jh,iw,dhw->kji", Az, Ay, Ax, vol_np)

    # Test 1: size (x, y, z) = (16, 16, 8), spacing (1.0, 1.5, 2.0)
    D, H, W = 8, 16, 16                   # array shape is (z, y, x)
    spacing1 = (1.0, 1.5, 2.0)            # (sx, sy, sz)
    vol1 = jax.random.normal(key, (D, H, W), dtype=jnp.float32)
    ref1 = _reference(np.asarray(vol1), spacing1)

    out_f32 = jax.block_until_ready(
        resample_isotropic(vol1, spacing1, matmul_dtype=jnp.float32))
    assert out_f32.shape == (16, 24, 16), out_f32.shape
    np.testing.assert_allclose(np.asarray(out_f32), ref1, rtol=1e-4, atol=1e-4)

    out_bf16 = jax.block_until_ready(resample_isotropic(vol1, spacing1))
    assert out_bf16.shape == (16, 24, 16), out_bf16.shape
    np.testing.assert_allclose(np.asarray(out_bf16), ref1, rtol=5e-2, atol=5e-2)

    # Test 2: multi-batch path (several grid steps, window prefetch ring).
    D2, H2, W2 = 40, 16, 16
    spacing2 = (1.25, 1.5, 1.0)
    vol2 = jax.random.normal(jax.random.PRNGKey(1), (D2, H2, W2), dtype=jnp.float32)
    ref2 = _reference(np.asarray(vol2), spacing2)
    out2 = jax.block_until_ready(
        resample_isotropic(vol2, spacing2, matmul_dtype=jnp.float32))
    assert out2.shape == (40, 24, 20), out2.shape
    np.testing.assert_allclose(np.asarray(out2), ref2, rtol=1e-4, atol=1e-4)

    print("KERNEL_OK")
</pallas_src>

<mosaic_0001>
module attributes {stable_mosaic.version = 11 : i64} {
  func.func @_resample_batch_kernel(%arg0: i32, %arg1: memref<1xi32, #tpu.memory_space<smem>>, %arg2: memref<16xi32, #tpu.memory_space<smem>>, %arg3: memref<16xi32, #tpu.memory_space<smem>>, %arg4: memref<1x16x16xf32, #tpu.memory_space<vmem>>, %arg5: memref<8x16x16xf32, #tpu.memory_space<any>>, %arg6: memref<24x16xf32, #tpu.memory_space<vmem>>, %arg7: memref<16x16xf32, #tpu.memory_space<vmem>>, %arg8: memref<16x24x16xf32, #tpu.memory_space<vmem>>, %arg9: memref<16x16x16xf32, #tpu.memory_space<vmem>>, %arg10: memref<2x!tpu.dma_semaphore, #tpu.memory_space<semaphore_mem>>) attributes {dimension_semantics = [#tpu.dimension_semantics<arbitrary>], iteration_bounds = array<i64: 1>, scalar_prefetch = 3 : i64, scratch_operands = 2 : i64, tpu.core_type = #tpu.core_type<tc>, window_params = [{transform_indices = @transform_0, window_bounds = array<i64: 1, 16, 16>}, {}, {pipeline_mode = #tpu.pipeline_mode<synchronous>, transform_indices = @transform_2, window_bounds = array<i64: 24, 16>}, {pipeline_mode = #tpu.pipeline_mode<synchronous>, transform_indices = @transform_3, window_bounds = array<i64: 16, 16>}, {transform_indices = @transform_4, window_bounds = array<i64: 16, 24, 16>}]} {
    %c2_i32 = arith.constant 2 : i32
    %c0_i32 = arith.constant 0 : i32
    %0 = arith.cmpi eq, %c2_i32, %c0_i32 : i32
    %c1_i32 = arith.constant 1 : i32
    %1 = arith.select %0, %c1_i32, %c2_i32 : i32
    %2 = arith.remsi %arg0, %1 : i32
    %c0_i32_0 = arith.constant 0 : i32
    %3 = arith.cmpi ne, %2, %c0_i32_0 : i32
    %c0_i32_1 = arith.constant 0 : i32
    %4 = arith.cmpi slt, %2, %c0_i32_1 : i32
    %c0_i32_2 = arith.constant 0 : i32
    %5 = arith.cmpi slt, %1, %c0_i32_2 : i32
    %6 = arith.xori %4, %5 : i1
    %7 = arith.andi %6, %3 : i1
    %8 = arith.addi %2, %1 : i32
    %9 = arith.select %7, %8, %2 : i32
    %c0_i32_3 = arith.constant 0 : i32
    %10 = arith.cmpi eq, %arg0, %c0_i32_3 : i32
    %11 = arith.extui %10 : i1 to i32
    %c0_i32_4 = arith.constant 0 : i32
    %12 = arith.cmpi ne, %11, %c0_i32_4 : i32
    scf.if %12 {
      %c0_212 = arith.constant 0 : index
      %425 = memref.load %arg1[%c0_212] : memref<1xi32, #tpu.memory_space<smem>>
      %c0_i32_213 = arith.constant 0 : i32
      %c0_i32_214 = arith.constant 0 : i32
      %c0_i32_215 = arith.constant 0 : i32
      %426 = tpu.memref_slice %arg5[%425, %c0_i32_214, %c0_i32_215] : memref<8x16x16xf32, #tpu.memory_space<any>> -> memref<8x16x16xf32, #tpu.memory_space<any>>
      %c0_i32_216 = arith.constant 0 : i32
      %c0_i32_217 = arith.constant 0 : i32
      %c0_i32_218 = arith.constant 0 : i32
      %427 = tpu.memref_slice %arg9[%c0_i32_216, %c0_i32_217, %c0_i32_218] : memref<16x16x16xf32, #tpu.memory_space<vmem>> -> memref<8x16x16xf32, #tpu.memory_space<vmem>>
      %428 = tpu.memref_slice %arg10[%c0_i32_213] : memref<2x!tpu.dma_semaphore, #tpu.memory_space<semaphore_mem>> -> memref<1x!tpu.dma_semaphore, #tpu.memory_space<semaphore_mem>>
      %429 = tpu.memref_squeeze %428 : memref<1x!tpu.dma_semaphore, #tpu.memory_space<semaphore_mem>> -> memref<!tpu.dma_semaphore, #tpu.memory_space<semaphore_mem>>
      tpu.enqueue_dma source(%426 : memref<8x16x16xf32, #tpu.memory_space<any>>) target(%427 : memref<8x16x16xf32, #tpu.memory_space<vmem>>) target_semaphore(%429 : memref<!tpu.dma_semaphore, #tpu.memory_space<semaphore_mem>>)
    } else {
    }
    %c8_i32 = arith.constant 8 : i32
    %13 = arith.muli %9, %c8_i32 : i32
    %c0_i32_5 = arith.constant 0 : i32
    %c0_i32_6 = arith.constant 0 : i32
    %c0_i32_7 = arith.constant 0 : i32
    %14 = tpu.memref_slice %arg5[%c0_i32_5, %c0_i32_6, %c0_i32_7] : memref<8x16x16xf32, #tpu.memory_space<any>> -> memref<8x16x16xf32, #tpu.memory_space<any>>
    %c0_i32_8 = arith.constant 0 : i32
    %c0_i32_9 = arith.constant 0 : i32
    %15 = tpu.memref_slice %arg9[%13, %c0_i32_8, %c0_i32_9] : memref<16x16x16xf32, #tpu.memory_space<vmem>> -> memref<8x16x16xf32, #tpu.memory_space<vmem>>
    %16 = tpu.memref_slice %arg10[%9] : memref<2x!tpu.dma_semaphore, #tpu.memory_space<semaphore_mem>> -> memref<1x!tpu.dma_semaphore, #tpu.memory_space<semaphore_mem>>
    %17 = tpu.memref_squeeze %16 : memref<1x!tpu.dma_semaphore, #tpu.memory_space<semaphore_mem>> -> memref<!tpu.dma_semaphore, #tpu.memory_space<semaphore_mem>>
    tpu.wait_dma2 semaphore(%17 : memref<!tpu.dma_semaphore, #tpu.memory_space<semaphore_mem>>) src(%14 : memref<8x16x16xf32, #tpu.memory_space<any>>) dst(%15 : memref<8x16x16xf32, #tpu.memory_space<vmem>>)
    %c1_i32_10 = arith.constant 1 : i32
    %18 = arith.addi %arg0, %c1_i32_10 : i32
    %c1_i32_11 = arith.constant 1 : i32
    %19 = arith.cmpi slt, %18, %c1_i32_11 : i32
    %20 = arith.extui %19 : i1 to i32
    %c0_i32_12 = arith.constant 0 : i32
    %21 = arith.cmpi ne, %20, %c0_i32_12 : i32
    scf.if %21 {
      %c1_i32_212 = arith.constant 1 : i32
      %425 = arith.addi %arg0, %c1_i32_212 : i32
      %c1_i32_213 = arith.constant 1 : i32
      %426 = arith.subi %c1_i32_213, %9 : i32
      %427 = arith.index_cast %425 : i32 to index
      %428 = memref.load %arg1[%427] : memref<1xi32, #tpu.memory_space<smem>>
      %c8_i32_214 = arith.constant 8 : i32
      %429 = arith.muli %426, %c8_i32_214 : i32
      %c0_i32_215 = arith.constant 0 : i32
      %c0_i32_216 = arith.constant 0 : i32
      %430 = tpu.memref_slice %arg5[%428, %c0_i32_215, %c0_i32_216] : memref<8x16x16xf32, #tpu.memory_space<any>> -> memref<8x16x16xf32, #tpu.memory_space<any>>
      %c0_i32_217 = arith.constant 0 : i32
      %c0_i32_218 = arith.constant 0 : i32
      %431 = tpu.memref_slice %arg9[%429, %c0_i32_217, %c0_i32_218] : memref<16x16x16xf32, #tpu.memory_space<vmem>> -> memref<8x16x16xf32, #tpu.memory_space<vmem>>
      %432 = tpu.memref_slice %arg10[%426] : memref<2x!tpu.dma_semaphore, #tpu.memory_space<semaphore_mem>> -> memref<1x!tpu.dma_semaphore, #tpu.memory_space<semaphore_mem>>
      %433 = tpu.memref_squeeze %432 : memref<1x!tpu.dma_semaphore, #tpu.memory_space<semaphore_mem>> -> memref<!tpu.dma_semaphore, #tpu.memory_space<semaphore_mem>>
      tpu.enqueue_dma source(%430 : memref<8x16x16xf32, #tpu.memory_space<any>>) target(%431 : memref<8x16x16xf32, #tpu.memory_space<vmem>>) target_semaphore(%433 : memref<!tpu.dma_semaphore, #tpu.memory_space<semaphore_mem>>)
    } else {
    }
    %c0 = arith.constant 0 : index
    %c0_13 = arith.constant 0 : index
    %22 = vector.load %arg6[%c0, %c0_13] : memref<24x16xf32, #tpu.memory_space<vmem>>, vector<24x16xf32>
    %c0_14 = arith.constant 0 : index
    %c0_15 = arith.constant 0 : index
    %23 = vector.load %arg7[%c0_14, %c0_15] : memref<16x16xf32, #tpu.memory_space<vmem>>, vector<16x16xf32>
    %c8_i32_16 = arith.constant 8 : i32
    %24 = arith.muli %9, %c8_i32_16 : i32
    %c16_i32 = arith.constant 16 : i32
    %25 = arith.muli %arg0, %c16_i32 : i32
    %c0_i32_17 = arith.constant 0 : i32
    %26 = arith.addi %25, %c0_i32_17 : i32
    %27 = arith.index_cast %26 : i32 to index
    %28 = memref.load %arg2[%27] : memref<16xi32, #tpu.memory_space<smem>>
    %29 = arith.index_cast %26 : i32 to index
    %30 = memref.load %arg3[%29] : memref<16xi32, #tpu.memory_space<smem>>
    %31 = arith.addi %24, %28 : i32
    %32 = arith.index_cast %31 : i32 to index
    %c0_18 = arith.constant 0 : index
    %c0_19 = arith.constant 0 : index
    %33 = vector.load %arg9[%32, %c0_18, %c0_19] : memref<16x16x16xf32, #tpu.memory_space<vmem>>, vector<1x16x16xf32>
    %34 = vector.shape_cast %33 : vector<1x16x16xf32> to vector<16x16xf32>
    %35 = arith.addi %24, %30 : i32
    %36 = arith.index_cast %35 : i32 to index
    %c0_20 = arith.constant 0 : index
    %c0_21 = arith.constant 0 : index
    %37 = vector.load %arg9[%36, %c0_20, %c0_21] : memref<16x16x16xf32, #tpu.memory_space<vmem>>, vector<1x16x16xf32>
    %38 = vector.shape_cast %37 : vector<1x16x16xf32> to vector<16x16xf32>
    %c0_22 = arith.constant 0 : index
    %c0_23 = arith.constant 0 : index
    %c0_24 = arith.constant 0 : index
    %39 = vector.load %arg4[%c0_22, %c0_23, %c0_24] : memref<1x16x16xf32, #tpu.memory_space<vmem>>, vector<1x1x16xf32>
    %40 = vector.shape_cast %39 : vector<1x1x16xf32> to vector<1x16xf32>
    %41 = arith.subf %38, %34 : vector<16x16xf32>
    %42 = vector.broadcast %40 : vector<1x16xf32> to vector<16x16xf32>
    %43 = arith.mulf %42, %41 : vector<16x16xf32>
    %44 = arith.addf %34, %43 : vector<16x16xf32>
    %cst = arith.constant dense<0.000000e+00> : vector<16x16xf32>
    %45 = tpu.matmul %44, %23, %cst {dimension_numbers = #tpu.dot_dimension_numbers<[1], [0], [0], [1], [0, 0, 1, 1], [], []>} : vector<16x16xf32>, vector<16x16xf32>, vector<16x16xf32> -> vector<16x16xf32>
    %cst_25 = arith.constant dense<0.000000e+00> : vector<24x16xf32>
    %46 = tpu.matmul %22, %45, %cst_25 {dimension_numbers = #tpu.dot_dimension_numbers<[1], [0], [0], [1], [0, 0, 1, 1], [], []>} : vector<24x16xf32>, vector<16x16xf32>, vector<24x16xf32> -> vector<24x16xf32>
    %c0_26 = arith.constant 0 : index
    %c0_27 = arith.constant 0 : index
    %c0_28 = arith.constant 0 : index
    %47 = vector.load %arg8[%c0_26, %c0_27, %c0_28] : memref<16x24x16xf32, #tpu.memory_space<vmem>>, vector<1x24x16xf32>
    %48 = vector.shape_cast %47 : vector<1x24x16xf32> to vector<24x16xf32>
    %49 = vector.shape_cast %46 : vector<24x16xf32> to vector<1x24x16xf32>
    tpu.vector_store %arg8[%c0_26, %c0_27, %c0_28], %49 {strides = array<i32>} : memref<16x24x16xf32, #tpu.memory_space<vmem>>, vector<1x24x16xf32>,
    %c16_i32_29 = arith.constant 16 : i32
    %50 = arith.muli %arg0, %c16_i32_29 : i32
    %c1_i32_30 = arith.constant 1 : i32
    %51 = arith.addi %50, %c1_i32_30 : i32
    %52 = arith.index_cast %51 : i32 to index
    %53 = memref.load %arg2[%52] : memref<16xi32, #tpu.memory_space<smem>>
    %54 = arith.index_cast %51 : i32 to index
    %55 = memref.load %arg3[%54] : memref<16xi32, #tpu.memory_space<smem>>
    %56 = arith.addi %24, %53 : i32
    %57 = arith.index_cast %56 : i32 to index
    %c0_31 = arith.constant 0 : index
    %c0_32 = arith.constant 0 : index
    %58 = vector.load %arg9[%57, %c0_31, %c0_32] : memref<16x16x16xf32, #tpu.memory_space<vmem>>, vector<1x16x16xf32>
    %59 = vector.shape_cast %58 : vector<1x16x16xf32> to vector<16x16xf32>
    %60 = arith.addi %24, %55 : i32
    %61 = arith.index_cast %60 : i32 to index
    %c0_33 = arith.constant 0 : index
    %c0_34 = arith.constant 0 : index
    %62 = vector.load %arg9[%61, %c0_33, %c0_34] : memref<16x16x16xf32, #tpu.memory_space<vmem>>, vector<1x16x16xf32>
    %63 = vector.shape_cast %62 : vector<1x16x16xf32> to vector<16x16xf32>
    %c0_35 = arith.constant 0 : index
    %c1 = arith.constant 1 : index
    %c0_36 = arith.constant 0 : index
    %64 = vector.load %arg4[%c0_35, %c1, %c0_36] : memref<1x16x16xf32, #tpu.memory_space<vmem>>, vector<1x1x16xf32>
    %65 = vector.shape_cast %64 : vector<1x1x16xf32> to vector<1x16xf32>
    %66 = arith.subf %63, %59 : vector<16x16xf32>
    %67 = vector.broadcast %65 : vector<1x16xf32> to vector<16x16xf32>
    %68 = arith.mulf %67, %66 : vector<16x16xf32>
    %69 = arith.addf %59, %68 : vector<16x16xf32>
    %cst_37 = arith.constant dense<0.000000e+00> : vector<16x16xf32>
    %70 = tpu.matmul %69, %23, %cst_37 {dimension_numbers = #tpu.dot_dimension_numbers<[1], [0], [0], [1], [0, 0, 1, 1], [], []>} : vector<16x16xf32>, vector<16x16xf32>, vector<16x16xf32> -> vector<16x16xf32>
    %cst_38 = arith.constant dense<0.000000e+00> : vector<24x16xf32>
    %71 = tpu.matmul %22, %70, %cst_38 {dimension_numbers = #tpu.dot_dimension_numbers<[1], [0], [0], [1], [0, 0, 1, 1], [], []>} : vector<24x16xf32>, vector<16x16xf32>, vector<24x16xf32> -> vector<24x16xf32>
    %c1_39 = arith.constant 1 : index
    %c0_40 = arith.constant 0 : index
    %c0_41 = arith.constant 0 : index
    %72 = vector.load %arg8[%c1_39, %c0_40, %c0_41] : memref<16x24x16xf32, #tpu.memory_space<vmem>>, vector<1x24x16xf32>
    %73 = vector.shape_cast %72 : vector<1x24x16xf32> to vector<24x16xf32>
    %74 = vector.shape_cast %71 : vector<24x16xf32> to vector<1x24x16xf32>
    tpu.vector_store %arg8[%c1_39, %c0_40, %c0_41], %74 {strides = array<i32>} : memref<16x24x16xf32, #tpu.memory_space<vmem>>, vector<1x24x16xf32>,
    %c16_i32_42 = arith.constant 16 : i32
    %75 = arith.muli %arg0, %c16_i32_42 : i32
    %c2_i32_43 = arith.constant 2 : i32
    %76 = arith.addi %75, %c2_i32_43 : i32
    %77 = arith.index_cast %76 : i32 to index
    %78 = memref.load %arg2[%77] : memref<16xi32, #tpu.memory_space<smem>>
    %79 = arith.index_cast %76 : i32 to index
    %80 = memref.load %arg3[%79] : memref<16xi32, #tpu.memory_space<smem>>
    %81 = arith.addi %24, %78 : i32
    %82 = arith.index_cast %81 : i32 to index
    %c0_44 = arith.constant 0 : index
    %c0_45 = arith.constant 0 : index
    %83 = vector.load %arg9[%82, %c0_44, %c0_45] : memref<16x16x16xf32, #tpu.memory_space<vmem>>, vector<1x16x16xf32>
    %84 = vector.shape_cast %83 : vector<1x16x16xf32> to vector<16x16xf32>
    %85 = arith.addi %24, %80 : i32
    %86 = arith.index_cast %85 : i32 to index
    %c0_46 = arith.constant 0 : index
    %c0_47 = arith.constant 0 : index
    %87 = vector.load %arg9[%86, %c0_46, %c0_47] : memref<16x16x16xf32, #tpu.memory_space<vmem>>, vector<1x16x16xf32>
    %88 = vector.shape_cast %87 : vector<1x16x16xf32> to vector<16x16xf32>
    %c0_48 = arith.constant 0 : index
    %c2 = arith.constant 2 : index
    %c0_49 = arith.constant 0 : index
    %89 = vector.load %arg4[%c0_48, %c2, %c0_49] : memref<1x16x16xf32, #tpu.memory_space<vmem>>, vector<1x1x16xf32>
    %90 = vector.shape_cast %89 : vector<1x1x16xf32> to vector<1x16xf32>
    %91 = arith.subf %88, %84 : vector<16x16xf32>
    %92 = vector.broadcast %90 : vector<1x16xf32> to vector<16x16xf32>
    %93 = arith.mulf %92, %91 : vector<16x16xf32>
    %94 = arith.addf %84, %93 : vector<16x16xf32>
    %cst_50 = arith.constant dense<0.000000e+00> : vector<16x16xf32>
    %95 = tpu.matmul %94, %23, %cst_50 {dimension_numbers = #tpu.dot_dimension_numbers<[1], [0], [0], [1], [0, 0, 1, 1], [], []>} : vector<16x16xf32>, vector<16x16xf32>, vector<16x16xf32> -> vector<16x16xf32>
    %cst_51 = arith.constant dense<0.000000e+00> : vector<24x16xf32>
    %96 = tpu.matmul %22, %95, %cst_51 {dimension_numbers = #tpu.dot_dimension_numbers<[1], [0], [0], [1], [0, 0, 1, 1], [], []>} : vector<24x16xf32>, vector<16x16xf32>, vector<24x16xf32> -> vector<24x16xf32>
    %c2_52 = arith.constant 2 : index
    %c0_53 = arith.constant 0 : index
    %c0_54 = arith.constant 0 : index
    %97 = vector.load %arg8[%c2_52, %c0_53, %c0_54] : memref<16x24x16xf32, #tpu.memory_space<vmem>>, vector<1x24x16xf32>
    %98 = vector.shape_cast %97 : vector<1x24x16xf32> to vector<24x16xf32>
    %99 = vector.shape_cast %96 : vector<24x16xf32> to vector<1x24x16xf32>
    tpu.vector_store %arg8[%c2_52, %c0_53, %c0_54], %99 {strides = array<i32>} : memref<16x24x16xf32, #tpu.memory_space<vmem>>, vector<1x24x16xf32>,
    %c16_i32_55 = arith.constant 16 : i32
    %100 = arith.muli %arg0, %c16_i32_55 : i32
    %c3_i32 = arith.constant 3 : i32
    %101 = arith.addi %100, %c3_i32 : i32
    %102 = arith.index_cast %101 : i32 to index
    %103 = memref.load %arg2[%102] : memref<16xi32, #tpu.memory_space<smem>>
    %104 = arith.index_cast %101 : i32 to index
    %105 = memref.load %arg3[%104] : memref<16xi32, #tpu.memory_space<smem>>
    %106 = arith.addi %24, %103 : i32
    %107 = arith.index_cast %106 : i32 to index
    %c0_56 = arith.constant 0 : index
    %c0_57 = arith.constant 0 : index
    %108 = vector.load %arg9[%107, %c0_56, %c0_57] : memref<16x16x16xf32, #tpu.memory_space<vmem>>, vector<1x16x16xf32>
    %109 = vector.shape_cast %108 : vector<1x16x16xf32> to vector<16x16xf32>
    %110 = arith.addi %24, %105 : i32
    %111 = arith.index_cast %110 : i32 to index
    %c0_58 = arith.constant 0 : index
    %c0_59 = arith.constant 0 : index
    %112 = vector.load %arg9[%111, %c0_58, %c0_59] : memref<16x16x16xf32, #tpu.memory_space<vmem>>, vector<1x16x16xf32>
    %113 = vector.shape_cast %112 : vector<1x16x16xf32> to vector<16x16xf32>
    %c0_60 = arith.constant 0 : index
    %c3 = arith.constant 3 : index
    %c0_61 = arith.constant 0 : index
    %114 = vector.load %arg4[%c0_60, %c3, %c0_61] : memref<1x16x16xf32, #tpu.memory_space<vmem>>, vector<1x1x16xf32>
    %115 = vector.shape_cast %114 : vector<1x1x16xf32> to vector<1x16xf32>
    %116 = arith.subf %113, %109 : vector<16x16xf32>
    %117 = vector.broadcast %115 : vector<1x16xf32> to vector<16x16xf32>
    %118 = arith.mulf %117, %116 : vector<16x16xf32>
    %119 = arith.addf %109, %118 : vector<16x16xf32>
    %cst_62 = arith.constant dense<0.000000e+00> : vector<16x16xf32>
    %120 = tpu.matmul %119, %23, %cst_62 {dimension_numbers = #tpu.dot_dimension_numbers<[1], [0], [0], [1], [0, 0, 1, 1], [], []>} : vector<16x16xf32>, vector<16x16xf32>, vector<16x16xf32> -> vector<16x16xf32>
    %cst_63 = arith.constant dense<0.000000e+00> : vector<24x16xf32>
    %121 = tpu.matmul %22, %120, %cst_63 {dimension_numbers = #tpu.dot_dimension_numbers<[1], [0], [0], [1], [0, 0, 1, 1], [], []>} : vector<24x16xf32>, vector<16x16xf32>, vector<24x16xf32> -> vector<24x16xf32>
    %c3_64 = arith.constant 3 : index
    %c0_65 = arith.constant 0 : index
    %c0_66 = arith.constant 0 : index
    %122 = vector.load %arg8[%c3_64, %c0_65, %c0_66] : memref<16x24x16xf32, #tpu.memory_space<vmem>>, vector<1x24x16xf32>
    %123 = vector.shape_cast %122 : vector<1x24x16xf32> to vector<24x16xf32>
    %124 = vector.shape_cast %121 : vector<24x16xf32> to vector<1x24x16xf32>
    tpu.vector_store %arg8[%c3_64, %c0_65, %c0_66], %124 {strides = array<i32>} : memref<16x24x16xf32, #tpu.memory_space<vmem>>, vector<1x24x16xf32>,
    %c16_i32_67 = arith.constant 16 : i32
    %125 = arith.muli %arg0, %c16_i32_67 : i32
    %c4_i32 = arith.constant 4 : i32
    %126 = arith.addi %125, %c4_i32 : i32
    %127 = arith.index_cast %126 : i32 to index
    %128 = memref.load %arg2[%127] : memref<16xi32, #tpu.memory_space<smem>>
    %129 = arith.index_cast %126 : i32 to index
    %130 = memref.load %arg3[%129] : memref<16xi32, #tpu.memory_space<smem>>
    %131 = arith.addi %24, %128 : i32
    %132 = arith.index_cast %131 : i32 to index
    %c0_68 = arith.constant 0 : index
    %c0_69 = arith.constant 0 : index
    %133 = vector.load %arg9[%132, %c0_68, %c0_69] : memref<16x16x16xf32, #tpu.memory_space<vmem>>, vector<1x16x16xf32>
    %134 = vector.shape_cast %133 : vector<1x16x16xf32> to vector<16x16xf32>
    %135 = arith.addi %24, %130 : i32
    %136 = arith.index_cast %135 : i32 to index
    %c0_70 = arith.constant 0 : index
    %c0_71 = arith.constant 0 : index
    %137 = vector.load %arg9[%136, %c0_70, %c0_71] : memref<16x16x16xf32, #tpu.memory_space<vmem>>, vector<1x16x16xf32>
    %138 = vector.shape_cast %137 : vector<1x16x16xf32> to vector<16x16xf32>
    %c0_72 = arith.constant 0 : index
    %c4 = arith.constant 4 : index
    %c0_73 = arith.constant 0 : index
    %139 = vector.load %arg4[%c0_72, %c4, %c0_73] : memref<1x16x16xf32, #tpu.memory_space<vmem>>, vector<1x1x16xf32>
    %140 = vector.shape_cast %139 : vector<1x1x16xf32> to vector<1x16xf32>
    %141 = arith.subf %138, %134 : vector<16x16xf32>
    %142 = vector.broadcast %140 : vector<1x16xf32> to vector<16x16xf32>
    %143 = arith.mulf %142, %141 : vector<16x16xf32>
    %144 = arith.addf %134, %143 : vector<16x16xf32>
    %cst_74 = arith.constant dense<0.000000e+00> : vector<16x16xf32>
    %145 = tpu.matmul %144, %23, %cst_74 {dimension_numbers = #tpu.dot_dimension_numbers<[1], [0], [0], [1], [0, 0, 1, 1], [], []>} : vector<16x16xf32>, vector<16x16xf32>, vector<16x16xf32> -> vector<16x16xf32>
    %cst_75 = arith.constant dense<0.000000e+00> : vector<24x16xf32>
    %146 = tpu.matmul %22, %145, %cst_75 {dimension_numbers = #tpu.dot_dimension_numbers<[1], [0], [0], [1], [0, 0, 1, 1], [], []>} : vector<24x16xf32>, vector<16x16xf32>, vector<24x16xf32> -> vector<24x16xf32>
    %c4_76 = arith.constant 4 : index
    %c0_77 = arith.constant 0 : index
    %c0_78 = arith.constant 0 : index
    %147 = vector.load %arg8[%c4_76, %c0_77, %c0_78] : memref<16x24x16xf32, #tpu.memory_space<vmem>>, vector<1x24x16xf32>
    %148 = vector.shape_cast %147 : vector<1x24x16xf32> to vector<24x16xf32>
    %149 = vector.shape_cast %146 : vector<24x16xf32> to vector<1x24x16xf32>
    tpu.vector_store %arg8[%c4_76, %c0_77, %c0_78], %149 {strides = array<i32>} : memref<16x24x16xf32, #tpu.memory_space<vmem>>, vector<1x24x16xf32>,
    %c16_i32_79 = arith.constant 16 : i32
    %150 = arith.muli %arg0, %c16_i32_79 : i32
    %c5_i32 = arith.constant 5 : i32
    %151 = arith.addi %150, %c5_i32 : i32
    %152 = arith.index_cast %151 : i32 to index
    %153 = memref.load %arg2[%152] : memref<16xi32, #tpu.memory_space<smem>>
    %154 = arith.index_cast %151 : i32 to index
    %155 = memref.load %arg3[%154] : memref<16xi32, #tpu.memory_space<smem>>
    %156 = arith.addi %24, %153 : i32
    %157 = arith.index_cast %156 : i32 to index
    %c0_80 = arith.constant 0 : index
    %c0_81 = arith.constant 0 : index
    %158 = vector.load %arg9[%157, %c0_80, %c0_81] : memref<16x16x16xf32, #tpu.memory_space<vmem>>, vector<1x16x16xf32>
    %159 = vector.shape_cast %158 : vector<1x16x16xf32> to vector<16x16xf32>
    %160 = arith.addi %24, %155 : i32
    %161 = arith.index_cast %160 : i32 to index
    %c0_82 = arith.constant 0 : index
    %c0_83 = arith.constant 0 : index
    %162 = vector.load %arg9[%161, %c0_82, %c0_83] : memref<16x16x16xf32, #tpu.memory_space<vmem>>, vector<1x16x16xf32>
    %163 = vector.shape_cast %162 : vector<1x16x16xf32> to vector<16x16xf32>
    %c0_84 = arith.constant 0 : index
    %c5 = arith.constant 5 : index
    %c0_85 = arith.constant 0 : index
    %164 = vector.load %arg4[%c0_84, %c5, %c0_85] : memref<1x16x16xf32, #tpu.memory_space<vmem>>, vector<1x1x16xf32>
    %165 = vector.shape_cast %164 : vector<1x1x16xf32> to vector<1x16xf32>
    %166 = arith.subf %163, %159 : vector<16x16xf32>
    %167 = vector.broadcast %165 : vector<1x16xf32> to vector<16x16xf32>
    %168 = arith.mulf %167, %166 : vector<16x16xf32>
    %169 = arith.addf %159, %168 : vector<16x16xf32>
    %cst_86 = arith.constant dense<0.000000e+00> : vector<16x16xf32>
    %170 = tpu.matmul %169, %23, %cst_86 {dimension_numbers = #tpu.dot_dimension_numbers<[1], [0], [0], [1], [0, 0, 1, 1], [], []>} : vector<16x16xf32>, vector<16x16xf32>, vector<16x16xf32> -> vector<16x16xf32>
    %cst_87 = arith.constant dense<0.000000e+00> : vector<24x16xf32>
    %171 = tpu.matmul %22, %170, %cst_87 {dimension_numbers = #tpu.dot_dimension_numbers<[1], [0], [0], [1], [0, 0, 1, 1], [], []>} : vector<24x16xf32>, vector<16x16xf32>, vector<24x16xf32> -> vector<24x16xf32>
    %c5_88 = arith.constant 5 : index
    %c0_89 = arith.constant 0 : index
    %c0_90 = arith.constant 0 : index
    %172 = vector.load %arg8[%c5_88, %c0_89, %c0_90] : memref<16x24x16xf32, #tpu.memory_space<vmem>>, vector<1x24x16xf32>
    %173 = vector.shape_cast %172 : vector<1x24x16xf32> to vector<24x16xf32>
    %174 = vector.shape_cast %171 : vector<24x16xf32> to vector<1x24x16xf32>
    tpu.vector_store %arg8[%c5_88, %c0_89, %c0_90], %174 {strides = array<i32>} : memref<16x24x16xf32, #tpu.memory_space<vmem>>, vector<1x24x16xf32>,
    %c16_i32_91 = arith.constant 16 : i32
    %175 = arith.muli %arg0, %c16_i32_91 : i32
    %c6_i32 = arith.constant 6 : i32
    %176 = arith.addi %175, %c6_i32 : i32
    %177 = arith.index_cast %176 : i32 to index
    %178 = memref.load %arg2[%177] : memref<16xi32, #tpu.memory_space<smem>>
    %179 = arith.index_cast %176 : i32 to index
    %180 = memref.load %arg3[%179] : memref<16xi32, #tpu.memory_space<smem>>
    %181 = arith.addi %24, %178 : i32
    %182 = arith.index_cast %181 : i32 to index
    %c0_92 = arith.constant 0 : index
    %c0_93 = arith.constant 0 : index
    %183 = vector.load %arg9[%182, %c0_92, %c0_93] : memref<16x16x16xf32, #tpu.memory_space<vmem>>, vector<1x16x16xf32>
    %184 = vector.shape_cast %183 : vector<1x16x16xf32> to vector<16x16xf32>
    %185 = arith.addi %24, %180 : i32
    %186 = arith.index_cast %185 : i32 to index
    %c0_94 = arith.constant 0 : index
    %c0_95 = arith.constant 0 : index
    %187 = vector.load %arg9[%186, %c0_94, %c0_95] : memref<16x16x16xf32, #tpu.memory_space<vmem>>, vector<1x16x16xf32>
    %188 = vector.shape_cast %187 : vector<1x16x16xf32> to vector<16x16xf32>
    %c0_96 = arith.constant 0 : index
    %c6 = arith.constant 6 : index
    %c0_97 = arith.constant 0 : index
    %189 = vector.load %arg4[%c0_96, %c6, %c0_97] : memref<1x16x16xf32, #tpu.memory_space<vmem>>, vector<1x1x16xf32>
    %190 = vector.shape_cast %189 : vector<1x1x16xf32> to vector<1x16xf32>
    %191 = arith.subf %188, %184 : vector<16x16xf32>
    %192 = vector.broadcast %190 : vector<1x16xf32> to vector<16x16xf32>
    %193 = arith.mulf %192, %191 : vector<16x16xf32>
    %194 = arith.addf %184, %193 : vector<16x16xf32>
    %cst_98 = arith.constant dense<0.000000e+00> : vector<16x16xf32>
    %195 = tpu.matmul %194, %23, %cst_98 {dimension_numbers = #tpu.dot_dimension_numbers<[1], [0], [0], [1], [0, 0, 1, 1], [], []>} : vector<16x16xf32>, vector<16x16xf32>, vector<16x16xf32> -> vector<16x16xf32>
    %cst_99 = arith.constant dense<0.000000e+00> : vector<24x16xf32>
    %196 = tpu.matmul %22, %195, %cst_99 {dimension_numbers = #tpu.dot_dimension_numbers<[1], [0], [0], [1], [0, 0, 1, 1], [], []>} : vector<24x16xf32>, vector<16x16xf32>, vector<24x16xf32> -> vector<24x16xf32>
    %c6_100 = arith.constant 6 : index
    %c0_101 = arith.constant 0 : index
    %c0_102 = arith.constant 0 : index
    %197 = vector.load %arg8[%c6_100, %c0_101, %c0_102] : memref<16x24x16xf32, #tpu.memory_space<vmem>>, vector<1x24x16xf32>
    %198 = vector.shape_cast %197 : vector<1x24x16xf32> to vector<24x16xf32>
    %199 = vector.shape_cast %196 : vector<24x16xf32> to vector<1x24x16xf32>
    tpu.vector_store %arg8[%c6_100, %c0_101, %c0_102], %199 {strides = array<i32>} : memref<16x24x16xf32, #tpu.memory_space<vmem>>, vector<1x24x16xf32>,
    %c16_i32_103 = arith.constant 16 : i32
    %200 = arith.muli %arg0, %c16_i32_103 : i32
    %c7_i32 = arith.constant 7 : i32
    %201 = arith.addi %200, %c7_i32 : i32
    %202 = arith.index_cast %201 : i32 to index
    %203 = memref.load %arg2[%202] : memref<16xi32, #tpu.memory_space<smem>>
    %204 = arith.index_cast %201 : i32 to index
    %205 = memref.load %arg3[%204] : memref<16xi32, #tpu.memory_space<smem>>
    %206 = arith.addi %24, %203 : i32
    %207 = arith.index_cast %206 : i32 to index
    %c0_104 = arith.constant 0 : index
    %c0_105 = arith.constant 0 : index
    %208 = vector.load %arg9[%207, %c0_104, %c0_105] : memref<16x16x16xf32, #tpu.memory_space<vmem>>, vector<1x16x16xf32>
    %209 = vector.shape_cast %208 : vector<1x16x16xf32> to vector<16x16xf32>
    %210 = arith.addi %24, %205 : i32
    %211 = arith.index_cast %210 : i32 to index
    %c0_106 = arith.constant 0 : index
    %c0_107 = arith.constant 0 : index
    %212 = vector.load %arg9[%211, %c0_106, %c0_107] : memref<16x16x16xf32, #tpu.memory_space<vmem>>, vector<1x16x16xf32>
    %213 = vector.shape_cast %212 : vector<1x16x16xf32> to vector<16x16xf32>
    %c0_108 = arith.constant 0 : index
    %c7 = arith.constant 7 : index
    %c0_109 = arith.constant 0 : index
    %214 = vector.load %arg4[%c0_108, %c7, %c0_109] : memref<1x16x16xf32, #tpu.memory_space<vmem>>, vector<1x1x16xf32>
    %215 = vector.shape_cast %214 : vector<1x1x16xf32> to vector<1x16xf32>
    %216 = arith.subf %213, %209 : vector<16x16xf32>
    %217 = vector.broadcast %215 : vector<1x16xf32> to vector<16x16xf32>
    %218 = arith.mulf %217, %216 : vector<16x16xf32>
    %219 = arith.addf %209, %218 : vector<16x16xf32>
    %cst_110 = arith.constant dense<0.000000e+00> : vector<16x16xf32>
    %220 = tpu.matmul %219, %23, %cst_110 {dimension_numbers = #tpu.dot_dimension_numbers<[1], [0], [0], [1], [0, 0, 1, 1], [], []>} : vector<16x16xf32>, vector<16x16xf32>, vector<16x16xf32> -> vector<16x16xf32>
    %cst_111 = arith.constant dense<0.000000e+00> : vector<24x16xf32>
    %221 = tpu.matmul %22, %220, %cst_111 {dimension_numbers = #tpu.dot_dimension_numbers<[1], [0], [0], [1], [0, 0, 1, 1], [], []>} : vector<24x16xf32>, vector<16x16xf32>, vector<24x16xf32> -> vector<24x16xf32>
    %c7_112 = arith.constant 7 : index
    %c0_113 = arith.constant 0 : index
    %c0_114 = arith.constant 0 : index
    %222 = vector.load %arg8[%c7_112, %c0_113, %c0_114] : memref<16x24x16xf32, #tpu.memory_space<vmem>>, vector<1x24x16xf32>
    %223 = vector.shape_cast %222 : vector<1x24x16xf32> to vector<24x16xf32>
    %224 = vector.shape_cast %221 : vector<24x16xf32> to vector<1x24x16xf32>
    tpu.vector_store %arg8[%c7_112, %c0_113, %c0_114], %224 {strides = array<i32>} : memref<16x24x16xf32, #tpu.memory_space<vmem>>, vector<1x24x16xf32>,
    %c16_i32_115 = arith.constant 16 : i32
    %225 = arith.muli %arg0, %c16_i32_115 : i32
    %c8_i32_116 = arith.constant 8 : i32
    %226 = arith.addi %225, %c8_i32_116 : i32
    %227 = arith.index_cast %226 : i32 to index
    %228 = memref.load %arg2[%227] : memref<16xi32, #tpu.memory_space<smem>>
    %229 = arith.index_cast %226 : i32 to index
    %230 = memref.load %arg3[%229] : memref<16xi32, #tpu.memory_space<smem>>
    %231 = arith.addi %24, %228 : i32
    %232 = arith.index_cast %231 : i32 to index
    %c0_117 = arith.constant 0 : index
    %c0_118 = arith.constant 0 : index
    %233 = vector.load %arg9[%232, %c0_117, %c0_118] : memref<16x16x16xf32, #tpu.memory_space<vmem>>, vector<1x16x16xf32>
    %234 = vector.shape_cast %233 : vector<1x16x16xf32> to vector<16x16xf32>
    %235 = arith.addi %24, %230 : i32
    %236 = arith.index_cast %235 : i32 to index
    %c0_119 = arith.constant 0 : index
    %c0_120 = arith.constant 0 : index
    %237 = vector.load %arg9[%236, %c0_119, %c0_120] : memref<16x16x16xf32, #tpu.memory_space<vmem>>, vector<1x16x16xf32>
    %238 = vector.shape_cast %237 : vector<1x16x16xf32> to vector<16x16xf32>
    %c0_121 = arith.constant 0 : index
    %c8 = arith.constant 8 : index
    %c0_122 = arith.constant 0 : index
    %239 = vector.load %arg4[%c0_121, %c8, %c0_122] : memref<1x16x16xf32, #tpu.memory_space<vmem>>, vector<1x1x16xf32>
    %240 = vector.shape_cast %239 : vector<1x1x16xf32> to vector<1x16xf32>
    %241 = arith.subf %238, %234 : vector<16x16xf32>
    %242 = vector.broadcast %240 : vector<1x16xf32> to vector<16x16xf32>
    %243 = arith.mulf %242, %241 : vector<16x16xf32>
    %244 = arith.addf %234, %243 : vector<16x16xf32>
    %cst_123 = arith.constant dense<0.000000e+00> : vector<16x16xf32>
    %245 = tpu.matmul %244, %23, %cst_123 {dimension_numbers = #tpu.dot_dimension_numbers<[1], [0], [0], [1], [0, 0, 1, 1], [], []>} : vector<16x16xf32>, vector<16x16xf32>, vector<16x16xf32> -> vector<16x16xf32>
    %cst_124 = arith.constant dense<0.000000e+00> : vector<24x16xf32>
    %246 = tpu.matmul %22, %245, %cst_124 {dimension_numbers = #tpu.dot_dimension_numbers<[1], [0], [0], [1], [0, 0, 1, 1], [], []>} : vector<24x16xf32>, vector<16x16xf32>, vector<24x16xf32> -> vector<24x16xf32>
    %c8_125 = arith.constant 8 : index
    %c0_126 = arith.constant 0 : index
    %c0_127 = arith.constant 0 : index
    %247 = vector.load %arg8[%c8_125, %c0_126, %c0_127] : memref<16x24x16xf32, #tpu.memory_space<vmem>>, vector<1x24x16xf32>
    %248 = vector.shape_cast %247 : vector<1x24x16xf32> to vector<24x16xf32>
    %249 = vector.shape_cast %246 : vector<24x16xf32> to vector<1x24x16xf32>
    tpu.vector_store %arg8[%c8_125, %c0_126, %c0_127], %249 {strides = array<i32>} : memref<16x24x16xf32, #tpu.memory_space<vmem>>, vector<1x24x16xf32>,
    %c16_i32_128 = arith.constant 16 : i32
    %250 = arith.muli %arg0, %c16_i32_128 : i32
    %c9_i32 = arith.constant 9 : i32
    %251 = arith.addi %250, %c9_i32 : i32
    %252 = arith.index_cast %251 : i32 to index
    %253 = memref.load %arg2[%252] : memref<16xi32, #tpu.memory_space<smem>>
    %254 = arith.index_cast %251 : i32 to index
    %255 = memref.load %arg3[%254] : memref<16xi32, #tpu.memory_space<smem>>
    %256 = arith.addi %24, %253 : i32
    %257 = arith.index_cast %256 : i32 to index
    %c0_129 = arith.constant 0 : index
    %c0_130 = arith.constant 0 : index
    %258 = vector.load %arg9[%257, %c0_129, %c0_130] : memref<16x16x16xf32, #tpu.memory_space<vmem>>, vector<1x16x16xf32>
    %259 = vector.shape_cast %258 : vector<1x16x16xf32> to vector<16x16xf32>
    %260 = arith.addi %24, %255 : i32
    %261 = arith.index_cast %260 : i32 to index
    %c0_131 = arith.constant 0 : index
    %c0_132 = arith.constant 0 : index
    %262 = vector.load %arg9[%261, %c0_131, %c0_132] : memref<16x16x16xf32, #tpu.memory_space<vmem>>, vector<1x16x16xf32>
    %263 = vector.shape_cast %262 : vector<1x16x16xf32> to vector<16x16xf32>
    %c0_133 = arith.constant 0 : index
    %c9 = arith.constant 9 : index
    %c0_134 = arith.constant 0 : index
    %264 = vector.load %arg4[%c0_133, %c9, %c0_134] : memref<1x16x16xf32, #tpu.memory_space<vmem>>, vector<1x1x16xf32>
    %265 = vector.shape_cast %264 : vector<1x1x16xf32> to vector<1x16xf32>
    %266 = arith.subf %263, %259 : vector<16x16xf32>
    %267 = vector.broadcast %265 : vector<1x16xf32> to vector<16x16xf32>
    %268 = arith.mulf %267, %266 : vector<16x16xf32>
    %269 = arith.addf %259, %268 : vector<16x16xf32>
    %cst_135 = arith.constant dense<0.000000e+00> : vector<16x16xf32>
    %270 = tpu.matmul %269, %23, %cst_135 {dimension_numbers = #tpu.dot_dimension_numbers<[1], [0], [0], [1], [0, 0, 1, 1], [], []>} : vector<16x16xf32>, vector<16x16xf32>, vector<16x16xf32> -> vector<16x16xf32>
    %cst_136 = arith.constant dense<0.000000e+00> : vector<24x16xf32>
    %271 = tpu.matmul %22, %270, %cst_136 {dimension_numbers = #tpu.dot_dimension_numbers<[1], [0], [0], [1], [0, 0, 1, 1], [], []>} : vector<24x16xf32>, vector<16x16xf32>, vector<24x16xf32> -> vector<24x16xf32>
    %c9_137 = arith.constant 9 : index
    %c0_138 = arith.constant 0 : index
    %c0_139 = arith.constant 0 : index
    %272 = vector.load %arg8[%c9_137, %c0_138, %c0_139] : memref<16x24x16xf32, #tpu.memory_space<vmem>>, vector<1x24x16xf32>
    %273 = vector.shape_cast %272 : vector<1x24x16xf32> to vector<24x16xf32>
    %274 = vector.shape_cast %271 : vector<24x16xf32> to vector<1x24x16xf32>
    tpu.vector_store %arg8[%c9_137, %c0_138, %c0_139], %274 {strides = array<i32>} : memref<16x24x16xf32, #tpu.memory_space<vmem>>, vector<1x24x16xf32>,
    %c16_i32_140 = arith.constant 16 : i32
    %275 = arith.muli %arg0, %c16_i32_140 : i32
    %c10_i32 = arith.constant 10 : i32
    %276 = arith.addi %275, %c10_i32 : i32
    %277 = arith.index_cast %276 : i32 to index
    %278 = memref.load %arg2[%277] : memref<16xi32, #tpu.memory_space<smem>>
    %279 = arith.index_cast %276 : i32 to index
    %280 = memref.load %arg3[%279] : memref<16xi32, #tpu.memory_space<smem>>
    %281 = arith.addi %24, %278 : i32
    %282 = arith.index_cast %281 : i32 to index
    %c0_141 = arith.constant 0 : index
    %c0_142 = arith.constant 0 : index
    %283 = vector.load %arg9[%282, %c0_141, %c0_142] : memref<16x16x16xf32, #tpu.memory_space<vmem>>, vector<1x16x16xf32>
    %284 = vector.shape_cast %283 : vector<1x16x16xf32> to vector<16x16xf32>
    %285 = arith.addi %24, %280 : i32
    %286 = arith.index_cast %285 : i32 to index
    %c0_143 = arith.constant 0 : index
    %c0_144 = arith.constant 0 : index
    %287 = vector.load %arg9[%286, %c0_143, %c0_144] : memref<16x16x16xf32, #tpu.memory_space<vmem>>, vector<1x16x16xf32>
    %288 = vector.shape_cast %287 : vector<1x16x16xf32> to vector<16x16xf32>
    %c0_145 = arith.constant 0 : index
    %c10 = arith.constant 10 : index
    %c0_146 = arith.constant 0 : index
    %289 = vector.load %arg4[%c0_145, %c10, %c0_146] : memref<1x16x16xf32, #tpu.memory_space<vmem>>, vector<1x1x16xf32>
    %290 = vector.shape_cast %289 : vector<1x1x16xf32> to vector<1x16xf32>
    %291 = arith.subf %288, %284 : vector<16x16xf32>
    %292 = vector.broadcast %290 : vector<1x16xf32> to vector<16x16xf32>
    %293 = arith.mulf %292, %291 : vector<16x16xf32>
    %294 = arith.addf %284, %293 : vector<16x16xf32>
    %cst_147 = arith.constant dense<0.000000e+00> : vector<16x16xf32>
    %295 = tpu.matmul %294, %23, %cst_147 {dimension_numbers = #tpu.dot_dimension_numbers<[1], [0], [0], [1], [0, 0, 1, 1], [], []>} : vector<16x16xf32>, vector<16x16xf32>, vector<16x16xf32> -> vector<16x16xf32>
    %cst_148 = arith.constant dense<0.000000e+00> : vector<24x16xf32>
    %296 = tpu.matmul %22, %295, %cst_148 {dimension_numbers = #tpu.dot_dimension_numbers<[1], [0], [0], [1], [0, 0, 1, 1], [], []>} : vector<24x16xf32>, vector<16x16xf32>, vector<24x16xf32> -> vector<24x16xf32>
    %c10_149 = arith.constant 10 : index
    %c0_150 = arith.constant 0 : index
    %c0_151 = arith.constant 0 : index
    %297 = vector.load %arg8[%c10_149, %c0_150, %c0_151] : memref<16x24x16xf32, #tpu.memory_space<vmem>>, vector<1x24x16xf32>
    %298 = vector.shape_cast %297 : vector<1x24x16xf32> to vector<24x16xf32>
    %299 = vector.shape_cast %296 : vector<24x16xf32> to vector<1x24x16xf32>
    tpu.vector_store %arg8[%c10_149, %c0_150, %c0_151], %299 {strides = array<i32>} : memref<16x24x16xf32, #tpu.memory_space<vmem>>, vector<1x24x16xf32>,
    %c16_i32_152 = arith.constant 16 : i32
    %300 = arith.muli %arg0, %c16_i32_152 : i32
    %c11_i32 = arith.constant 11 : i32
    %301 = arith.addi %300, %c11_i32 : i32
    %302 = arith.index_cast %301 : i32 to index
    %303 = memref.load %arg2[%302] : memref<16xi32, #tpu.memory_space<smem>>
    %304 = arith.index_cast %301 : i32 to index
    %305 = memref.load %arg3[%304] : memref<16xi32, #tpu.memory_space<smem>>
    %306 = arith.addi %24, %303 : i32
    %307 = arith.index_cast %306 : i32 to index
    %c0_153 = arith.constant 0 : index
    %c0_154 = arith.constant 0 : index
    %308 = vector.load %arg9[%307, %c0_153, %c0_154] : memref<16x16x16xf32, #tpu.memory_space<vmem>>, vector<1x16x16xf32>
    %309 = vector.shape_cast %308 : vector<1x16x16xf32> to vector<16x16xf32>
    %310 = arith.addi %24, %305 : i32
    %311 = arith.index_cast %310 : i32 to index
    %c0_155 = arith.constant 0 : index
    %c0_156 = arith.constant 0 : index
    %312 = vector.load %arg9[%311, %c0_155, %c0_156] : memref<16x16x16xf32, #tpu.memory_space<vmem>>, vector<1x16x16xf32>
    %313 = vector.shape_cast %312 : vector<1x16x16xf32> to vector<16x16xf32>
    %c0_157 = arith.constant 0 : index
    %c11 = arith.constant 11 : index
    %c0_158 = arith.constant 0 : index
    %314 = vector.load %arg4[%c0_157, %c11, %c0_158] : memref<1x16x16xf32, #tpu.memory_space<vmem>>, vector<1x1x16xf32>
    %315 = vector.shape_cast %314 : vector<1x1x16xf32> to vector<1x16xf32>
    %316 = arith.subf %313, %309 : vector<16x16xf32>
    %317 = vector.broadcast %315 : vector<1x16xf32> to vector<16x16xf32>
    %318 = arith.mulf %317, %316 : vector<16x16xf32>
    %319 = arith.addf %309, %318 : vector<16x16xf32>
    %cst_159 = arith.constant dense<0.000000e+00> : vector<16x16xf32>
    %320 = tpu.matmul %319, %23, %cst_159 {dimension_numbers = #tpu.dot_dimension_numbers<[1], [0], [0], [1], [0, 0, 1, 1], [], []>} : vector<16x16xf32>, vector<16x16xf32>, vector<16x16xf32> -> vector<16x16xf32>
    %cst_160 = arith.constant dense<0.000000e+00> : vector<24x16xf32>
    %321 = tpu.matmul %22, %320, %cst_160 {dimension_numbers = #tpu.dot_dimension_numbers<[1], [0], [0], [1], [0, 0, 1, 1], [], []>} : vector<24x16xf32>, vector<16x16xf32>, vector<24x16xf32> -> vector<24x16xf32>
    %c11_161 = arith.constant 11 : index
    %c0_162 = arith.constant 0 : index
    %c0_163 = arith.constant 0 : index
    %322 = vector.load %arg8[%c11_161, %c0_162, %c0_163] : memref<16x24x16xf32, #tpu.memory_space<vmem>>, vector<1x24x16xf32>
    %323 = vector.shape_cast %322 : vector<1x24x16xf32> to vector<24x16xf32>
    %324 = vector.shape_cast %321 : vector<24x16xf32> to vector<1x24x16xf32>
    tpu.vector_store %arg8[%c11_161, %c0_162, %c0_163], %324 {strides = array<i32>} : memref<16x24x16xf32, #tpu.memory_space<vmem>>, vector<1x24x16xf32>,
    %c16_i32_164 = arith.constant 16 : i32
    %325 = arith.muli %arg0, %c16_i32_164 : i32
    %c12_i32 = arith.constant 12 : i32
    %326 = arith.addi %325, %c12_i32 : i32
    %327 = arith.index_cast %326 : i32 to index
    %328 = memref.load %arg2[%327] : memref<16xi32, #tpu.memory_space<smem>>
    %329 = arith.index_cast %326 : i32 to index
    %330 = memref.load %arg3[%329] : memref<16xi32, #tpu.memory_space<smem>>
    %331 = arith.addi %24, %328 : i32
    %332 = arith.index_cast %331 : i32 to index
    %c0_165 = arith.constant 0 : index
    %c0_166 = arith.constant 0 : index
    %333 = vector.load %arg9[%332, %c0_165, %c0_166] : memref<16x16x16xf32, #tpu.memory_space<vmem>>, vector<1x16x16xf32>
    %334 = vector.shape_cast %333 : vector<1x16x16xf32> to vector<16x16xf32>
    %335 = arith.addi %24, %330 : i32
    %336 = arith.index_cast %335 : i32 to index
    %c0_167 = arith.constant 0 : index
    %c0_168 = arith.constant 0 : index
    %337 = vector.load %arg9[%336, %c0_167, %c0_168] : memref<16x16x16xf32, #tpu.memory_space<vmem>>, vector<1x16x16xf32>
    %338 = vector.shape_cast %337 : vector<1x16x16xf32> to vector<16x16xf32>
    %c0_169 = arith.constant 0 : index
    %c12 = arith.constant 12 : index
    %c0_170 = arith.constant 0 : index
    %339 = vector.load %arg4[%c0_169, %c12, %c0_170] : memref<1x16x16xf32, #tpu.memory_space<vmem>>, vector<1x1x16xf32>
    %340 = vector.shape_cast %339 : vector<1x1x16xf32> to vector<1x16xf32>
    %341 = arith.subf %338, %334 : vector<16x16xf32>
    %342 = vector.broadcast %340 : vector<1x16xf32> to vector<16x16xf32>
    %343 = arith.mulf %342, %341 : vector<16x16xf32>
    %344 = arith.addf %334, %343 : vector<16x16xf32>
    %cst_171 = arith.constant dense<0.000000e+00> : vector<16x16xf32>
    %345 = tpu.matmul %344, %23, %cst_171 {dimension_numbers = #tpu.dot_dimension_numbers<[1], [0], [0], [1], [0, 0, 1, 1], [], []>} : vector<16x16xf32>, vector<16x16xf32>, vector<16x16xf32> -> vector<16x16xf32>
    %cst_172 = arith.constant dense<0.000000e+00> : vector<24x16xf32>
    %346 = tpu.matmul %22, %345, %cst_172 {dimension_numbers = #tpu.dot_dimension_numbers<[1], [0], [0], [1], [0, 0, 1, 1], [], []>} : vector<24x16xf32>, vector<16x16xf32>, vector<24x16xf32> -> vector<24x16xf32>
    %c12_173 = arith.constant 12 : index
    %c0_174 = arith.constant 0 : index
    %c0_175 = arith.constant 0 : index
    %347 = vector.load %arg8[%c12_173, %c0_174, %c0_175] : memref<16x24x16xf32, #tpu.memory_space<vmem>>, vector<1x24x16xf32>
    %348 = vector.shape_cast %347 : vector<1x24x16xf32> to vector<24x16xf32>
    %349 = vector.shape_cast %346 : vector<24x16xf32> to vector<1x24x16xf32>
    tpu.vector_store %arg8[%c12_173, %c0_174, %c0_175], %349 {strides = array<i32>} : memref<16x24x16xf32, #tpu.memory_space<vmem>>, vector<1x24x16xf32>,
    %c16_i32_176 = arith.constant 16 : i32
    %350 = arith.muli %arg0, %c16_i32_176 : i32
    %c13_i32 = arith.constant 13 : i32
    %351 = arith.addi %350, %c13_i32 : i32
    %352 = arith.index_cast %351 : i32 to index
    %353 = memref.load %arg2[%352] : memref<16xi32, #tpu.memory_space<smem>>
    %354 = arith.index_cast %351 : i32 to index
    %355 = memref.load %arg3[%354] : memref<16xi32, #tpu.memory_space<smem>>
    %356 = arith.addi %24, %353 : i32
    %357 = arith.index_cast %356 : i32 to index
    %c0_177 = arith.constant 0 : index
    %c0_178 = arith.constant 0 : index
    %358 = vector.load %arg9[%357, %c0_177, %c0_178] : memref<16x16x16xf32, #tpu.memory_space<vmem>>, vector<1x16x16xf32>
    %359 = vector.shape_cast %358 : vector<1x16x16xf32> to vector<16x16xf32>
    %360 = arith.addi %24, %355 : i32
    %361 = arith.index_cast %360 : i32 to index
    %c0_179 = arith.constant 0 : index
    %c0_180 = arith.constant 0 : index
    %362 = vector.load %arg9[%361, %c0_179, %c0_180] : memref<16x16x16xf32, #tpu.memory_space<vmem>>, vector<1x16x16xf32>
    %363 = vector.shape_cast %362 : vector<1x16x16xf32> to vector<16x16xf32>
    %c0_181 = arith.constant 0 : index
    %c13 = arith.constant 13 : index
    %c0_182 = arith.constant 0 : index
    %364 = vector.load %arg4[%c0_181, %c13, %c0_182] : memref<1x16x16xf32, #tpu.memory_space<vmem>>, vector<1x1x16xf32>
    %365 = vector.shape_cast %364 : vector<1x1x16xf32> to vector<1x16xf32>
    %366 = arith.subf %363, %359 : vector<16x16xf32>
    %367 = vector.broadcast %365 : vector<1x16xf32> to vector<16x16xf32>
    %368 = arith.mulf %367, %366 : vector<16x16xf32>
    %369 = arith.addf %359, %368 : vector<16x16xf32>
    %cst_183 = arith.constant dense<0.000000e+00> : vector<16x16xf32>
    %370 = tpu.matmul %369, %23, %cst_183 {dimension_numbers = #tpu.dot_dimension_numbers<[1], [0], [0], [1], [0, 0, 1, 1], [], []>} : vector<16x16xf32>, vector<16x16xf32>, vector<16x16xf32> -> vector<16x16xf32>
    %cst_184 = arith.constant dense<0.000000e+00> : vector<24x16xf32>
    %371 = tpu.matmul %22, %370, %cst_184 {dimension_numbers = #tpu.dot_dimension_numbers<[1], [0], [0], [1], [0, 0, 1, 1], [], []>} : vector<24x16xf32>, vector<16x16xf32>, vector<24x16xf32> -> vector<24x16xf32>
    %c13_185 = arith.constant 13 : index
    %c0_186 = arith.constant 0 : index
    %c0_187 = arith.constant 0 : index
    %372 = vector.load %arg8[%c13_185, %c0_186, %c0_187] : memref<16x24x16xf32, #tpu.memory_space<vmem>>, vector<1x24x16xf32>
    %373 = vector.shape_cast %372 : vector<1x24x16xf32> to vector<24x16xf32>
    %374 = vector.shape_cast %371 : vector<24x16xf32> to vector<1x24x16xf32>
    tpu.vector_store %arg8[%c13_185, %c0_186, %c0_187], %374 {strides = array<i32>} : memref<16x24x16xf32, #tpu.memory_space<vmem>>, vector<1x24x16xf32>,
    %c16_i32_188 = arith.constant 16 : i32
    %375 = arith.muli %arg0, %c16_i32_188 : i32
    %c14_i32 = arith.constant 14 : i32
    %376 = arith.addi %375, %c14_i32 : i32
    %377 = arith.index_cast %376 : i32 to index
    %378 = memref.load %arg2[%377] : memref<16xi32, #tpu.memory_space<smem>>
    %379 = arith.index_cast %376 : i32 to index
    %380 = memref.load %arg3[%379] : memref<16xi32, #tpu.memory_space<smem>>
    %381 = arith.addi %24, %378 : i32
    %382 = arith.index_cast %381 : i32 to index
    %c0_189 = arith.constant 0 : index
    %c0_190 = arith.constant 0 : index
    %383 = vector.load %arg9[%382, %c0_189, %c0_190] : memref<16x16x16xf32, #tpu.memory_space<vmem>>, vector<1x16x16xf32>
    %384 = vector.shape_cast %383 : vector<1x16x16xf32> to vector<16x16xf32>
    %385 = arith.addi %24, %380 : i32
    %386 = arith.index_cast %385 : i32 to index
    %c0_191 = arith.constant 0 : index
    %c0_192 = arith.constant 0 : index
    %387 = vector.load %arg9[%386, %c0_191, %c0_192] : memref<16x16x16xf32, #tpu.memory_space<vmem>>, vector<1x16x16xf32>
    %388 = vector.shape_cast %387 : vector<1x16x16xf32> to vector<16x16xf32>
    %c0_193 = arith.constant 0 : index
    %c14 = arith.constant 14 : index
    %c0_194 = arith.constant 0 : index
    %389 = vector.load %arg4[%c0_193, %c14, %c0_194] : memref<1x16x16xf32, #tpu.memory_space<vmem>>, vector<1x1x16xf32>
    %390 = vector.shape_cast %389 : vector<1x1x16xf32> to vector<1x16xf32>
    %391 = arith.subf %388, %384 : vector<16x16xf32>
    %392 = vector.broadcast %390 : vector<1x16xf32> to vector<16x16xf32>
    %393 = arith.mulf %392, %391 : vector<16x16xf32>
    %394 = arith.addf %384, %393 : vector<16x16xf32>
    %cst_195 = arith.constant dense<0.000000e+00> : vector<16x16xf32>
    %395 = tpu.matmul %394, %23, %cst_195 {dimension_numbers = #tpu.dot_dimension_numbers<[1], [0], [0], [1], [0, 0, 1, 1], [], []>} : vector<16x16xf32>, vector<16x16xf32>, vector<16x16xf32> -> vector<16x16xf32>
    %cst_196 = arith.constant dense<0.000000e+00> : vector<24x16xf32>
    %396 = tpu.matmul %22, %395, %cst_196 {dimension_numbers = #tpu.dot_dimension_numbers<[1], [0], [0], [1], [0, 0, 1, 1], [], []>} : vector<24x16xf32>, vector<16x16xf32>, vector<24x16xf32> -> vector<24x16xf32>
    %c14_197 = arith.constant 14 : index
    %c0_198 = arith.constant 0 : index
    %c0_199 = arith.constant 0 : index
    %397 = vector.load %arg8[%c14_197, %c0_198, %c0_199] : memref<16x24x16xf32, #tpu.memory_space<vmem>>, vector<1x24x16xf32>
    %398 = vector.shape_cast %397 : vector<1x24x16xf32> to vector<24x16xf32>
    %399 = vector.shape_cast %396 : vector<24x16xf32> to vector<1x24x16xf32>
    tpu.vector_store %arg8[%c14_197, %c0_198, %c0_199], %399 {strides = array<i32>} : memref<16x24x16xf32, #tpu.memory_space<vmem>>, vector<1x24x16xf32>,
    %c16_i32_200 = arith.constant 16 : i32
    %400 = arith.muli %arg0, %c16_i32_200 : i32
    %c15_i32 = arith.constant 15 : i32
    %401 = arith.addi %400, %c15_i32 : i32
    %402 = arith.index_cast %401 : i32 to index
    %403 = memref.load %arg2[%402] : memref<16xi32, #tpu.memory_space<smem>>
    %404 = arith.index_cast %401 : i32 to index
    %405 = memref.load %arg3[%404] : memref<16xi32, #tpu.memory_space<smem>>
    %406 = arith.addi %24, %403 : i32
    %407 = arith.index_cast %406 : i32 to index
    %c0_201 = arith.constant 0 : index
    %c0_202 = arith.constant 0 : index
    %408 = vector.load %arg9[%407, %c0_201, %c0_202] : memref<16x16x16xf32, #tpu.memory_space<vmem>>, vector<1x16x16xf32>
    %409 = vector.shape_cast %408 : vector<1x16x16xf32> to vector<16x16xf32>
    %410 = arith.addi %24, %405 : i32
    %411 = arith.index_cast %410 : i32 to index
    %c0_203 = arith.constant 0 : index
    %c0_204 = arith.constant 0 : index
    %412 = vector.load %arg9[%411, %c0_203, %c0_204] : memref<16x16x16xf32, #tpu.memory_space<vmem>>, vector<1x16x16xf32>
    %413 = vector.shape_cast %412 : vector<1x16x16xf32> to vector<16x16xf32>
    %c0_205 = arith.constant 0 : index
    %c15 = arith.constant 15 : index
    %c0_206 = arith.constant 0 : index
    %414 = vector.load %arg4[%c0_205, %c15, %c0_206] : memref<1x16x16xf32, #tpu.memory_space<vmem>>, vector<1x1x16xf32>
    %415 = vector.shape_cast %414 : vector<1x1x16xf32> to vector<1x16xf32>
    %416 = arith.subf %413, %409 : vector<16x16xf32>
    %417 = vector.broadcast %415 : vector<1x16xf32> to vector<16x16xf32>
    %418 = arith.mulf %417, %416 : vector<16x16xf32>
    %419 = arith.addf %409, %418 : vector<16x16xf32>
    %cst_207 = arith.constant dense<0.000000e+00> : vector<16x16xf32>
    %420 = tpu.matmul %419, %23, %cst_207 {dimension_numbers = #tpu.dot_dimension_numbers<[1], [0], [0], [1], [0, 0, 1, 1], [], []>} : vector<16x16xf32>, vector<16x16xf32>, vector<16x16xf32> -> vector<16x16xf32>
    %cst_208 = arith.constant dense<0.000000e+00> : vector<24x16xf32>
    %421 = tpu.matmul %22, %420, %cst_208 {dimension_numbers = #tpu.dot_dimension_numbers<[1], [0], [0], [1], [0, 0, 1, 1], [], []>} : vector<24x16xf32>, vector<16x16xf32>, vector<24x16xf32> -> vector<24x16xf32>
    %c15_209 = arith.constant 15 : index
    %c0_210 = arith.constant 0 : index
    %c0_211 = arith.constant 0 : index
    %422 = vector.load %arg8[%c15_209, %c0_210, %c0_211] : memref<16x24x16xf32, #tpu.memory_space<vmem>>, vector<1x24x16xf32>
    %423 = vector.shape_cast %422 : vector<1x24x16xf32> to vector<24x16xf32>
    %424 = vector.shape_cast %421 : vector<24x16xf32> to vector<1x24x16xf32>
    tpu.vector_store %arg8[%c15_209, %c0_210, %c0_211], %424 {strides = array<i32>} : memref<16x24x16xf32, #tpu.memory_space<vmem>>, vector<1x24x16xf32>,
    return
  }
  func.func @transform_0(%arg0: i32, %arg1: memref<1xi32, #tpu.memory_space<smem>>, %arg2: memref<16xi32, #tpu.memory_space<smem>>, %arg3: memref<16xi32, #tpu.memory_space<smem>>) -> (i32, i32, i32) {
    %c0_i32 = arith.constant 0 : i32
    %c0_i32_0 = arith.constant 0 : i32
    %c0_i32_1 = arith.constant 0 : i32
    return %arg0, %c0_i32, %c0_i32_0 : i32, i32, i32
  }
  func.func @transform_2(%arg0: i32, %arg1: memref<1xi32, #tpu.memory_space<smem>>, %arg2: memref<16xi32, #tpu.memory_space<smem>>, %arg3: memref<16xi32, #tpu.memory_space<smem>>) -> (i32, i32) {
    %c0_i32 = arith.constant 0 : i32
    %c0_i32_0 = arith.constant 0 : i32
    %c0_i32_1 = arith.constant 0 : i32
    return %c0_i32, %c0_i32_0 : i32, i32
  }
  func.func @transform_3(%arg0: i32, %arg1: memref<1xi32, #tpu.memory_space<smem>>, %arg2: memref<16xi32, #tpu.memory_space<smem>>, %arg3: memref<16xi32, #tpu.memory_space<smem>>) -> (i32, i32) {
    %c0_i32 = arith.constant 0 : i32
    %c0_i32_0 = arith.constant 0 : i32
    %c0_i32_1 = arith.constant 0 : i32
    return %c0_i32, %c0_i32_0 : i32, i32
  }
  func.func @transform_4(%arg0: i32, %arg1: memref<1xi32, #tpu.memory_space<smem>>, %arg2: memref<16xi32, #tpu.memory_space<smem>>, %arg3: memref<16xi32, #tpu.memory_space<smem>>) -> (i32, i32, i32) {
    %c0_i32 = arith.constant 0 : i32
    %c0_i32_0 = arith.constant 0 : i32
    %c0_i32_1 = arith.constant 0 : i32
    return %arg0, %c0_i32, %c0_i32_0 : i32, i32, i32
  }
}

</mosaic_0001>

<llo_original>
// kernel: tpu_custom_call.1
$region0: #{tpu_custom_call.1}
  #allocation0 [shape = 'u32[]', space=smem, size = 0x4, offset = 0x4, fixed_abs, tag = 'smem constant byte address 0x4 - core index']
  #allocation1 [shape = 'u32[144,128]{1,0:T(1,128)}', space=vmem, size = 0x12000, scoped, tag = 'internal scratch']
  #allocation2 [shape = 'f32[16,16,16]{2,1,0:T(8,128)}', space=vmem, size = 0x20000, scoped, tag = 'scratch operand']
  #allocation3 [shape = 's32[2]{0}', space=sflag, size = 0x8, scoped, tag = 'scratch operand']
  #allocation4 [shape = 's32[1]{0}', space=sflag, size = 0x4, scoped, tag = 'scoped memory for tpu_custom_call.1']
  #allocation5 [shape = 's32[1]{0:T(128)S(6)}', space=smem, size = 0x200, scoped, tag = 'prefetched SMEM operand 0']
  #allocation6 [shape = 'u8[512]{0}', space=smem, size = 0x200, scoped, tag = 'prefetched SMEM operand 1']
  #allocation7 [shape = 'u8[512]{0}', space=smem, size = 0x200, scoped, tag = 'prefetched SMEM operand 2']
  #allocation8 [shape = 's32[]', space=sflag, size = 0x4, offset = 0, fixed_abs, tag = 'sflag constant byte address 0x0 - dummy sync flag']
  #allocation9 [shape = 's32[]', space=sflag, size = 0x4, offset = 0, fixed_abs, tag = 'sflag constant byte address 0x0 - dummy sync flag']
  #allocation10 [shape = 'u32[]', space=smem, size = 0x4, offset = 0x44, fixed_abs, tag = 'smem constant byte address 0x44 - assertion arg 0']
  #allocation11 [shape = 'u32[]', space=smem, size = 0x4, offset = 0x48, fixed_abs, tag = 'smem constant byte address 0x48 - assertion arg 1']
  #allocation12 [shape = 's32[]', space=sflag, size = 0x4, offset = 0, fixed_abs, tag = 'sflag constant byte address 0x0 - dummy sync flag']
  #allocation13 [shape = 's32[]', space=sflag, size = 0x4, offset = 0, fixed_abs, tag = 'sflag constant byte address 0x0 - dummy sync flag']
  %s0 = inlined_call_operand.<no memory space> [shape: s32[1], index: 0, kind: input, shape index: {}]
  %s1 = inlined_call_operand.vmem [shape: s32[16], index: 1, kind: input, shape index: {}]
  %s2 = inlined_call_operand.vmem [shape: s32[16], index: 2, kind: input, shape index: {}]
  %s3 = inlined_call_operand.vmem [shape: f32[1,16,16], index: 3, kind: input, shape index: {}]
  %s4 = inlined_call_operand.hbm [shape: f32[8,16,16], index: 4, kind: input, shape index: {}]
  %s5 = inlined_call_operand.vmem [shape: f32[24,16], index: 5, kind: input, shape index: {}]
  %s6 = inlined_call_operand.vmem [shape: f32[16,16], index: 6, kind: input, shape index: {}]
  %s7 = inlined_call_operand.vmem [shape: f32[16,24,16], index: 7, kind: output, shape index: {}]
  %s8 = sld [smem:[#allocation0]]
  $region38: #{tpu_custom_call.1} parent=0
    _
  %s10 = ssub.s32 1, %s8
  %s11 = scalar_select 0, %s10, %s8
  %12 = sst [smem:[#allocation5]] %s0
  %s13 = sshll.u32 %s1, 4
  %s14 = int_to_ptr.vmem [resolvable:$true] %s13
  %16 = dma.vmem_to_smem %s14, 16, [#allocation6], [#allocation4]
  %s17 = sshll.u32 %s2, 4
  %s18 = int_to_ptr.vmem [resolvable:$true] %s17
  %20 = dma.vmem_to_smem %s18, 16, [#allocation7], [#allocation4]
  %21 = dma.done [#allocation4], 32
  %22 = sfence
  // Predicated region
  $region2: #{tpu_custom_call.1} parent=0 // pred_check
    _
  $region3: #{tpu_custom_call.1} parent=0 // pred_check_branch
    %24 = sbr.rel (0) target = $region5
  $region4: #{tpu_custom_call.1} parent=0 // pred_region
    _
  $region5: #{tpu_custom_call.1} parent=0 // pred_fallthru
    _
  // Predicated region
  $region6: #{tpu_custom_call.1} parent=0 // pred_check
    _
  $region7: #{tpu_custom_call.1} parent=0 // pred_check_branch
    %26 = sbr.rel (0) target = $region9
  $region8: #{tpu_custom_call.1} parent=0 // pred_region
    _
  $region9: #{tpu_custom_call.1} parent=0 // pred_fallthru
    _
  // Predicated region
  $region10: #{tpu_custom_call.1} parent=0 // pred_check
    _
  $region11: #{tpu_custom_call.1} parent=0 // pred_check_branch
    %28 = sbr.rel (0) target = $region13
  $region12: #{tpu_custom_call.1} parent=0 // pred_region
    _
  $region13: #{tpu_custom_call.1} parent=0 // pred_fallthru
    _
  %s29 = ssub.s32 0, 0
  %s30 = ssub.s32 0, 0
  %p31 = scmp.ne.s32.totalorder 0, 0
  %p32 = scmp.lt.s32.totalorder 0, 0
  %p33 = pnand %p32, %p31
  %p34 = pneg %p33
  %s35 = sadd.s32 0, 2
  %s36 = scalar_select %p34, %s35, 0
  %p37 = scmp.eq.s32.totalorder 0, 0
  // Predicated region
  $region14: #{tpu_custom_call.1} parent=0 // pred_check
    %p38 = pneg %p37
  $region15: #{tpu_custom_call.1} parent=0 // pred_check_branch
    %40 = sbr.rel (%p38) target = $region17
  $region16: #{tpu_custom_call.1} parent=0 // pred_region
    %s41 = sld [smem:[#allocation5]]
    %s42 = smul.u32 %s41, 16
    %s43 = smul.addr %s42, 16
    %s44 = scalar_lea.hbm %s4, %s43
    // Predicated region
    $region18: #{tpu_custom_call.1} parent=16 // pred_check
      _
    $region19: #{tpu_custom_call.1} parent=16 // pred_check_branch
      %46 = sbr.rel target = $region21
    $region20: #{tpu_custom_call.1} parent=16 // pred_region
      %47 = sst [smem:[#allocation10]] [#allocation9]
      %48 = sst [smem:[#allocation11]] [#allocation8]
    $region21: #{tpu_custom_call.1} parent=16 // pred_fallthru
      _
    %50 = shalt.err (0)
    %s52 = sshll.u32 [#allocation2], 4
    %s53 = int_to_ptr.vmem [resolvable:$true] %s52
    %55 = dma.hbm_to_vmem [thread:$0]  %s44, 2048, %s53, [#allocation3]
  $region17: #{tpu_custom_call.1} parent=0 // pred_fallthru
    _
  %s56 = smul.u32 %s36, 8
  %s57 = scalar_lea.sflag [#allocation3], %s36
  %s58 = smul.u32 8, 16
  %s59 = smul.u32 %s58, 1
  %s60 = sshll.u32 %s59, 4
  %61 = dma.done %s57, %s60
  %s62 = sadd.s32 0, 1
  %p63 = scmp.lt.s32.totalorder %s62, 1
  // Predicated region
  $region22: #{tpu_custom_call.1} parent=0 // pred_check
    %p64 = pneg %p63
  $region23: #{tpu_custom_call.1} parent=0 // pred_check_branch
    %66 = sbr.rel (%p64) target = $region25
  $region24: #{tpu_custom_call.1} parent=0 // pred_region
    %s67 = ssub.s32 1, %s36
    %s68 = sld [smem:[#allocation5 + %s62]]
    %s69 = smul.u32 %s67, 8
    %s70 = smul.u32 %s68, 16
    %s71 = smul.addr %s70, 16
    %s72 = scalar_lea.hbm %s4, %s71
    %s73 = smul.u32 %s69, 16
    %s74 = scalar_lea.vmem [#allocation2], %s73
    %s75 = scalar_lea.sflag [#allocation3], %s67
    // Predicated region
    $region26: #{tpu_custom_call.1} parent=24 // pred_check
      _
    $region27: #{tpu_custom_call.1} parent=24 // pred_check_branch
      %77 = sbr.rel target = $region29
    $region28: #{tpu_custom_call.1} parent=24 // pred_region
      %78 = sst [smem:[#allocation10]] [#allocation13]
      %79 = sst [smem:[#allocation11]] [#allocation12]
    $region29: #{tpu_custom_call.1} parent=24 // pred_fallthru
      _
    %81 = shalt.err (0)
    %s83 = sshll.u32 %s74, 4
    %s84 = int_to_ptr.vmem [resolvable:$true] %s83
    %86 = dma.hbm_to_vmem [thread:$0]  %s72, 2048, %s84, %s75
  $region25: #{tpu_custom_call.1} parent=0 // pred_fallthru
    _
  %v87 = vld [vmem:[%s5] sm:$0xff]
  %v88 = vld [vmem:[%s5 + $0x8] sm:$0xff]
  %v89 = vld [vmem:[%s5 + $0x10] sm:$0xff]
  %v90 = vld [vmem:[%s6] sm:$0xff]
  %v91 = vld [vmem:[%s6 + $0x8] sm:$0xff]
  %s92 = smul.u32 0, 16
  %s93 = sld [smem:[#allocation6 + %s92]]
  %s94 = sld [smem:[#allocation7 + %s92]]
  %s95 = sadd.s32 %s56, %s93
  %s96 = smul.u32 %s95, 16
  %s97 = scalar_lea.vmem [#allocation2], %s96
  %v98 = vld [vmem:[%s97] sm:$0xff]
  %v99 = vld [vmem:[%s97 + $0x8] sm:$0xff]
  %s100 = sadd.s32 %s56, %s94
  %s101 = smul.u32 %s100, 16
  %s102 = scalar_lea.vmem [#allocation2], %s101
  %v103 = vld [vmem:[%s102] sm:$0xff]
  %v104 = vld [vmem:[%s102 + $0x8] sm:$0xff]
  %v105 = vld [vmem:[%s3] sm:$0x1]
  %v106 = vsub.f32 %v103, %v98
  %v107 = vsub.f32 %v104, %v99
  %v108 = vlaneseq
  %v109 = vshrl.u32 %v108, 7
  %v110 = vsub.s32 0, %v109
  %v111 = vrot.slane %v105, %v110
  %v112 = vmul.f32 %v111, %v106
  %v113 = vmul.f32 %v111, %v107
  %v114 = vadd.f32 %v98, %v112
  %v115 = vadd.f32 %v99, %v113
  %vm116 = vcmask 130048
  %v118 = vsel %vm116, %v114, 0
  %v121 = vsel %vm116, %v115, 0
  %123 = vmatprep.subr.mxu0 0.0
  %124 = vmatpush1.msra.mxu0 0.0
  %125 = vmatprep.subr.mxu0 0.0
  %126 = vmatpush1.msra.mxu0 0.0
  %127 = vmatprep.subr.mxu0 0.0
  %128 = vmatpush1.msra.mxu0 0.0
  %129 = vmatprep.subr.mxu0 0.0
  %130 = vmatpush1.msra.mxu0 0.0
  %131 = vmatprep.subr.mxu0 0.0
  %132 = vmatpush1.msra.mxu0 0.0
  %133 = vmatprep.subr.mxu0 0.0
  %134 = vmatpush1.msra.mxu0 0.0
  %135 = vmatprep.subr.mxu0 0.0
  %136 = vmatpush1.msra.mxu0 0.0
  %137 = vmatprep.subr.mxu0 0.0
  %138 = vmatpush1.msra.mxu0 0.0
  %139 = vmatprep.subr.mxu0 0.0
  %140 = vmatpush1.msra.mxu0 0.0
  %141 = vmatprep.subr.mxu0 0.0
  %142 = vmatpush1.msra.mxu0 0.0
  %143 = vmatprep.subr.mxu0 0.0
  %144 = vmatpush1.msra.mxu0 0.0
  %145 = vmatprep.subr.mxu0 0.0
  %146 = vmatpush1.msra.mxu0 0.0
  %147 = vmatprep.subr.mxu0 0.0
  %148 = vmatpush1.msra.mxu0 0.0
  %149 = vmatprep.subr.mxu0 0.0
  %150 = vmatpush1.msra.mxu0 0.0
  %151 = vmatprep.subr.mxu0 0.0
  %152 = vmatpush1.msra.mxu0 %v91
  %153 = vmatprep.subr.mxu0 0.0
  %154 = vmatpush1.msra.mxu0 %v90
  %155 = vmatprep.subr.mxu0 0.0
  %156 = vmatpush2.msra.mxu0 0.0
  %157 = vmatprep.subr.mxu0 0.0
  %158 = vmatpush2.msra.mxu0 0.0
  %159 = vmatprep.subr.mxu0 0.0
  %160 = vmatpush2.msra.mxu0 0.0
  %161 = vmatprep.subr.mxu0 0.0
  %162 = vmatpush2.msra.mxu0 0.0
  %163 = vmatprep.subr.mxu0 0.0
  %164 = vmatpush2.msra.mxu0 0.0
  %165 = vmatprep.subr.mxu0 0.0
  %166 = vmatpush2.msra.mxu0 0.0
  %167 = vmatprep.subr.mxu0 0.0
  %168 = vmatpush2.msra.mxu0 0.0
  %169 = vmatprep.subr.mxu0 0.0
  %170 = vmatpush2.msra.mxu0 0.0
  %171 = vmatprep.subr.mxu0 0.0
  %172 = vmatpush2.msra.mxu0 0.0
  %173 = vmatprep.subr.mxu0 0.0
  %174 = vmatpush2.msra.mxu0 0.0
  %175 = vmatprep.subr.mxu0 0.0
  %176 = vmatpush2.msra.mxu0 0.0
  %177 = vmatprep.subr.mxu0 0.0
  %178 = vmatpush2.msra.mxu0 0.0
  %179 = vmatprep.subr.mxu0 0.0
  %180 = vmatpush2.msra.mxu0 0.0
  %181 = vmatprep.subr.mxu0 0.0
  %182 = vmatpush2.msra.mxu0 0.0
  %183 = vmatprep.subr.mxu0 0.0
  %184 = vmatpush2.msra.mxu0 0.0
  %185 = vmatprep.subr.mxu0 0.0
  %186 = vmatpush2.msra.mxu0 0.0
  %187 = vmatprep.mubr.f32.mxu0 0.0
  %188 = vmatmul.mubr.f32.gmra.mxu0 %v118
  %v189 = vpop.f32.mrf.mxu0
  %v190 = vadd.f32 0.0, %v189
  %v191 = vpop.f32.mrf.mxu0
  %192 = vmatprep.mubr.f32.mxu0 0.0
  %193 = vmatmul.mubr.f32.gmra.mxu0 %v121
  %v194 = vpop.f32.mrf.mxu0
  %v195 = vadd.f32 0.0, %v194
  %v196 = vpop.f32.mrf.mxu0
  %197 = vdwg.mxu0
  %v199 = vsel %vm116, %v87, 0
  %v202 = vsel %vm116, %v88, 0
  %v205 = vsel %vm116, %v89, 0
  %207 = vmatprep.subr.mxu0 0.0
  %208 = vmatpush1.msra.mxu0 0.0
  %209 = vmatprep.subr.mxu0 0.0
  %210 = vmatpush1.msra.mxu0 0.0
  %211 = vmatprep.subr.mxu0 0.0
  %212 = vmatpush1.msra.mxu0 0.0
  %213 = vmatprep.subr.mxu0 0.0
  %214 = vmatpush1.msra.mxu0 0.0
  %215 = vmatprep.subr.mxu0 0.0
  %216 = vmatpush1.msra.mxu0 0.0
  %217 = vmatprep.subr.mxu0 0.0
  %218 = vmatpush1.msra.mxu0 0.0
  %219 = vmatprep.subr.mxu0 0.0
  %220 = vmatpush1.msra.mxu0 0.0
  %221 = vmatprep.subr.mxu0 0.0
  %222 = vmatpush1.msra.mxu0 0.0
  %223 = vmatprep.subr.mxu0 0.0
  %224 = vmatpush1.msra.mxu0 0.0
  %225 = vmatprep.subr.mxu0 0.0
  %226 = vmatpush1.msra.mxu0 0.0
  %227 = vmatprep.subr.mxu0 0.0
  %228 = vmatpush1.msra.mxu0 0.0
  %229 = vmatprep.subr.mxu0 0.0
  %230 = vmatpush1.msra.mxu0 0.0
  %231 = vmatprep.subr.mxu0 0.0
  %232 = vmatpush1.msra.mxu0 0.0
  %233 = vmatprep.subr.mxu0 0.0
  %234 = vmatpush1.msra.mxu0 0.0
  %235 = vmatprep.subr.mxu0 0.0
  %236 = vmatpush1.msra.mxu0 %v195
  %237 = vmatprep.subr.mxu0 0.0
  %238 = vmatpush1.msra.mxu0 %v190
  %239 = vmatprep.subr.mxu0 0.0
  %240 = vmatpush2.msra.mxu0 0.0
  %241 = vmatprep.subr.mxu0 0.0
  %242 = vmatpush2.msra.mxu0 0.0
  %243 = vmatprep.subr.mxu0 0.0
  %244 = vmatpush2.msra.mxu0 0.0
  %245 = vmatprep.subr.mxu0 0.0
  %246 = vmatpush2.msra.mxu0 0.0
  %247 = vmatprep.subr.mxu0 0.0
  %248 = vmatpush2.msra.mxu0 0.0
  %249 = vmatprep.subr.mxu0 0.0
  %250 = vmatpush2.msra.mxu0 0.0
  %251 = vmatprep.subr.mxu0 0.0
  %252 = vmatpush2.msra.mxu0 0.0
  %253 = vmatprep.subr.mxu0 0.0
  %254 = vmatpush2.msra.mxu0 0.0
  %255 = vmatprep.subr.mxu0 0.0
  %256 = vmatpush2.msra.mxu0 0.0
  %257 = vmatprep.subr.mxu0 0.0
  %258 = vmatpush2.msra.mxu0 0.0
  %259 = vmatprep.subr.mxu0 0.0
  %260 = vmatpush2.msra.mxu0 0.0
  %261 = vmatprep.subr.mxu0 0.0
  %262 = vmatpush2.msra.mxu0 0.0
  %263 = vmatprep.subr.mxu0 0.0
  %264 = vmatpush2.msra.mxu0 0.0
  %265 = vmatprep.subr.mxu0 0.0
  %266 = vmatpush2.msra.mxu0 0.0
  %267 = vmatprep.subr.mxu0 0.0
  %268 = vmatpush2.msra.mxu0 0.0
  %269 = vmatprep.subr.mxu0 0.0
  %270 = vmatpush2.msra.mxu0 0.0
  %271 = vmatprep.mubr.f32.mxu0 0.0
  %272 = vmatmul.mubr.f32.gmra.mxu0 %v199
  %v273 = vpop.f32.mrf.mxu0
  %v274 = vadd.f32 0.0, %v273
  %v275 = vpop.f32.mrf.mxu0
  %276 = vmatprep.mubr.f32.mxu0 0.0
  %277 = vmatmul.mubr.f32.gmra.mxu0 %v202
  %v278 = vpop.f32.mrf.mxu0
  %v279 = vadd.f32 0.0, %v278
  %v280 = vpop.f32.mrf.mxu0
  %281 = vmatprep.mubr.f32.mxu0 0.0
  %282 = vmatmul.mubr.f32.gmra.mxu0 %v205
  %v283 = vpop.f32.mrf.mxu0
  %v284 = vadd.f32 0.0, %v283
  %v285 = vpop.f32.mrf.mxu0
  %286 = vdwg.mxu0
  %287 = vst.msk [vmem:[%s7] sm:$0xff] %vm116, %v274
  %288 = vst.msk [vmem:[%s7 + $0x8] sm:$0xff] %vm116, %v279
  %289 = vst.msk [vmem:[%s7 + $0x10] sm:$0xff] %vm116, %v284
  %s290 = sadd.s32 %s92, 1
  %s291 = sld [smem:[#allocation6 + %s290]]
  %s292 = sld [smem:[#allocation7 + %s290]]
  %s293 = sadd.s32 %s56, %s291
  %s294 = smul.u32 %s293, 16
  %s295 = scalar_lea.vmem [#allocation2], %s294
  %v296 = vld [vmem:[%s295] sm:$0xff]
  %v297 = vld [vmem:[%s295 + $0x8] sm:$0xff]
  %s298 = sadd.s32 %s56, %s292
  %s299 = smul.u32 %s298, 16
  %s300 = scalar_lea.vmem [#allocation2], %s299
  %v301 = vld [vmem:[%s300] sm:$0xff]
  %v302 = vld [vmem:[%s300 + $0x8] sm:$0xff]
  %v303 = vld [vmem:[%s3 + $0x1] sm:$0x1]
  %v304 = vsub.f32 %v301, %v296
  %v305 = vsub.f32 %v302, %v297
  %v306 = vlaneseq
  %v307 = vshrl.u32 %v306, 7
  %v308 = vsub.s32 0, %v307
  %v309 = vrot.slane %v303, %v308
  %v310 = vmul.f32 %v309, %v304
  %v311 = vmul.f32 %v309, %v305
  %v312 = vadd.f32 %v296, %v310
  %v313 = vadd.f32 %v297, %v311
  %v315 = vsel %vm116, %v312, 0
  %v318 = vsel %vm116, %v313, 0
  %320 = vmatprep.subr.mxu0 0.0
  %321 = vmatpush1.msra.mxu0 0.0
  %322 = vmatprep.subr.mxu0 0.0
  %323 = vmatpush1.msra.mxu0 0.0
  %324 = vmatprep.subr.mxu0 0.0
  %325 = vmatpush1.msra.mxu0 0.0
  %326 = vmatprep.subr.mxu0 0.0
  %327 = vmatpush1.msra.mxu0 0.0
  %328 = vmatprep.subr.mxu0 0.0
  %329 = vmatpush1.msra.mxu0 0.0
  %330 = vmatprep.subr.mxu0 0.0
  %331 = vmatpush1.msra.mxu0 0.0
  %332 = vmatprep.subr.mxu0 0.0
  %333 = vmatpush1.msra.mxu0 0.0
  %334 = vmatprep.subr.mxu0 0.0
  %335 = vmatpush1.msra.mxu0 0.0
  %336 = vmatprep.subr.mxu0 0.0
  %337 = vmatpush1.msra.mxu0 0.0
  %338 = vmatprep.subr.mxu0 0.0
  %339 = vmatpush1.msra.mxu0 0.0
  %340 = vmatprep.subr.mxu0 0.0
  %341 = vmatpush1.msra.mxu0 0.0
  %342 = vmatprep.subr.mxu0 0.0
  %343 = vmatpush1.msra.mxu0 0.0
  %344 = vmatprep.subr.mxu0 0.0
  %345 = vmatpush1.msra.mxu0 0.0
  %346 = vmatprep.subr.mxu0 0.0
  %347 = vmatpush1.msra.mxu0 0.0
  %348 = vmatprep.subr.mxu0 0.0
  %349 = vmatpush1.msra.mxu0 %v91
  %350 = vmatprep.subr.mxu0 0.0
  %351 = vmatpush1.msra.mxu0 %v90
  %352 = vmatprep.subr.mxu0 0.0
  %353 = vmatpush2.msra.mxu0 0.0
  %354 = vmatprep.subr.mxu0 0.0
  %355 = vmatpush2.msra.mxu0 0.0
  %356 = vmatprep.subr.mxu0 0.0
  %357 = vmatpush2.msra.mxu0 0.0
  %358 = vmatprep.subr.mxu0 0.0
  %359 = vmatpush2.msra.mxu0 0.0
  %360 = vmatprep.subr.mxu0 0.0
  %361 = vmatpush2.msra.mxu0 0.0
  %362 = vmatprep.subr.mxu0 0.0
  %363 = vmatpush2.msra.mxu0 0.0
  %364 = vmatprep.subr.mxu0 0.0
  %365 = vmatpush2.msra.mxu0 0.0
  %366 = vmatprep.subr.mxu0 0.0
  %367 = vmatpush2.msra.mxu0 0.0
  %368 = vmatprep.subr.mxu0 0.0
  %369 = vmatpush2.msra.mxu0 0.0
  %370 = vmatprep.subr.mxu0 0.0
  %371 = vmatpush2.msra.mxu0 0.0
  %372 = vmatprep.subr.mxu0 0.0
  %373 = vmatpush2.msra.mxu0 0.0
  %374 = vmatprep.subr.mxu0 0.0
  %375 = vmatpush2.msra.mxu0 0.0
  %376 = vmatprep.subr.mxu0 0.0
  %377 = vmatpush2.msra.mxu0 0.0
  %378 = vmatprep.subr.mxu0 0.0
  %379 = vmatpush2.msra.mxu0 0.0
  %380 = vmatprep.subr.mxu0 0.0
  %381 = vmatpush2.msra.mxu0 0.0
  %382 = vmatprep.subr.mxu0 0.0
  %383 = vmatpush2.msra.mxu0 0.0
  %384 = vmatprep.mubr.f32.mxu0 0.0
  %385 = vmatmul.mubr.f32.gmra.mxu0 %v315
  %v386 = vpop.f32.mrf.mxu0
  %v387 = vadd.f32 0.0, %v386
  %v388 = vpop.f32.mrf.mxu0
  %389 = vmatprep.mubr.f32.mxu0 0.0
  %390 = vmatmul.mubr.f32.gmra.mxu0 %v318
  %v391 = vpop.f32.mrf.mxu0
  %v392 = vadd.f32 0.0, %v391
  %v393 = vpop.f32.mrf.mxu0
  %394 = vdwg.mxu0
  %395 = vmatprep.subr.mxu0 0.0
  %396 = vmatpush1.msra.mxu0 0.0
  %397 = vmatprep.subr.mxu0 0.0
  %398 = vmatpush1.msra.mxu0 0.0
  %399 = vmatprep.subr.mxu0 0.0
  %400 = vmatpush1.msra.mxu0 0.0
  %401 = vmatprep.subr.mxu0 0.0
  %402 = vmatpush1.msra.mxu0 0.0
  %403 = vmatprep.subr.mxu0 0.0
  %404 = vmatpush1.msra.mxu0 0.0
  %405 = vmatprep.subr.mxu0 0.0
  %406 = vmatpush1.msra.mxu0 0.0
  %407 = vmatprep.subr.mxu0 0.0
  %408 = vmatpush1.msra.mxu0 0.0
  %409 = vmatprep.subr.mxu0 0.0
  %410 = vmatpush1.msra.mxu0 0.0
  %411 = vmatprep.subr.mxu0 0.0
  %412 = vmatpush1.msra.mxu0 0.0
  %413 = vmatprep.subr.mxu0 0.0
  %414 = vmatpush1.msra.mxu0 0.0
  %415 = vmatprep.subr.mxu0 0.0
  %416 = vmatpush1.msra.mxu0 0.0
  %417 = vmatprep.subr.mxu0 0.0
  %418 = vmatpush1.msra.mxu0 0.0
  %419 = vmatprep.subr.mxu0 0.0
  %420 = vmatpush1.msra.mxu0 0.0
  %421 = vmatprep.subr.mxu0 0.0
  %422 = vmatpush1.msra.mxu0 0.0
  %423 = vmatprep.subr.mxu0 0.0
  %424 = vmatpush1.msra.mxu0 %v392
  %425 = vmatprep.subr.mxu0 0.0
  %426 = vmatpush1.msra.mxu0 %v387
  %427 = vmatprep.subr.mxu0 0.0
  %428 = vmatpush2.msra.mxu0 0.0
  %429 = vmatprep.subr.mxu0 0.0
  %430 = vmatpush2.msra.mxu0 0.0
  %431 = vmatprep.subr.mxu0 0.0
  %432 = vmatpush2.msra.mxu0 0.0
  %433 = vmatprep.subr.mxu0 0.0
  %434 = vmatpush2.msra.mxu0 0.0
  %435 = vmatprep.subr.mxu0 0.0
  %436 = vmatpush2.msra.mxu0 0.0
  %437 = vmatprep.subr.mxu0 0.0
  %438 = vmatpush2.msra.mxu0 0.0
  %439 = vmatprep.subr.mxu0 0.0
  %440 = vmatpush2.msra.mxu0 0.0
  %441 = vmatprep.subr.mxu0 0.0
  %442 = vmatpush2.msra.mxu0 0.0
  %443 = vmatprep.subr.mxu0 0.0
  %444 = vmatpush2.msra.mxu0 0.0
  %445 = vmatprep.subr.mxu0 0.0
  %446 = vmatpush2.msra.mxu0 0.0
  %447 = vmatprep.subr.mxu0 0.0
  %448 = vmatpush2.msra.mxu0 0.0
  %449 = vmatprep.subr.mxu0 0.0
  %450 = vmatpush2.msra.mxu0 0.0
  %451 = vmatprep.subr.mxu0 0.0
  %452 = vmatpush2.msra.mxu0 0.0
  %453 = vmatprep.subr.mxu0 0.0
  %454 = vmatpush2.msra.mxu0 0.0
  %455 = vmatprep.subr.mxu0 0.0
  %456 = vmatpush2.msra.mxu0 0.0
  %457 = vmatprep.subr.mxu0 0.0
  %458 = vmatpush2.msra.mxu0 0.0
  %459 = vmatprep.mubr.f32.mxu0 0.0
  %460 = vmatmul.mubr.f32.gmra.mxu0 %v199
  %v461 = vpop.f32.mrf.mxu0
  %v462 = vadd.f32 0.0, %v461
  %v463 = vpop.f32.mrf.mxu0
  %464 = vmatprep.mubr.f32.mxu0 0.0
  %465 = vmatmul.mubr.f32.gmra.mxu0 %v202
  %v466 = vpop.f32.mrf.mxu0
  %v467 = vadd.f32 0.0, %v466
  %v468 = vpop.f32.mrf.mxu0
  %469 = vmatprep.mubr.f32.mxu0 0.0
  %470 = vmatmul.mubr.f32.gmra.mxu0 %v205
  %v471 = vpop.f32.mrf.mxu0
  %v472 = vadd.f32 0.0, %v471
  %v473 = vpop.f32.mrf.mxu0
  %474 = vdwg.mxu0
  %s475 = scalar_lea.vmem %s7, 24
  %476 = vst.msk [vmem:[%s475] sm:$0xff] %vm116, %v462
  %477 = vst.msk [vmem:[%s475 + $0x8] sm:$0xff] %vm116, %v467
  %478 = vst.msk [vmem:[%s475 + $0x10] sm:$0xff] %vm116, %v472
  %s479 = sadd.s32 %s92, 2
  %s480 = sld [smem:[#allocation6 + %s479]]
  %s481 = sld [smem:[#allocation7 + %s479]]
  %s482 = sadd.s32 %s56, %s480
  %s483 = smul.u32 %s482, 16
  %s484 = scalar_lea.vmem [#allocation2], %s483
  %v485 = vld [vmem:[%s484] sm:$0xff]
  %v486 = vld [vmem:[%s484 + $0x8] sm:$0xff]
  %s487 = sadd.s32 %s56, %s481
  %s488 = smul.u32 %s487, 16
  %s489 = scalar_lea.vmem [#allocation2], %s488
  %v490 = vld [vmem:[%s489] sm:$0xff]
  %v491 = vld [vmem:[%s489 + $0x8] sm:$0xff]
  %v492 = vld [vmem:[%s3 + $0x2] sm:$0x1]
  %v493 = vsub.f32 %v490, %v485
  %v494 = vsub.f32 %v491, %v486
  %v495 = vlaneseq
  %v496 = vshrl.u32 %v495, 7
  %v497 = vsub.s32 0, %v496
  %v498 = vrot.slane %v492, %v497
  %v499 = vmul.f32 %v498, %v493
  %v500 = vmul.f32 %v498, %v494
  %v501 = vadd.f32 %v485, %v499
  %v502 = vadd.f32 %v486, %v500
  %v504 = vsel %vm116, %v501, 0
  %v507 = vsel %vm116, %v502, 0
  %509 = vmatprep.subr.mxu0 0.0
  %510 = vmatpush1.msra.mxu0 0.0
  %511 = vmatprep.subr.mxu0 0.0
  %512 = vmatpush1.msra.mxu0 0.0
  %513 = vmatprep.subr.mxu0 0.0
  %514 = vmatpush1.msra.mxu0 0.0
  %515 = vmatprep.subr.mxu0 0.0
  %516 = vmatpush1.msra.mxu0 0.0
  %517 = vmatprep.subr.mxu0 0.0
  %518 = vmatpush1.msra.mxu0 0.0
  %519 = vmatprep.subr.mxu0 0.0
  %520 = vmatpush1.msra.mxu0 0.0
  %521 = vmatprep.subr.mxu0 0.0
  %522 = vmatpush1.msra.mxu0 0.0
  %523 = vmatprep.subr.mxu0 0.0
  %524 = vmatpush1.msra.mxu0 0.0
  %525 = vmatprep.subr.mxu0 0.0
  %526 = vmatpush1.msra.mxu0 0.0
  %527 = vmatprep.subr.mxu0 0.0
  %528 = vmatpush1.msra.mxu0 0.0
  %529 = vmatprep.subr.mxu0 0.0
  %530 = vmatpush1.msra.mxu0 0.0
  %531 = vmatprep.subr.mxu0 0.0
  %532 = vmatpush1.msra.mxu0 0.0
  %533 = vmatprep.subr.mxu0 0.0
  %534 = vmatpush1.msra.mxu0 0.0
  %535 = vmatprep.subr.mxu0 0.0
  %536 = vmatpush1.msra.mxu0 0.0
  %537 = vmatprep.subr.mxu0 0.0
  %538 = vmatpush1.msra.mxu0 %v91
  %539 = vmatprep.subr.mxu0 0.0
  %540 = vmatpush1.msra.mxu0 %v90
  %541 = vmatprep.subr.mxu0 0.0
  %542 = vmatpush2.msra.mxu0 0.0
  %543 = vmatprep.subr.mxu0 0.0
  %544 = vmatpush2.msra.mxu0 0.0
  %545 = vmatprep.subr.mxu0 0.0
  %546 = vmatpush2.msra.mxu0 0.0
  %547 = vmatprep.subr.mxu0 0.0
  %548 = vmatpush2.msra.mxu0 0.0
  %549 = vmatprep.subr.mxu0 0.0
  %550 = vmatpush2.msra.mxu0 0.0
  %551 = vmatprep.subr.mxu0 0.0
  %552 = vmatpush2.msra.mxu0 0.0
  %553 = vmatprep.subr.mxu0 0.0
  %554 = vmatpush2.msra.mxu0 0.0
  %555 = vmatprep.subr.mxu0 0.0
  %556 = vmatpush2.msra.mxu0 0.0
  %557 = vmatprep.subr.mxu0 0.0
  %558 = vmatpush2.msra.mxu0 0.0
  %559 = vmatprep.subr.mxu0 0.0
  %560 = vmatpush2.msra.mxu0 0.0
  %561 = vmatprep.subr.mxu0 0.0
  %562 = vmatpush2.msra.mxu0 0.0
  %563 = vmatprep.subr.mxu0 0.0
  %564 = vmatpush2.msra.mxu0 0.0
  %565 = vmatprep.subr.mxu0 0.0
  %566 = vmatpush2.msra.mxu0 0.0
  %567 = vmatprep.subr.mxu0 0.0
  %568 = vmatpush2.msra.mxu0 0.0
  %569 = vmatprep.subr.mxu0 0.0
  %570 = vmatpush2.msra.mxu0 0.0
  %571 = vmatprep.subr.mxu0 0.0
  %572 = vmatpush2.msra.mxu0 0.0
  %573 = vmatprep.mubr.f32.mxu0 0.0
  %574 = vmatmul.mubr.f32.gmra.mxu0 %v504
  %v575 = vpop.f32.mrf.mxu0
  %v576 = vadd.f32 0.0, %v575
  %v577 = vpop.f32.mrf.mxu0
  %578 = vmatprep.mubr.f32.mxu0 0.0
  %579 = vmatmul.mubr.f32.gmra.mxu0 %v507
  %v580 = vpop.f32.mrf.mxu0
  %v581 = vadd.f32 0.0, %v580
  %v582 = vpop.f32.mrf.mxu0
  %583 = vdwg.mxu0
  %584 = vmatprep.subr.mxu0 0.0
  %585 = vmatpush1.msra.mxu0 0.0
  %586 = vmatprep.subr.mxu0 0.0
  %587 = vmatpush1.msra.mxu0 0.0
  %588 = vmatprep.subr.mxu0 0.0
  %589 = vmatpush1.msra.mxu0 0.0
  %590 = vmatprep.subr.mxu0 0.0
  %591 = vmatpush1.msra.mxu0 0.0
  %592 = vmatprep.subr.mxu0 0.0
  %593 = vmatpush1.msra.mxu0 0.0
  %594 = vmatprep.subr.mxu0 0.0
  %595 = vmatpush1.msra.mxu0 0.0
  %596 = vmatprep.subr.mxu0 0.0
  %597 = vmatpush1.msra.mxu0 0.0
  %598 = vmatprep.subr.mxu0 0.0
  %599 = vmatpush1.msra.mxu0 0.0
  %600 = vmatprep.subr.mxu0 0.0
  %601 = vmatpush1.msra.mxu0 0.0
  %602 = vmatprep.subr.mxu0 0.0
  %603 = vmatpush1.msra.mxu0 0.0
  %604 = vmatprep.subr.mxu0 0.0
  %605 = vmatpush1.msra.mxu0 0.0
  %606 = vmatprep.subr.mxu0 0.0
  %607 = vmatpush1.msra.mxu0 0.0
  %608 = vmatprep.subr.mxu0 0.0
  %609 = vmatpush1.msra.mxu0 0.0
  %610 = vmatprep.subr.mxu0 0.0
  %611 = vmatpush1.msra.mxu0 0.0
  %612 = vmatprep.subr.mxu0 0.0
  %613 = vmatpush1.msra.mxu0 %v581
  %614 = vmatprep.subr.mxu0 0.0
  %615 = vmatpush1.msra.mxu0 %v576
  %616 = vmatprep.subr.mxu0 0.0
  %617 = vmatpush2.msra.mxu0 0.0
  %618 = vmatprep.subr.mxu0 0.0
  %619 = vmatpush2.msra.mxu0 0.0
  %620 = vmatprep.subr.mxu0 0.0
  %621 = vmatpush2.msra.mxu0 0.0
  %622 = vmatprep.subr.mxu0 0.0
  %623 = vmatpush2.msra.mxu0 0.0
  %624 = vmatprep.subr.mxu0 0.0
  %625 = vmatpush2.msra.mxu0 0.0
  %626 = vmatprep.subr.mxu0 0.0
  %627 = vmatpush2.msra.mxu0 0.0
  %628 = vmatprep.subr.mxu0 0.0
  %629 = vmatpush2.msra.mxu0 0.0
  %630 = vmatprep.subr.mxu0 0.0
  %631 = vmatpush2.msra.mxu0 0.0
  %632 = vmatprep.subr.mxu0 0.0
  %633 = vmatpush2.msra.mxu0 0.0
  %634 = vmatprep.subr.mxu0 0.0
  %635 = vmatpush2.msra.mxu0 0.0
  %636 = vmatprep.subr.mxu0 0.0
  %637 = vmatpush2.msra.mxu0 0.0
  %638 = vmatprep.subr.mxu0 0.0
  %639 = vmatpush2.msra.mxu0 0.0
  %640 = vmatprep.subr.mxu0 0.0
  %641 = vmatpush2.msra.mxu0 0.0
  %642 = vmatprep.subr.mxu0 0.0
  %643 = vmatpush2.msra.mxu0 0.0
  %644 = vmatprep.subr.mxu0 0.0
  %645 = vmatpush2.msra.mxu0 0.0
  %646 = vmatprep.subr.mxu0 0.0
  %647 = vmatpush2.msra.mxu0 0.0
  %648 = vmatprep.mubr.f32.mxu0 0.0
  %649 = vmatmul.mubr.f32.gmra.mxu0 %v199
  %v650 = vpop.f32.mrf.mxu0
  %v651 = vadd.f32 0.0, %v650
  %v652 = vpop.f32.mrf.mxu0
  %653 = vmatprep.mubr.f32.mxu0 0.0
  %654 = vmatmul.mubr.f32.gmra.mxu0 %v202
  %v655 = vpop.f32.mrf.mxu0
  %v656 = vadd.f32 0.0, %v655
  %v657 = vpop.f32.mrf.mxu0
  %658 = vmatprep.mubr.f32.mxu0 0.0
  %659 = vmatmul.mubr.f32.gmra.mxu0 %v205
  %v660 = vpop.f32.mrf.mxu0
  %v661 = vadd.f32 0.0, %v660
  %v662 = vpop.f32.mrf.mxu0
  %663 = vdwg.mxu0
  %s664 = scalar_lea.vmem %s7, 48
  %665 = vst.msk [vmem:[%s664] sm:$0xff] %vm116, %v651
  %666 = vst.msk [vmem:[%s664 + $0x8] sm:$0xff] %vm116, %v656
  %667 = vst.msk [vmem:[%s664 + $0x10] sm:$0xff] %vm116, %v661
  %s668 = sadd.s32 %s92, 3
  %s669 = sld [smem:[#allocation6 + %s668]]
  %s670 = sld [smem:[#allocation7 + %s668]]
  %s671 = sadd.s32 %s56, %s669
  %s672 = smul.u32 %s671, 16
  %s673 = scalar_lea.vmem [#allocation2], %s672
  %v674 = vld [vmem:[%s673] sm:$0xff]
  %v675 = vld [vmem:[%s673 + $0x8] sm:$0xff]
  %s676 = sadd.s32 %s56, %s670
  %s677 = smul.u32 %s676, 16
  %s678 = scalar_lea.vmem [#allocation2], %s677
  %v679 = vld [vmem:[%s678] sm:$0xff]
  %v680 = vld [vmem:[%s678 + $0x8] sm:$0xff]
  %v681 = vld [vmem:[%s3 + $0x3] sm:$0x1]
  %v682 = vsub.f32 %v679, %v674
  %v683 = vsub.f32 %v680, %v675
  %v684 = vlaneseq
  %v685 = vshrl.u32 %v684, 7
  %v686 = vsub.s32 0, %v685
  %v687 = vrot.slane %v681, %v686
  %v688 = vmul.f32 %v687, %v682
  %v689 = vmul.f32 %v687, %v683
  %v690 = vadd.f32 %v674, %v688
  %v691 = vadd.f32 %v675, %v689
  %v693 = vsel %vm116, %v690, 0
  %v696 = vsel %vm116, %v691, 0
  %698 = vmatprep.subr.mxu0 0.0
  %699 = vmatpush1.msra.mxu0 0.0
  %700 = vmatprep.subr.mxu0 0.0
  %701 = vmatpush1.msra.mxu0 0.0
  %702 = vmatprep.subr.mxu0 0.0
  %703 = vmatpush1.msra.mxu0 0.0
  %704 = vmatprep.subr.mxu0 0.0
  %705 = vmatpush1.msra.mxu0 0.0
  %706 = vmatprep.subr.mxu0 0.0
  %707 = vmatpush1.msra.mxu0 0.0
  %708 = vmatprep.subr.mxu0 0.0
  %709 = vmatpush1.msra.mxu0 0.0
  %710 = vmatprep.subr.mxu0 0.0
  %711 = vmatpush1.msra.mxu0 0.0
  %712 = vmatprep.subr.mxu0 0.0
  %713 = vmatpush1.msra.mxu0 0.0
  %714 = vmatprep.subr.mxu0 0.0
  %715 = vmatpush1.msra.mxu0 0.0
  %716 = vmatprep.subr.mxu0 0.0
  %717 = vmatpush1.msra.mxu0 0.0
  %718 = vmatprep.subr.mxu0 0.0
  %719 = vmatpush1.msra.mxu0 0.0
  %720 = vmatprep.subr.mxu0 0.0
  %721 = vmatpush1.msra.mxu0 0.0
  %722 = vmatprep.subr.mxu0 0.0
  %723 = vmatpush1.msra.mxu0 0.0
  %724 = vmatprep.subr.mxu0 0.0
  %725 = vmatpush1.msra.mxu0 0.0
  %726 = vmatprep.subr.mxu0 0.0
  %727 = vmatpush1.msra.mxu0 %v91
  %728 = vmatprep.subr.mxu0 0.0
  %729 = vmatpush1.msra.mxu0 %v90
  %730 = vmatprep.subr.mxu0 0.0
  %731 = vmatpush2.msra.mxu0 0.0
  %732 = vmatprep.subr.mxu0 0.0
  %733 = vmatpush2.msra.mxu0 0.0
  %734 = vmatprep.subr.mxu0 0.0
  %735 = vmatpush2.msra.mxu0 0.0
  %736 = vmatprep.subr.mxu0 0.0
  %737 = vmatpush2.msra.mxu0 0.0
  %738 = vmatprep.subr.mxu0 0.0
  %739 = vmatpush2.msra.mxu0 0.0
  %740 = vmatprep.subr.mxu0 0.0
  %741 = vmatpush2.msra.mxu0 0.0
  %742 = vmatprep.subr.mxu0 0.0
  %743 = vmatpush2.msra.mxu0 0.0
  %744 = vmatprep.subr.mxu0 0.0
  %745 = vmatpush2.msra.mxu0 0.0
  %746 = vmatprep.subr.mxu0 0.0
  %747 = vmatpush2.msra.mxu0 0.0
  %748 = vmatprep.subr.mxu0 0.0
  %749 = vmatpush2.msra.mxu0 0.0
  %750 = vmatprep.subr.mxu0 0.0
  %751 = vmatpush2.msra.mxu0 0.0
  %752 = vmatprep.subr.mxu0 0.0
  %753 = vmatpush2.msra.mxu0 0.0
  %754 = vmatprep.subr.mxu0 0.0
  %755 = vmatpush2.msra.mxu0 0.0
  %756 = vmatprep.subr.mxu0 0.0
  %757 = vmatpush2.msra.mxu0 0.0
  %758 = vmatprep.subr.mxu0 0.0
  %759 = vmatpush2.msra.mxu0 0.0
  %760 = vmatprep.subr.mxu0 0.0
  %761 = vmatpush2.msra.mxu0 0.0
  %762 = vmatprep.mubr.f32.mxu0 0.0
  %763 = vmatmul.mubr.f32.gmra.mxu0 %v693
  %v764 = vpop.f32.mrf.mxu0
  %v765 = vadd.f32 0.0, %v764
  %v766 = vpop.f32.mrf.mxu0
  %767 = vmatprep.mubr.f32.mxu0 0.0
  %768 = vmatmul.mubr.f32.gmra.mxu0 %v696
  %v769 = vpop.f32.mrf.mxu0
  %v770 = vadd.f32 0.0, %v769
  %v771 = vpop.f32.mrf.mxu0
  %772 = vdwg.mxu0
  %773 = vmatprep.subr.mxu0 0.0
  %774 = vmatpush1.msra.mxu0 0.0
  %775 = vmatprep.subr.mxu0 0.0
  %776 = vmatpush1.msra.mxu0 0.0
  %777 = vmatprep.subr.mxu0 0.0
  %778 = vmatpush1.msra.mxu0 0.0
  %779 = vmatprep.subr.mxu0 0.0
  %780 = vmatpush1.msra.mxu0 0.0
  %781 = vmatprep.subr.mxu0 0.0
  %782 = vmatpush1.msra.mxu0 0.0
  %783 = vmatprep.subr.mxu0 0.0
  %784 = vmatpush1.msra.mxu0 0.0
  %785 = vmatprep.subr.mxu0 0.0
  %786 = vmatpush1.msra.mxu0 0.0
  %787 = vmatprep.subr.mxu0 0.0
  %788 = vmatpush1.msra.mxu0 0.0
  %789 = vmatprep.subr.mxu0 0.0
  %790 = vmatpush1.msra.mxu0 0.0
  %791 = vmatprep.subr.mxu0 0.0
  %792 = vmatpush1.msra.mxu0 0.0
  %793 = vmatprep.subr.mxu0 0.0
  %794 = vmatpush1.msra.mxu0 0.0
  %795 = vmatprep.subr.mxu0 0.0
  %796 = vmatpush1.msra.mxu0 0.0
  %797 = vmatprep.subr.mxu0 0.0
  %798 = vmatpush1.msra.mxu0 0.0
  %799 = vmatprep.subr.mxu0 0.0
  %800 = vmatpush1.msra.mxu0 0.0
  %801 = vmatprep.subr.mxu0 0.0
  %802 = vmatpush1.msra.mxu0 %v770
  %803 = vmatprep.subr.mxu0 0.0
  %804 = vmatpush1.msra.mxu0 %v765
  %805 = vmatprep.subr.mxu0 0.0
  %806 = vmatpush2.msra.mxu0 0.0
  %807 = vmatprep.subr.mxu0 0.0
  %808 = vmatpush2.msra.mxu0 0.0
  %809 = vmatprep.subr.mxu0 0.0
  %810 = vmatpush2.msra.mxu0 0.0
  %811 = vmatprep.subr.mxu0 0.0
  %812 = vmatpush2.msra.mxu0 0.0
  %813 = vmatprep.subr.mxu0 0.0
  %814 = vmatpush2.msra.mxu0 0.0
  %815 = vmatprep.subr.mxu0 0.0
  %816 = vmatpush2.msra.mxu0 0.0
  %817 = vmatprep.subr.mxu0 0.0
  %818 = vmatpush2.msra.mxu0 0.0
  %819 = vmatprep.subr.mxu0 0.0
  %820 = vmatpush2.msra.mxu0 0.0
  %821 = vmatprep.subr.mxu0 0.0
  %822 = vmatpush2.msra.mxu0 0.0
  %823 = vmatprep.subr.mxu0 0.0
  %824 = vmatpush2.msra.mxu0 0.0
  %825 = vmatprep.subr.mxu0 0.0
  %826 = vmatpush2.msra.mxu0 0.0
  %827 = vmatprep.subr.mxu0 0.0
  %828 = vmatpush2.msra.mxu0 0.0
  %829 = vmatprep.subr.mxu0 0.0
  %830 = vmatpush2.msra.mxu0 0.0
  %831 = vmatprep.subr.mxu0 0.0
  %832 = vmatpush2.msra.mxu0 0.0
  %833 = vmatprep.subr.mxu0 0.0
  %834 = vmatpush2.msra.mxu0 0.0
  %835 = vmatprep.subr.mxu0 0.0
  %836 = vmatpush2.msra.mxu0 0.0
  %837 = vmatprep.mubr.f32.mxu0 0.0
  %838 = vmatmul.mubr.f32.gmra.mxu0 %v199
  %v839 = vpop.f32.mrf.mxu0
  %v840 = vadd.f32 0.0, %v839
  %v841 = vpop.f32.mrf.mxu0
  %842 = vmatprep.mubr.f32.mxu0 0.0
  %843 = vmatmul.mubr.f32.gmra.mxu0 %v202
  %v844 = vpop.f32.mrf.mxu0
  %v845 = vadd.f32 0.0, %v844
  %v846 = vpop.f32.mrf.mxu0
  %847 = vmatprep.mubr.f32.mxu0 0.0
  %848 = vmatmul.mubr.f32.gmra.mxu0 %v205
  %v849 = vpop.f32.mrf.mxu0
  %v850 = vadd.f32 0.0, %v849
  %v851 = vpop.f32.mrf.mxu0
  %852 = vdwg.mxu0
  %s853 = scalar_lea.vmem %s7, 72
  %854 = vst.msk [vmem:[%s853] sm:$0xff] %vm116, %v840
  %855 = vst.msk [vmem:[%s853 + $0x8] sm:$0xff] %vm116, %v845
  %856 = vst.msk [vmem:[%s853 + $0x10] sm:$0xff] %vm116, %v850
  %s857 = sadd.s32 %s92, 4
  %s858 = sld [smem:[#allocation6 + %s857]]
  %s859 = sld [smem:[#allocation7 + %s857]]
  %s860 = sadd.s32 %s56, %s858
  %s861 = smul.u32 %s860, 16
  %s862 = scalar_lea.vmem [#allocation2], %s861
  %v863 = vld [vmem:[%s862] sm:$0xff]
  %v864 = vld [vmem:[%s862 + $0x8] sm:$0xff]
  %s865 = sadd.s32 %s56, %s859
  %s866 = smul.u32 %s865, 16
  %s867 = scalar_lea.vmem [#allocation2], %s866
  %v868 = vld [vmem:[%s867] sm:$0xff]
  %v869 = vld [vmem:[%s867 + $0x8] sm:$0xff]
  %v870 = vld [vmem:[%s3 + $0x4] sm:$0x1]
  %v871 = vsub.f32 %v868, %v863
  %v872 = vsub.f32 %v869, %v864
  %v873 = vlaneseq
  %v874 = vshrl.u32 %v873, 7
  %v875 = vsub.s32 0, %v874
  %v876 = vrot.slane %v870, %v875
  %v877 = vmul.f32 %v876, %v871
  %v878 = vmul.f32 %v876, %v872
  %v879 = vadd.f32 %v863, %v877
  %v880 = vadd.f32 %v864, %v878
  %v882 = vsel %vm116, %v879, 0
  %v885 = vsel %vm116, %v880, 0
  %887 = vmatprep.subr.mxu0 0.0
  %888 = vmatpush1.msra.mxu0 0.0
  %889 = vmatprep.subr.mxu0 0.0
  %890 = vmatpush1.msra.mxu0 0.0
  %891 = vmatprep.subr.mxu0 0.0
  %892 = vmatpush1.msra.mxu0 0.0
  %893 = vmatprep.subr.mxu0 0.0
  %894 = vmatpush1.msra.mxu0 0.0
  %895 = vmatprep.subr.mxu0 0.0
  %896 = vmatpush1.msra.mxu0 0.0
  %897 = vmatprep.subr.mxu0 0.0
  %898 = vmatpush1.msra.mxu0 0.0
  %899 = vmatprep.subr.mxu0 0.0
  %900 = vmatpush1.msra.mxu0 0.0
  %901 = vmatprep.subr.mxu0 0.0
  %902 = vmatpush1.msra.mxu0 0.0
  %903 = vmatprep.subr.mxu0 0.0
  %904 = vmatpush1.msra.mxu0 0.0
  %905 = vmatprep.subr.mxu0 0.0
  %906 = vmatpush1.msra.mxu0 0.0
  %907 = vmatprep.subr.mxu0 0.0
  %908 = vmatpush1.msra.mxu0 0.0
  %909 = vmatprep.subr.mxu0 0.0
  %910 = vmatpush1.msra.mxu0 0.0
  %911 = vmatprep.subr.mxu0 0.0
  %912 = vmatpush1.msra.mxu0 0.0
  %913 = vmatprep.subr.mxu0 0.0
  %914 = vmatpush1.msra.mxu0 0.0
  %915 = vmatprep.subr.mxu0 0.0
  %916 = vmatpush1.msra.mxu0 %v91
  %917 = vmatprep.subr.mxu0 0.0
  %918 = vmatpush1.msra.mxu0 %v90
  %919 = vmatprep.subr.mxu0 0.0
  %920 = vmatpush2.msra.mxu0 0.0
  %921 = vmatprep.subr.mxu0 0.0
  %922 = vmatpush2.msra.mxu0 0.0
  %923 = vmatprep.subr.mxu0 0.0
  %924 = vmatpush2.msra.mxu0 0.0
  %925 = vmatprep.subr.mxu0 0.0
  %926 = vmatpush2.msra.mxu0 0.0
  %927 = vmatprep.subr.mxu0 0.0
  %928 = vmatpush2.msra.mxu0 0.0
  %929 = vmatprep.subr.mxu0 0.0
  %930 = vmatpush2.msra.mxu0 0.0
  %931 = vmatprep.subr.mxu0 0.0
  %932 = vmatpush2.msra.mxu0 0.0
  %933 = vmatprep.subr.mxu0 0.0
  %934 = vmatpush2.msra.mxu0 0.0
  %935 = vmatprep.subr.mxu0 0.0
  %936 = vmatpush2.msra.mxu0 0.0
  %937 = vmatprep.subr.mxu0 0.0
  %938 = vmatpush2.msra.mxu0 0.0
  %939 = vmatprep.subr.mxu0 0.0
  %940 = vmatpush2.msra.mxu0 0.0
  %941 = vmatprep.subr.mxu0 0.0
  %942 = vmatpush2.msra.mxu0 0.0
  %943 = vmatprep.subr.mxu0 0.0
  %944 = vmatpush2.msra.mxu0 0.0
  %945 = vmatprep.subr.mxu0 0.0
  %946 = vmatpush2.msra.mxu0 0.0
  %947 = vmatprep.subr.mxu0 0.0
  %948 = vmatpush2.msra.mxu0 0.0
  %949 = vmatprep.subr.mxu0 0.0
  %950 = vmatpush2.msra.mxu0 0.0
  %951 = vmatprep.mubr.f32.mxu0 0.0
  %952 = vmatmul.mubr.f32.gmra.mxu0 %v882
  %v953 = vpop.f32.mrf.mxu0
  %v954 = vadd.f32 0.0, %v953
  %v955 = vpop.f32.mrf.mxu0
  %956 = vmatprep.mubr.f32.mxu0 0.0
  %957 = vmatmul.mubr.f32.gmra.mxu0 %v885
  %v958 = vpop.f32.mrf.mxu0
  %v959 = vadd.f32 0.0, %v958
  %v960 = vpop.f32.mrf.mxu0
  %961 = vdwg.mxu0
  %962 = vmatprep.subr.mxu0 0.0
  %963 = vmatpush1.msra.mxu0 0.0
  %964 = vmatprep.subr.mxu0 0.0
  %965 = vmatpush1.msra.mxu0 0.0
  %966 = vmatprep.subr.mxu0 0.0
  %967 = vmatpush1.msra.mxu0 0.0
  %968 = vmatprep.subr.mxu0 0.0
  %969 = vmatpush1.msra.mxu0 0.0
  %970 = vmatprep.subr.mxu0 0.0
  %971 = vmatpush1.msra.mxu0 0.0
  %972 = vmatprep.subr.mxu0 0.0
  %973 = vmatpush1.msra.mxu0 0.0
  %974 = vmatprep.subr.mxu0 0.0
  %975 = vmatpush1.msra.mxu0 0.0
  %976 = vmatprep.subr.mxu0 0.0
  %977 = vmatpush1.msra.mxu0 0.0
  %978 = vmatprep.subr.mxu0 0.0
  %979 = vmatpush1.msra.mxu0 0.0
  %980 = vmatprep.subr.mxu0 0.0
  %981 = vmatpush1.msra.mxu0 0.0
  %982 = vmatprep.subr.mxu0 0.0
  %983 = vmatpush1.msra.mxu0 0.0
  %984 = vmatprep.subr.mxu0 0.0
  %985 = vmatpush1.msra.mxu0 0.0
  %986 = vmatprep.subr.mxu0 0.0
  %987 = vmatpush1.msra.mxu0 0.0
  %988 = vmatprep.subr.mxu0 0.0
  %989 = vmatpush1.msra.mxu0 0.0
  %990 = vmatprep.subr.mxu0 0.0
  %991 = vmatpush1.msra.mxu0 %v959
  %992 = vmatprep.subr.mxu0 0.0
  %993 = vmatpush1.msra.mxu0 %v954
  %994 = vmatprep.subr.mxu0 0.0
  %995 = vmatpush2.msra.mxu0 0.0
  %996 = vmatprep.subr.mxu0 0.0
  %997 = vmatpush2.msra.mxu0 0.0
  %998 = vmatprep.subr.mxu0 0.0
  %999 = vmatpush2.msra.mxu0 0.0
  %1000 = vmatprep.subr.mxu0 0.0
  %1001 = vmatpush2.msra.mxu0 0.0
  %1002 = vmatprep.subr.mxu0 0.0
  %1003 = vmatpush2.msra.mxu0 0.0
  %1004 = vmatprep.subr.mxu0 0.0
  %1005 = vmatpush2.msra.mxu0 0.0
  %1006 = vmatprep.subr.mxu0 0.0
  %1007 = vmatpush2.msra.mxu0 0.0
  %1008 = vmatprep.subr.mxu0 0.0
  %1009 = vmatpush2.msra.mxu0 0.0
  %1010 = vmatprep.subr.mxu0 0.0
  %1011 = vmatpush2.msra.mxu0 0.0
  %1012 = vmatprep.subr.mxu0 0.0
  %1013 = vmatpush2.msra.mxu0 0.0
  %1014 = vmatprep.subr.mxu0 0.0
  %1015 = vmatpush2.msra.mxu0 0.0
  %1016 = vmatprep.subr.mxu0 0.0
  %1017 = vmatpush2.msra.mxu0 0.0
  %1018 = vmatprep.subr.mxu0 0.0
  %1019 = vmatpush2.msra.mxu0 0.0
  %1020 = vmatprep.subr.mxu0 0.0
  %1021 = vmatpush2.msra.mxu0 0.0
  %1022 = vmatprep.subr.mxu0 0.0
  %1023 = vmatpush2.msra.mxu0 0.0
  %1024 = vmatprep.subr.mxu0 0.0
  %1025 = vmatpush2.msra.mxu0 0.0
  %1026 = vmatprep.mubr.f32.mxu0 0.0
  %1027 = vmatmul.mubr.f32.gmra.mxu0 %v199
  %v1028 = vpop.f32.mrf.mxu0
  %v1029 = vadd.f32 0.0, %v1028
  %v1030 = vpop.f32.mrf.mxu0
  %1031 = vmatprep.mubr.f32.mxu0 0.0
  %1032 = vmatmul.mubr.f32.gmra.mxu0 %v202
  %v1033 = vpop.f32.mrf.mxu0
  %v1034 = vadd.f32 0.0, %v1033
  %v1035 = vpop.f32.mrf.mxu0
  %1036 = vmatprep.mubr.f32.mxu0 0.0
  %1037 = vmatmul.mubr.f32.gmra.mxu0 %v205
  %v1038 = vpop.f32.mrf.mxu0
  %v1039 = vadd.f32 0.0, %v1038
  %v1040 = vpop.f32.mrf.mxu0
  %1041 = vdwg.mxu0
  %s1042 = scalar_lea.vmem %s7, 96
  %1043 = vst.msk [vmem:[%s1042] sm:$0xff] %vm116, %v1029
  %1044 = vst.msk [vmem:[%s1042 + $0x8] sm:$0xff] %vm116, %v1034
  %1045 = vst.msk [vmem:[%s1042 + $0x10] sm:$0xff] %vm116, %v1039
  %s1046 = sadd.s32 %s92, 5
  %s1047 = sld [smem:[#allocation6 + %s1046]]
  %s1048 = sld [smem:[#allocation7 + %s1046]]
  %s1049 = sadd.s32 %s56, %s1047
  %s1050 = smul.u32 %s1049, 16
  %s1051 = scalar_lea.vmem [#allocation2], %s1050
  %v1052 = vld [vmem:[%s1051] sm:$0xff]
  %v1053 = vld [vmem:[%s1051 + $0x8] sm:$0xff]
  %s1054 = sadd.s32 %s56, %s1048
  %s1055 = smul.u32 %s1054, 16
  %s1056 = scalar_lea.vmem [#allocation2], %s1055
  %v1057 = vld [vmem:[%s1056] sm:$0xff]
  %v1058 = vld [vmem:[%s1056 + $0x8] sm:$0xff]
  %v1059 = vld [vmem:[%s3 + $0x5] sm:$0x1]
  %v1060 = vsub.f32 %v1057, %v1052
  %v1061 = vsub.f32 %v1058, %v1053
  %v1062 = vlaneseq
  %v1063 = vshrl.u32 %v1062, 7
  %v1064 = vsub.s32 0, %v1063
  %v1065 = vrot.slane %v1059, %v1064
  %v1066 = vmul.f32 %v1065, %v1060
  %v1067 = vmul.f32 %v1065, %v1061
  %v1068 = vadd.f32 %v1052, %v1066
  %v1069 = vadd.f32 %v1053, %v1067
  %v1071 = vsel %vm116, %v1068, 0
  %v1074 = vsel %vm116, %v1069, 0
  %1076 = vmatprep.subr.mxu0 0.0
  %1077 = vmatpush1.msra.mxu0 0.0
  %1078 = vmatprep.subr.mxu0 0.0
  %1079 = vmatpush1.msra.mxu0 0.0
  %1080 = vmatprep.subr.mxu0 0.0
  %1081 = vmatpush1.msra.mxu0 0.0
  %1082 = vmatprep.subr.mxu0 0.0
  %1083 = vmatpush1.msra.mxu0 0.0
  %1084 = vmatprep.subr.mxu0 0.0
  %1085 = vmatpush1.msra.mxu0 0.0
  %1086 = vmatprep.subr.mxu0 0.0
  %1087 = vmatpush1.msra.mxu0 0.0
  %1088 = vmatprep.subr.mxu0 0.0
  %1089 = vmatpush1.msra.mxu0 0.0
  %1090 = vmatprep.subr.mxu0 0.0
  %1091 = vmatpush1.msra.mxu0 0.0
  %1092 = vmatprep.subr.mxu0 0.0
  %1093 = vmatpush1.msra.mxu0 0.0
  %1094 = vmatprep.subr.mxu0 0.0
  %1095 = vmatpush1.msra.mxu0 0.0
  %1096 = vmatprep.subr.mxu0 0.0
  %1097 = vmatpush1.msra.mxu0 0.0
  %1098 = vmatprep.subr.mxu0 0.0
  %1099 = vmatpush1.msra.mxu0 0.0
  %1100 = vmatprep.subr.mxu0 0.0
  %1101 = vmatpush1.msra.mxu0 0.0
  %1102 = vmatprep.subr.mxu0 0.0
  %1103 = vmatpush1.msra.mxu0 0.0
  %1104 = vmatprep.subr.mxu0 0.0
  %1105 = vmatpush1.msra.mxu0 %v91
  %1106 = vmatprep.subr.mxu0 0.0
  %1107 = vmatpush1.msra.mxu0 %v90
  %1108 = vmatprep.subr.mxu0 0.0
  %1109 = vmatpush2.msra.mxu0 0.0
  %1110 = vmatprep.subr.mxu0 0.0
  %1111 = vmatpush2.msra.mxu0 0.0
  %1112 = vmatprep.subr.mxu0 0.0
  %1113 = vmatpush2.msra.mxu0 0.0
  %1114 = vmatprep.subr.mxu0 0.0
  %1115 = vmatpush2.msra.mxu0 0.0
  %1116 = vmatprep.subr.mxu0 0.0
  %1117 = vmatpush2.msra.mxu0 0.0
  %1118 = vmatprep.subr.mxu0 0.0
  %1119 = vmatpush2.msra.mxu0 0.0
  %1120 = vmatprep.subr.mxu0 0.0
  %1121 = vmatpush2.msra.mxu0 0.0
  %1122 = vmatprep.subr.mxu0 0.0
  %1123 = vmatpush2.msra.mxu0 0.0
  %1124 = vmatprep.subr.mxu0 0.0
  %1125 = vmatpush2.msra.mxu0 0.0
  %1126 = vmatprep.subr.mxu0 0.0
  %1127 = vmatpush2.msra.mxu0 0.0
  %1128 = vmatprep.subr.mxu0 0.0
  %1129 = vmatpush2.msra.mxu0 0.0
  %1130 = vmatprep.subr.mxu0 0.0
  %1131 = vmatpush2.msra.mxu0 0.0
  %1132 = vmatprep.subr.mxu0 0.0
  %1133 = vmatpush2.msra.mxu0 0.0
  %1134 = vmatprep.subr.mxu0 0.0
  %1135 = vmatpush2.msra.mxu0 0.0
  %1136 = vmatprep.subr.mxu0 0.0
  %1137 = vmatpush2.msra.mxu0 0.0
  %1138 = vmatprep.subr.mxu0 0.0
  %1139 = vmatpush2.msra.mxu0 0.0
  %1140 = vmatprep.mubr.f32.mxu0 0.0
  %1141 = vmatmul.mubr.f32.gmra.mxu0 %v1071
  %v1142 = vpop.f32.mrf.mxu0
  %v1143 = vadd.f32 0.0, %v1142
  %v1144 = vpop.f32.mrf.mxu0
  %1145 = vmatprep.mubr.f32.mxu0 0.0
  %1146 = vmatmul.mubr.f32.gmra.mxu0 %v1074
  %v1147 = vpop.f32.mrf.mxu0
  %v1148 = vadd.f32 0.0, %v1147
  %v1149 = vpop.f32.mrf.mxu0
  %1150 = vdwg.mxu0
  %1151 = vmatprep.subr.mxu0 0.0
  %1152 = vmatpush1.msra.mxu0 0.0
  %1153 = vmatprep.subr.mxu0 0.0
  %1154 = vmatpush1.msra.mxu0 0.0
  %1155 = vmatprep.subr.mxu0 0.0
  %1156 = vmatpush1.msra.mxu0 0.0
  %1157 = vmatprep.subr.mxu0 0.0
  %1158 = vmatpush1.msra.mxu0 0.0
  %1159 = vmatprep.subr.mxu0 0.0
  %1160 = vmatpush1.msra.mxu0 0.0
  %1161 = vmatprep.subr.mxu0 0.0
  %1162 = vmatpush1.msra.mxu0 0.0
  %1163 = vmatprep.subr.mxu0 0.0
  %1164 = vmatpush1.msra.mxu0 0.0
  %1165 = vmatprep.subr.mxu0 0.0
  %1166 = vmatpush1.msra.mxu0 0.0
  %1167 = vmatprep.subr.mxu0 0.0
  %1168 = vmatpush1.msra.mxu0 0.0
  %1169 = vmatprep.subr.mxu0 0.0
  %1170 = vmatpush1.msra.mxu0 0.0
  %1171 = vmatprep.subr.mxu0 0.0
  %1172 = vmatpush1.msra.mxu0 0.0
  %1173 = vmatprep.subr.mxu0 0.0
  %1174 = vmatpush1.msra.mxu0 0.0
  %1175 = vmatprep.subr.mxu0 0.0
  %1176 = vmatpush1.msra.mxu0 0.0
  %1177 = vmatprep.subr.mxu0 0.0
  %1178 = vmatpush1.msra.mxu0 0.0
  %1179 = vmatprep.subr.mxu0 0.0
  %1180 = vmatpush1.msra.mxu0 %v1148
  %1181 = vmatprep.subr.mxu0 0.0
  %1182 = vmatpush1.msra.mxu0 %v1143
  %1183 = vmatprep.subr.mxu0 0.0
  %1184 = vmatpush2.msra.mxu0 0.0
  %1185 = vmatprep.subr.mxu0 0.0
  %1186 = vmatpush2.msra.mxu0 0.0
  %1187 = vmatprep.subr.mxu0 0.0
  %1188 = vmatpush2.msra.mxu0 0.0
  %1189 = vmatprep.subr.mxu0 0.0
  %1190 = vmatpush2.msra.mxu0 0.0
  %1191 = vmatprep.subr.mxu0 0.0
  %1192 = vmatpush2.msra.mxu0 0.0
  %1193 = vmatprep.subr.mxu0 0.0
  %1194 = vmatpush2.msra.mxu0 0.0
  %1195 = vmatprep.subr.mxu0 0.0
  %1196 = vmatpush2.msra.mxu0 0.0
  %1197 = vmatprep.subr.mxu0 0.0
  %1198 = vmatpush2.msra.mxu0 0.0
  %1199 = vmatprep.subr.mxu0 0.0
  %1200 = vmatpush2.msra.mxu0 0.0
  %1201 = vmatprep.subr.mxu0 0.0
  %1202 = vmatpush2.msra.mxu0 0.0
  %1203 = vmatprep.subr.mxu0 0.0
  %1204 = vmatpush2.msra.mxu0 0.0
  %1205 = vmatprep.subr.mxu0 0.0
  %1206 = vmatpush2.msra.mxu0 0.0
  %1207 = vmatprep.subr.mxu0 0.0
  %1208 = vmatpush2.msra.mxu0 0.0
  %1209 = vmatprep.subr.mxu0 0.0
  %1210 = vmatpush2.msra.mxu0 0.0
  %1211 = vmatprep.subr.mxu0 0.0
  %1212 = vmatpush2.msra.mxu0 0.0
  %1213 = vmatprep.subr.mxu0 0.0
  %1214 = vmatpush2.msra.mxu0 0.0
  %1215 = vmatprep.mubr.f32.mxu0 0.0
  %1216 = vmatmul.mubr.f32.gmra.mxu0 %v199
  %v1217 = vpop.f32.mrf.mxu0
  %v1218 = vadd.f32 0.0, %v1217
  %v1219 = vpop.f32.mrf.mxu0
  %1220 = vmatprep.mubr.f32.mxu0 0.0
  %1221 = vmatmul.mubr.f32.gmra.mxu0 %v202
  %v1222 = vpop.f32.mrf.mxu0
  %v1223 = vadd.f32 0.0, %v1222
  %v1224 = vpop.f32.mrf.mxu0
  %1225 = vmatprep.mubr.f32.mxu0 0.0
  %1226 = vmatmul.mubr.f32.gmra.mxu0 %v205
  %v1227 = vpop.f32.mrf.mxu0
  %v1228 = vadd.f32 0.0, %v1227
  %v1229 = vpop.f32.mrf.mxu0
  %1230 = vdwg.mxu0
  %s1231 = scalar_lea.vmem %s7, 120
  %1232 = vst.msk [vmem:[%s1231] sm:$0xff] %vm116, %v1218
  %1233 = vst.msk [vmem:[%s1231 + $0x8] sm:$0xff] %vm116, %v1223
  %1234 = vst.msk [vmem:[%s1231 + $0x10] sm:$0xff] %vm116, %v1228
  %s1235 = sadd.s32 %s92, 6
  %s1236 = sld [smem:[#allocation6 + %s1235]]
  %s1237 = sld [smem:[#allocation7 + %s1235]]
  %s1238 = sadd.s32 %s56, %s1236
  %s1239 = smul.u32 %s1238, 16
  %s1240 = scalar_lea.vmem [#allocation2], %s1239
  %v1241 = vld [vmem:[%s1240] sm:$0xff]
  %v1242 = vld [vmem:[%s1240 + $0x8] sm:$0xff]
  %s1243 = sadd.s32 %s56, %s1237
  %s1244 = smul.u32 %s1243, 16
  %s1245 = scalar_lea.vmem [#allocation2], %s1244
  %v1246 = vld [vmem:[%s1245] sm:$0xff]
  %v1247 = vld [vmem:[%s1245 + $0x8] sm:$0xff]
  %v1248 = vld [vmem:[%s3 + $0x6] sm:$0x1]
  %v1249 = vsub.f32 %v1246, %v1241
  %v1250 = vsub.f32 %v1247, %v1242
  %v1251 = vlaneseq
  %v1252 = vshrl.u32 %v1251, 7
  %v1253 = vsub.s32 0, %v1252
  %v1254 = vrot.slane %v1248, %v1253
  %v1255 = vmul.f32 %v1254, %v1249
  %v1256 = vmul.f32 %v1254, %v1250
  %v1257 = vadd.f32 %v1241, %v1255
  %v1258 = vadd.f32 %v1242, %v1256
  %v1260 = vsel %vm116, %v1257, 0
  %v1263 = vsel %vm116, %v1258, 0
  %1265 = vmatprep.subr.mxu0 0.0
  %1266 = vmatpush1.msra.mxu0 0.0
  %1267 = vmatprep.subr.mxu0 0.0
  %1268 = vmatpush1.msra.mxu0 0.0
  %1269 = vmatprep.subr.mxu0 0.0
  %1270 = vmatpush1.msra.mxu0 0.0
  %1271 = vmatprep.subr.mxu0 0.0
  %1272 = vmatpush1.msra.mxu0 0.0
  %1273 = vmatprep.subr.mxu0 0.0
  %1274 = vmatpush1.msra.mxu0 0.0
  %1275 = vmatprep.subr.mxu0 0.0
  %1276 = vmatpush1.msra.mxu0 0.0
  %1277 = vmatprep.subr.mxu0 0.0
  %1278 = vmatpush1.msra.mxu0 0.0
  %1279 = vmatprep.subr.mxu0 0.0
  %1280 = vmatpush1.msra.mxu0 0.0
  %1281 = vmatprep.subr.mxu0 0.0
  %1282 = vmatpush1.msra.mxu0 0.0
  %1283 = vmatprep.subr.mxu0 0.0
  %1284 = vmatpush1.msra.mxu0 0.0
  %1285 = vmatprep.subr.mxu0 0.0
  %1286 = vmatpush1.msra.mxu0 0.0
  %1287 = vmatprep.subr.mxu0 0.0
  %1288 = vmatpush1.msra.mxu0 0.0
  %1289 = vmatprep.subr.mxu0 0.0
  %1290 = vmatpush1.msra.mxu0 0.0
  %1291 = vmatprep.subr.mxu0 0.0
  %1292 = vmatpush1.msra.mxu0 0.0
  %1293 = vmatprep.subr.mxu0 0.0
  %1294 = vmatpush1.msra.mxu0 %v91
  %1295 = vmatprep.subr.mxu0 0.0
  %1296 = vmatpush1.msra.mxu0 %v90
  %1297 = vmatprep.subr.mxu0 0.0
  %1298 = vmatpush2.msra.mxu0 0.0
  %1299 = vmatprep.subr.mxu0 0.0
  %1300 = vmatpush2.msra.mxu0 0.0
  %1301 = vmatprep.subr.mxu0 0.0
  %1302 = vmatpush2.msra.mxu0 0.0
  %1303 = vmatprep.subr.mxu0 0.0
  %1304 = vmatpush2.msra.mxu0 0.0
  %1305 = vmatprep.subr.mxu0 0.0
  %1306 = vmatpush2.msra.mxu0 0.0
  %1307 = vmatprep.subr.mxu0 0.0
  %1308 = vmatpush2.msra.mxu0 0.0
  %1309 = vmatprep.subr.mxu0 0.0
  %1310 = vmatpush2.msra.mxu0 0.0
  %1311 = vmatprep.subr.mxu0 0.0
  %1312 = vmatpush2.msra.mxu0 0.0
  %1313 = vmatprep.subr.mxu0 0.0
  %1314 = vmatpush2.msra.mxu0 0.0
  %1315 = vmatprep.subr.mxu0 0.0
  %1316 = vmatpush2.msra.mxu0 0.0
  %1317 = vmatprep.subr.mxu0 0.0
  %1318 = vmatpush2.msra.mxu0 0.0
  %1319 = vmatprep.subr.mxu0 0.0
  %1320 = vmatpush2.msra.mxu0 0.0
  %1321 = vmatprep.subr.mxu0 0.0
  %1322 = vmatpush2.msra.mxu0 0.0
  %1323 = vmatprep.subr.mxu0 0.0
  %1324 = vmatpush2.msra.mxu0 0.0
  %1325 = vmatprep.subr.mxu0 0.0
  %1326 = vmatpush2.msra.mxu0 0.0
  %1327 = vmatprep.subr.mxu0 0.0
  %1328 = vmatpush2.msra.mxu0 0.0
  %1329 = vmatprep.mubr.f32.mxu0 0.0
  %1330 = vmatmul.mubr.f32.gmra.mxu0 %v1260
  %v1331 = vpop.f32.mrf.mxu0
  %v1332 = vadd.f32 0.0, %v1331
  %v1333 = vpop.f32.mrf.mxu0
  %1334 = vmatprep.mubr.f32.mxu0 0.0
  %1335 = vmatmul.mubr.f32.gmra.mxu0 %v1263
  %v1336 = vpop.f32.mrf.mxu0
  %v1337 = vadd.f32 0.0, %v1336
  %v1338 = vpop.f32.mrf.mxu0
  %1339 = vdwg.mxu0
  %1340 = vmatprep.subr.mxu0 0.0
  %1341 = vmatpush1.msra.mxu0 0.0
  %1342 = vmatprep.subr.mxu0 0.0
  %1343 = vmatpush1.msra.mxu0 0.0
  %1344 = vmatprep.subr.mxu0 0.0
  %1345 = vmatpush1.msra.mxu0 0.0
  %1346 = vmatprep.subr.mxu0 0.0
  %1347 = vmatpush1.msra.mxu0 0.0
  %1348 = vmatprep.subr.mxu0 0.0
  %1349 = vmatpush1.msra.mxu0 0.0
  %1350 = vmatprep.subr.mxu0 0.0
  %1351 = vmatpush1.msra.mxu0 0.0
  %1352 = vmatprep.subr.mxu0 0.0
  %1353 = vmatpush1.msra.mxu0 0.0
  %1354 = vmatprep.subr.mxu0 0.0
  %1355 = vmatpush1.msra.mxu0 0.0
  %1356 = vmatprep.subr.mxu0 0.0
  %1357 = vmatpush1.msra.mxu0 0.0
  %1358 = vmatprep.subr.mxu0 0.0
  %1359 = vmatpush1.msra.mxu0 0.0
  %1360 = vmatprep.subr.mxu0 0.0
  %1361 = vmatpush1.msra.mxu0 0.0
  %1362 = vmatprep.subr.mxu0 0.0
  %1363 = vmatpush1.msra.mxu0 0.0
  %1364 = vmatprep.subr.mxu0 0.0
  %1365 = vmatpush1.msra.mxu0 0.0
  %1366 = vmatprep.subr.mxu0 0.0
  %1367 = vmatpush1.msra.mxu0 0.0
  %1368 = vmatprep.subr.mxu0 0.0
  %1369 = vmatpush1.msra.mxu0 %v1337
  %1370 = vmatprep.subr.mxu0 0.0
  %1371 = vmatpush1.msra.mxu0 %v1332
  %1372 = vmatprep.subr.mxu0 0.0
  %1373 = vmatpush2.msra.mxu0 0.0
  %1374 = vmatprep.subr.mxu0 0.0
  %1375 = vmatpush2.msra.mxu0 0.0
  %1376 = vmatprep.subr.mxu0 0.0
  %1377 = vmatpush2.msra.mxu0 0.0
  %1378 = vmatprep.subr.mxu0 0.0
  %1379 = vmatpush2.msra.mxu0 0.0
  %1380 = vmatprep.subr.mxu0 0.0
  %1381 = vmatpush2.msra.mxu0 0.0
  %1382 = vmatprep.subr.mxu0 0.0
  %1383 = vmatpush2.msra.mxu0 0.0
  %1384 = vmatprep.subr.mxu0 0.0
  %1385 = vmatpush2.msra.mxu0 0.0
  %1386 = vmatprep.subr.mxu0 0.0
  %1387 = vmatpush2.msra.mxu0 0.0
  %1388 = vmatprep.subr.mxu0 0.0
  %1389 = vmatpush2.msra.mxu0 0.0
  %1390 = vmatprep.subr.mxu0 0.0
  %1391 = vmatpush2.msra.mxu0 0.0
  %1392 = vmatprep.subr.mxu0 0.0
  %1393 = vmatpush2.msra.mxu0 0.0
  %1394 = vmatprep.subr.mxu0 0.0
  %1395 = vmatpush2.msra.mxu0 0.0
  %1396 = vmatprep.subr.mxu0 0.0
  %1397 = vmatpush2.msra.mxu0 0.0
  %1398 = vmatprep.subr.mxu0 0.0
  %1399 = vmatpush2.msra.mxu0 0.0
  %1400 = vmatprep.subr.mxu0 0.0
  %1401 = vmatpush2.msra.mxu0 0.0
  %1402 = vmatprep.subr.mxu0 0.0
  %1403 = vmatpush2.msra.mxu0 0.0
  %1404 = vmatprep.mubr.f32.mxu0 0.0
  %1405 = vmatmul.mubr.f32.gmra.mxu0 %v199
  %v1406 = vpop.f32.mrf.mxu0
  %v1407 = vadd.f32 0.0, %v1406
  %v1408 = vpop.f32.mrf.mxu0
  %1409 = vmatprep.mubr.f32.mxu0 0.0
  %1410 = vmatmul.mubr.f32.gmra.mxu0 %v202
  %v1411 = vpop.f32.mrf.mxu0
  %v1412 = vadd.f32 0.0, %v1411
  %v1413 = vpop.f32.mrf.mxu0
  %1414 = vmatprep.mubr.f32.mxu0 0.0
  %1415 = vmatmul.mubr.f32.gmra.mxu0 %v205
  %v1416 = vpop.f32.mrf.mxu0
  %v1417 = vadd.f32 0.0, %v1416
  %v1418 = vpop.f32.mrf.mxu0
  %1419 = vdwg.mxu0
  %s1420 = scalar_lea.vmem %s7, 144
  %1421 = vst.msk [vmem:[%s1420] sm:$0xff] %vm116, %v1407
  %1422 = vst.msk [vmem:[%s1420 + $0x8] sm:$0xff] %vm116, %v1412
  %1423 = vst.msk [vmem:[%s1420 + $0x10] sm:$0xff] %vm116, %v1417
  %s1424 = sadd.s32 %s92, 7
  %s1425 = sld [smem:[#allocation6 + %s1424]]
  %s1426 = sld [smem:[#allocation7 + %s1424]]
  %s1427 = sadd.s32 %s56, %s1425
  %s1428 = smul.u32 %s1427, 16
  %s1429 = scalar_lea.vmem [#allocation2], %s1428
  %v1430 = vld [vmem:[%s1429] sm:$0xff]
  %v1431 = vld [vmem:[%s1429 + $0x8] sm:$0xff]
  %s1432 = sadd.s32 %s56, %s1426
  %s1433 = smul.u32 %s1432, 16
  %s1434 = scalar_lea.vmem [#allocation2], %s1433
  %v1435 = vld [vmem:[%s1434] sm:$0xff]
  %v1436 = vld [vmem:[%s1434 + $0x8] sm:$0xff]
  %v1437 = vld [vmem:[%s3 + $0x7] sm:$0x1]
  %v1438 = vsub.f32 %v1435, %v1430
  %v1439 = vsub.f32 %v1436, %v1431
  %v1440 = vlaneseq
  %v1441 = vshrl.u32 %v1440, 7
  %v1442 = vsub.s32 0, %v1441
  %v1443 = vrot.slane %v1437, %v1442
  %v1444 = vmul.f32 %v1443, %v1438
  %v1445 = vmul.f32 %v1443, %v1439
  %v1446 = vadd.f32 %v1430, %v1444
  %v1447 = vadd.f32 %v1431, %v1445
  %v1449 = vsel %vm116, %v1446, 0
  %v1452 = vsel %vm116, %v1447, 0
  %1454 = vmatprep.subr.mxu0 0.0
  %1455 = vmatpush1.msra.mxu0 0.0
  %1456 = vmatprep.subr.mxu0 0.0
  %1457 = vmatpush1.msra.mxu0 0.0
  %1458 = vmatprep.subr.mxu0 0.0
  %1459 = vmatpush1.msra.mxu0 0.0
  %1460 = vmatprep.subr.mxu0 0.0
  %1461 = vmatpush1.msra.mxu0 0.0
  %1462 = vmatprep.subr.mxu0 0.0
  %1463 = vmatpush1.msra.mxu0 0.0
  %1464 = vmatprep.subr.mxu0 0.0
  %1465 = vmatpush1.msra.mxu0 0.0
  %1466 = vmatprep.subr.mxu0 0.0
  %1467 = vmatpush1.msra.mxu0 0.0
  %1468 = vmatprep.subr.mxu0 0.0
  %1469 = vmatpush1.msra.mxu0 0.0
  %1470 = vmatprep.subr.mxu0 0.0
  %1471 = vmatpush1.msra.mxu0 0.0
  %1472 = vmatprep.subr.mxu0 0.0
  %1473 = vmatpush1.msra.mxu0 0.0
  %1474 = vmatprep.subr.mxu0 0.0
  %1475 = vmatpush1.msra.mxu0 0.0
  %1476 = vmatprep.subr.mxu0 0.0
  %1477 = vmatpush1.msra.mxu0 0.0
  %1478 = vmatprep.subr.mxu0 0.0
  %1479 = vmatpush1.msra.mxu0 0.0
  %1480 = vmatprep.subr.mxu0 0.0
  %1481 = vmatpush1.msra.mxu0 0.0
  %1482 = vmatprep.subr.mxu0 0.0
  %1483 = vmatpush1.msra.mxu0 %v91
  %1484 = vmatprep.subr.mxu0 0.0
  %1485 = vmatpush1.msra.mxu0 %v90
  %1486 = vmatprep.subr.mxu0 0.0
  %1487 = vmatpush2.msra.mxu0 0.0
  %1488 = vmatprep.subr.mxu0 0.0
  %1489 = vmatpush2.msra.mxu0 0.0
  %1490 = vmatprep.subr.mxu0 0.0
  %1491 = vmatpush2.msra.mxu0 0.0
  %1492 = vmatprep.subr.mxu0 0.0
  %1493 = vmatpush2.msra.mxu0 0.0
  %1494 = vmatprep.subr.mxu0 0.0
  %1495 = vmatpush2.msra.mxu0 0.0
  %1496 = vmatprep.subr.mxu0 0.0
  %1497 = vmatpush2.msra.mxu0 0.0
  %1498 = vmatprep.subr.mxu0 0.0
  %1499 = vmatpush2.msra.mxu0 0.0
  %1500 = vmatprep.subr.mxu0 0.0
  %1501 = vmatpush2.msra.mxu0 0.0
  %1502 = vmatprep.subr.mxu0 0.0
  %1503 = vmatpush2.msra.mxu0 0.0
  %1504 = vmatprep.subr.mxu0 0.0
  %1505 = vmatpush2.msra.mxu0 0.0
  %1506 = vmatprep.subr.mxu0 0.0
  %1507 = vmatpush2.msra.mxu0 0.0
  %1508 = vmatprep.subr.mxu0 0.0
  %1509 = vmatpush2.msra.mxu0 0.0
  %1510 = vmatprep.subr.mxu0 0.0
  %1511 = vmatpush2.msra.mxu0 0.0
  %1512 = vmatprep.subr.mxu0 0.0
  %1513 = vmatpush2.msra.mxu0 0.0
  %1514 = vmatprep.subr.mxu0 0.0
  %1515 = vmatpush2.msra.mxu0 0.0
  %1516 = vmatprep.subr.mxu0 0.0
  %1517 = vmatpush2.msra.mxu0 0.0
  %1518 = vmatprep.mubr.f32.mxu0 0.0
  %1519 = vmatmul.mubr.f32.gmra.mxu0 %v1449
  %v1520 = vpop.f32.mrf.mxu0
  %v1521 = vadd.f32 0.0, %v1520
  %v1522 = vpop.f32.mrf.mxu0
  %1523 = vmatprep.mubr.f32.mxu0 0.0
  %1524 = vmatmul.mubr.f32.gmra.mxu0 %v1452
  %v1525 = vpop.f32.mrf.mxu0
  %v1526 = vadd.f32 0.0, %v1525
  %v1527 = vpop.f32.mrf.mxu0
  %1528 = vdwg.mxu0
  %1529 = vmatprep.subr.mxu0 0.0
  %1530 = vmatpush1.msra.mxu0 0.0
  %1531 = vmatprep.subr.mxu0 0.0
  %1532 = vmatpush1.msra.mxu0 0.0
  %1533 = vmatprep.subr.mxu0 0.0
  %1534 = vmatpush1.msra.mxu0 0.0
  %1535 = vmatprep.subr.mxu0 0.0
  %1536 = vmatpush1.msra.mxu0 0.0
  %1537 = vmatprep.subr.mxu0 0.0
  %1538 = vmatpush1.msra.mxu0 0.0
  %1539 = vmatprep.subr.mxu0 0.0
  %1540 = vmatpush1.msra.mxu0 0.0
  %1541 = vmatprep.subr.mxu0 0.0
  %1542 = vmatpush1.msra.mxu0 0.0
  %1543 = vmatprep.subr.mxu0 0.0
  %1544 = vmatpush1.msra.mxu0 0.0
  %1545 = vmatprep.subr.mxu0 0.0
  %1546 = vmatpush1.msra.mxu0 0.0
  %1547 = vmatprep.subr.mxu0 0.0
  %1548 = vmatpush1.msra.mxu0 0.0
  %1549 = vmatprep.subr.mxu0 0.0
  %1550 = vmatpush1.msra.mxu0 0.0
  %1551 = vmatprep.subr.mxu0 0.0
  %1552 = vmatpush1.msra.mxu0 0.0
  %1553 = vmatprep.subr.mxu0 0.0
  %1554 = vmatpush1.msra.mxu0 0.0
  %1555 = vmatprep.subr.mxu0 0.0
  %1556 = vmatpush1.msra.mxu0 0.0
  %1557 = vmatprep.subr.mxu0 0.0
  %1558 = vmatpush1.msra.mxu0 %v1526
  %1559 = vmatprep.subr.mxu0 0.0
  %1560 = vmatpush1.msra.mxu0 %v1521
  %1561 = vmatprep.subr.mxu0 0.0
  %1562 = vmatpush2.msra.mxu0 0.0
  %1563 = vmatprep.subr.mxu0 0.0
  %1564 = vmatpush2.msra.mxu0 0.0
  %1565 = vmatprep.subr.mxu0 0.0
  %1566 = vmatpush2.msra.mxu0 0.0
  %1567 = vmatprep.subr.mxu0 0.0
  %1568 = vmatpush2.msra.mxu0 0.0
  %1569 = vmatprep.subr.mxu0 0.0
  %1570 = vmatpush2.msra.mxu0 0.0
  %1571 = vmatprep.subr.mxu0 0.0
  %1572 = vmatpush2.msra.mxu0 0.0
  %1573 = vmatprep.subr.mxu0 0.0
  %1574 = vmatpush2.msra.mxu0 0.0
  %1575 = vmatprep.subr.mxu0 0.0
  %1576 = vmatpush2.msra.mxu0 0.0
  %1577 = vmatprep.subr.mxu0 0.0
  %1578 = vmatpush2.msra.mxu0 0.0
  %1579 = vmatprep.subr.mxu0 0.0
  %1580 = vmatpush2.msra.mxu0 0.0
  %1581 = vmatprep.subr.mxu0 0.0
  %1582 = vmatpush2.msra.mxu0 0.0
  %1583 = vmatprep.subr.mxu0 0.0
  %1584 = vmatpush2.msra.mxu0 0.0
  %1585 = vmatprep.subr.mxu0 0.0
  %1586 = vmatpush2.msra.mxu0 0.0
  %1587 = vmatprep.subr.mxu0 0.0
  %1588 = vmatpush2.msra.mxu0 0.0
  %1589 = vmatprep.subr.mxu0 0.0
  %1590 = vmatpush2.msra.mxu0 0.0
  %1591 = vmatprep.subr.mxu0 0.0
  %1592 = vmatpush2.msra.mxu0 0.0
  %1593 = vmatprep.mubr.f32.mxu0 0.0
  %1594 = vmatmul.mubr.f32.gmra.mxu0 %v199
  %v1595 = vpop.f32.mrf.mxu0
  %v1596 = vadd.f32 0.0, %v1595
  %v1597 = vpop.f32.mrf.mxu0
  %1598 = vmatprep.mubr.f32.mxu0 0.0
  %1599 = vmatmul.mubr.f32.gmra.mxu0 %v202
  %v1600 = vpop.f32.mrf.mxu0
  %v1601 = vadd.f32 0.0, %v1600
  %v1602 = vpop.f32.mrf.mxu0
  %1603 = vmatprep.mubr.f32.mxu0 0.0
  %1604 = vmatmul.mubr.f32.gmra.mxu0 %v205
  %v1605 = vpop.f32.mrf.mxu0
  %v1606 = vadd.f32 0.0, %v1605
  %v1607 = vpop.f32.mrf.mxu0
  %1608 = vdwg.mxu0
  %s1609 = scalar_lea.vmem %s7, 168
  %1610 = vst.msk [vmem:[%s1609] sm:$0xff] %vm116, %v1596
  %1611 = vst.msk [vmem:[%s1609 + $0x8] sm:$0xff] %vm116, %v1601
  %1612 = vst.msk [vmem:[%s1609 + $0x10] sm:$0xff] %vm116, %v1606
  %s1613 = sadd.s32 %s92, 8
  %s1614 = sld [smem:[#allocation6 + %s1613]]
  %s1615 = sld [smem:[#allocation7 + %s1613]]
  %s1616 = sadd.s32 %s56, %s1614
  %s1617 = smul.u32 %s1616, 16
  %s1618 = scalar_lea.vmem [#allocation2], %s1617
  %v1619 = vld [vmem:[%s1618] sm:$0xff]
  %v1620 = vld [vmem:[%s1618 + $0x8] sm:$0xff]
  %s1621 = sadd.s32 %s56, %s1615
  %s1622 = smul.u32 %s1621, 16
  %s1623 = scalar_lea.vmem [#allocation2], %s1622
  %v1624 = vld [vmem:[%s1623] sm:$0xff]
  %v1625 = vld [vmem:[%s1623 + $0x8] sm:$0xff]
  %v1626 = vld [vmem:[%s3 + $0x8] sm:$0x1]
  %v1627 = vsub.f32 %v1624, %v1619
  %v1628 = vsub.f32 %v1625, %v1620
  %v1629 = vlaneseq
  %v1630 = vshrl.u32 %v1629, 7
  %v1631 = vsub.s32 0, %v1630
  %v1632 = vrot.slane %v1626, %v1631
  %v1633 = vmul.f32 %v1632, %v1627
  %v1634 = vmul.f32 %v1632, %v1628
  %v1635 = vadd.f32 %v1619, %v1633
  %v1636 = vadd.f32 %v1620, %v1634
  %v1638 = vsel %vm116, %v1635, 0
  %v1641 = vsel %vm116, %v1636, 0
  %1643 = vmatprep.subr.mxu0 0.0
  %1644 = vmatpush1.msra.mxu0 0.0
  %1645 = vmatprep.subr.mxu0 0.0
  %1646 = vmatpush1.msra.mxu0 0.0
  %1647 = vmatprep.subr.mxu0 0.0
  %1648 = vmatpush1.msra.mxu0 0.0
  %1649 = vmatprep.subr.mxu0 0.0
  %1650 = vmatpush1.msra.mxu0 0.0
  %1651 = vmatprep.subr.mxu0 0.0
  %1652 = vmatpush1.msra.mxu0 0.0
  %1653 = vmatprep.subr.mxu0 0.0
  %1654 = vmatpush1.msra.mxu0 0.0
  %1655 = vmatprep.subr.mxu0 0.0
  %1656 = vmatpush1.msra.mxu0 0.0
  %1657 = vmatprep.subr.mxu0 0.0
  %1658 = vmatpush1.msra.mxu0 0.0
  %1659 = vmatprep.subr.mxu0 0.0
  %1660 = vmatpush1.msra.mxu0 0.0
  %1661 = vmatprep.subr.mxu0 0.0
  %1662 = vmatpush1.msra.mxu0 0.0
  %1663 = vmatprep.subr.mxu0 0.0
  %1664 = vmatpush1.msra.mxu0 0.0
  %1665 = vmatprep.subr.mxu0 0.0
  %1666 = vmatpush1.msra.mxu0 0.0
  %1667 = vmatprep.subr.mxu0 0.0
  %1668 = vmatpush1.msra.mxu0 0.0
  %1669 = vmatprep.subr.mxu0 0.0
  %1670 = vmatpush1.msra.mxu0 0.0
  %1671 = vmatprep.subr.mxu0 0.0
  %1672 = vmatpush1.msra.mxu0 %v91
  %1673 = vmatprep.subr.mxu0 0.0
  %1674 = vmatpush1.msra.mxu0 %v90
  %1675 = vmatprep.subr.mxu0 0.0
  %1676 = vmatpush2.msra.mxu0 0.0
  %1677 = vmatprep.subr.mxu0 0.0
  %1678 = vmatpush2.msra.mxu0 0.0
  %1679 = vmatprep.subr.mxu0 0.0
  %1680 = vmatpush2.msra.mxu0 0.0
  %1681 = vmatprep.subr.mxu0 0.0
  %1682 = vmatpush2.msra.mxu0 0.0
  %1683 = vmatprep.subr.mxu0 0.0
  %1684 = vmatpush2.msra.mxu0 0.0
  %1685 = vmatprep.subr.mxu0 0.0
  %1686 = vmatpush2.msra.mxu0 0.0
  %1687 = vmatprep.subr.mxu0 0.0
  %1688 = vmatpush2.msra.mxu0 0.0
  %1689 = vmatprep.subr.mxu0 0.0
  %1690 = vmatpush2.msra.mxu0 0.0
  %1691 = vmatprep.subr.mxu0 0.0
  %1692 = vmatpush2.msra.mxu0 0.0
  %1693 = vmatprep.subr.mxu0 0.0
  %1694 = vmatpush2.msra.mxu0 0.0
  %1695 = vmatprep.subr.mxu0 0.0
  %1696 = vmatpush2.msra.mxu0 0.0
  %1697 = vmatprep.subr.mxu0 0.0
  %1698 = vmatpush2.msra.mxu0 0.0
  %1699 = vmatprep.subr.mxu0 0.0
  %1700 = vmatpush2.msra.mxu0 0.0
  %1701 = vmatprep.subr.mxu0 0.0
  %1702 = vmatpush2.msra.mxu0 0.0
  %1703 = vmatprep.subr.mxu0 0.0
  %1704 = vmatpush2.msra.mxu0 0.0
  %1705 = vmatprep.subr.mxu0 0.0
  %1706 = vmatpush2.msra.mxu0 0.0
  %1707 = vmatprep.mubr.f32.mxu0 0.0
  %1708 = vmatmul.mubr.f32.gmra.mxu0 %v1638
  %v1709 = vpop.f32.mrf.mxu0
  %v1710 = vadd.f32 0.0, %v1709
  %v1711 = vpop.f32.mrf.mxu0
  %1712 = vmatprep.mubr.f32.mxu0 0.0
  %1713 = vmatmul.mubr.f32.gmra.mxu0 %v1641
  %v1714 = vpop.f32.mrf.mxu0
  %v1715 = vadd.f32 0.0, %v1714
  %v1716 = vpop.f32.mrf.mxu0
  %1717 = vdwg.mxu0
  %1718 = vmatprep.subr.mxu0 0.0
  %1719 = vmatpush1.msra.mxu0 0.0
  %1720 = vmatprep.subr.mxu0 0.0
  %1721 = vmatpush1.msra.mxu0 0.0
  %1722 = vmatprep.subr.mxu0 0.0
  %1723 = vmatpush1.msra.mxu0 0.0
  %1724 = vmatprep.subr.mxu0 0.0
  %1725 = vmatpush1.msra.mxu0 0.0
  %1726 = vmatprep.subr.mxu0 0.0
  %1727 = vmatpush1.msra.mxu0 0.0
  %1728 = vmatprep.subr.mxu0 0.0
  %1729 = vmatpush1.msra.mxu0 0.0
  %1730 = vmatprep.subr.mxu0 0.0
  %1731 = vmatpush1.msra.mxu0 0.0
  %1732 = vmatprep.subr.mxu0 0.0
  %1733 = vmatpush1.msra.mxu0 0.0
  %1734 = vmatprep.subr.mxu0 0.0
  %1735 = vmatpush1.msra.mxu0 0.0
  %1736 = vmatprep.subr.mxu0 0.0
  %1737 = vmatpush1.msra.mxu0 0.0
  %1738 = vmatprep.subr.mxu0 0.0
  %1739 = vmatpush1.msra.mxu0 0.0
  %1740 = vmatprep.subr.mxu0 0.0
  %1741 = vmatpush1.msra.mxu0 0.0
  %1742 = vmatprep.subr.mxu0 0.0
  %1743 = vmatpush1.msra.mxu0 0.0
  %1744 = vmatprep.subr.mxu0 0.0
  %1745 = vmatpush1.msra.mxu0 0.0
  %1746 = vmatprep.subr.mxu0 0.0
  %1747 = vmatpush1.msra.mxu0 %v1715
  %1748 = vmatprep.subr.mxu0 0.0
  %1749 = vmatpush1.msra.mxu0 %v1710
  %1750 = vmatprep.subr.mxu0 0.0
  %1751 = vmatpush2.msra.mxu0 0.0
  %1752 = vmatprep.subr.mxu0 0.0
  %1753 = vmatpush2.msra.mxu0 0.0
  %1754 = vmatprep.subr.mxu0 0.0
  %1755 = vmatpush2.msra.mxu0 0.0
  %1756 = vmatprep.subr.mxu0 0.0
  %1757 = vmatpush2.msra.mxu0 0.0
  %1758 = vmatprep.subr.mxu0 0.0
  %1759 = vmatpush2.msra.mxu0 0.0
  %1760 = vmatprep.subr.mxu0 0.0
  %1761 = vmatpush2.msra.mxu0 0.0
  %1762 = vmatprep.subr.mxu0 0.0
  %1763 = vmatpush2.msra.mxu0 0.0
  %1764 = vmatprep.subr.mxu0 0.0
  %1765 = vmatpush2.msra.mxu0 0.0
  %1766 = vmatprep.subr.mxu0 0.0
  %1767 = vmatpush2.msra.mxu0 0.0
  %1768 = vmatprep.subr.mxu0 0.0
  %1769 = vmatpush2.msra.mxu0 0.0
  %1770 = vmatprep.subr.mxu0 0.0
  %1771 = vmatpush2.msra.mxu0 0.0
  %1772 = vmatprep.subr.mxu0 0.0
  %1773 = vmatpush2.msra.mxu0 0.0
  %1774 = vmatprep.subr.mxu0 0.0
  %1775 = vmatpush2.msra.mxu0 0.0
  %1776 = vmatprep.subr.mxu0 0.0
  %1777 = vmatpush2.msra.mxu0 0.0
  %1778 = vmatprep.subr.mxu0 0.0
  %1779 = vmatpush2.msra.mxu0 0.0
  %1780 = vmatprep.subr.mxu0 0.0
  %1781 = vmatpush2.msra.mxu0 0.0
  %1782 = vmatprep.mubr.f32.mxu0 0.0
  %1783 = vmatmul.mubr.f32.gmra.mxu0 %v199
  %v1784 = vpop.f32.mrf.mxu0
  %v1785 = vadd.f32 0.0, %v1784
  %v1786 = vpop.f32.mrf.mxu0
  %1787 = vmatprep.mubr.f32.mxu0 0.0
  %1788 = vmatmul.mubr.f32.gmra.mxu0 %v202
  %v1789 = vpop.f32.mrf.mxu0
  %v1790 = vadd.f32 0.0, %v1789
  %v1791 = vpop.f32.mrf.mxu0
  %1792 = vmatprep.mubr.f32.mxu0 0.0
  %1793 = vmatmul.mubr.f32.gmra.mxu0 %v205
  %v1794 = vpop.f32.mrf.mxu0
  %v1795 = vadd.f32 0.0, %v1794
  %v1796 = vpop.f32.mrf.mxu0
  %1797 = vdwg.mxu0
  %s1798 = scalar_lea.vmem %s7, 192
  %1799 = vst.msk [vmem:[%s1798] sm:$0xff] %vm116, %v1785
  %1800 = vst.msk [vmem:[%s1798 + $0x8] sm:$0xff] %vm116, %v1790
  %1801 = vst.msk [vmem:[%s1798 + $0x10] sm:$0xff] %vm116, %v1795
  %s1802 = sadd.s32 %s92, 9
  %s1803 = sld [smem:[#allocation6 + %s1802]]
  %s1804 = sld [smem:[#allocation7 + %s1802]]
  %s1805 = sadd.s32 %s56, %s1803
  %s1806 = smul.u32 %s1805, 16
  %s1807 = scalar_lea.vmem [#allocation2], %s1806
  %v1808 = vld [vmem:[%s1807] sm:$0xff]
  %v1809 = vld [vmem:[%s1807 + $0x8] sm:$0xff]
  %s1810 = sadd.s32 %s56, %s1804
  %s1811 = smul.u32 %s1810, 16
  %s1812 = scalar_lea.vmem [#allocation2], %s1811
  %v1813 = vld [vmem:[%s1812] sm:$0xff]
  %v1814 = vld [vmem:[%s1812 + $0x8] sm:$0xff]
  %v1815 = vld [vmem:[%s3 + $0x9] sm:$0x1]
  %v1816 = vsub.f32 %v1813, %v1808
  %v1817 = vsub.f32 %v1814, %v1809
  %v1818 = vlaneseq
  %v1819 = vshrl.u32 %v1818, 7
  %v1820 = vsub.s32 0, %v1819
  %v1821 = vrot.slane %v1815, %v1820
  %v1822 = vmul.f32 %v1821, %v1816
  %v1823 = vmul.f32 %v1821, %v1817
  %v1824 = vadd.f32 %v1808, %v1822
  %v1825 = vadd.f32 %v1809, %v1823
  %v1827 = vsel %vm116, %v1824, 0
  %v1830 = vsel %vm116, %v1825, 0
  %1832 = vmatprep.subr.mxu0 0.0
  %1833 = vmatpush1.msra.mxu0 0.0
  %1834 = vmatprep.subr.mxu0 0.0
  %1835 = vmatpush1.msra.mxu0 0.0
  %1836 = vmatprep.subr.mxu0 0.0
  %1837 = vmatpush1.msra.mxu0 0.0
  %1838 = vmatprep.subr.mxu0 0.0
  %1839 = vmatpush1.msra.mxu0 0.0
  %1840 = vmatprep.subr.mxu0 0.0
  %1841 = vmatpush1.msra.mxu0 0.0
  %1842 = vmatprep.subr.mxu0 0.0
  %1843 = vmatpush1.msra.mxu0 0.0
  %1844 = vmatprep.subr.mxu0 0.0
  %1845 = vmatpush1.msra.mxu0 0.0
  %1846 = vmatprep.subr.mxu0 0.0
  %1847 = vmatpush1.msra.mxu0 0.0
  %1848 = vmatprep.subr.mxu0 0.0
  %1849 = vmatpush1.msra.mxu0 0.0
  %1850 = vmatprep.subr.mxu0 0.0
  %1851 = vmatpush1.msra.mxu0 0.0
  %1852 = vmatprep.subr.mxu0 0.0
  %1853 = vmatpush1.msra.mxu0 0.0
  %1854 = vmatprep.subr.mxu0 0.0
  %1855 = vmatpush1.msra.mxu0 0.0
  %1856 = vmatprep.subr.mxu0 0.0
  %1857 = vmatpush1.msra.mxu0 0.0
  %1858 = vmatprep.subr.mxu0 0.0
  %1859 = vmatpush1.msra.mxu0 0.0
  %1860 = vmatprep.subr.mxu0 0.0
  %1861 = vmatpush1.msra.mxu0 %v91
  %1862 = vmatprep.subr.mxu0 0.0
  %1863 = vmatpush1.msra.mxu0 %v90
  %1864 = vmatprep.subr.mxu0 0.0
  %1865 = vmatpush2.msra.mxu0 0.0
  %1866 = vmatprep.subr.mxu0 0.0
  %1867 = vmatpush2.msra.mxu0 0.0
  %1868 = vmatprep.subr.mxu0 0.0
  %1869 = vmatpush2.msra.mxu0 0.0
  %1870 = vmatprep.subr.mxu0 0.0
  %1871 = vmatpush2.msra.mxu0 0.0
  %1872 = vmatprep.subr.mxu0 0.0
  %1873 = vmatpush2.msra.mxu0 0.0
  %1874 = vmatprep.subr.mxu0 0.0
  %1875 = vmatpush2.msra.mxu0 0.0
  %1876 = vmatprep.subr.mxu0 0.0
  %1877 = vmatpush2.msra.mxu0 0.0
  %1878 = vmatprep.subr.mxu0 0.0
  %1879 = vmatpush2.msra.mxu0 0.0
  %1880 = vmatprep.subr.mxu0 0.0
  %1881 = vmatpush2.msra.mxu0 0.0
  %1882 = vmatprep.subr.mxu0 0.0
  %1883 = vmatpush2.msra.mxu0 0.0
  %1884 = vmatprep.subr.mxu0 0.0
  %1885 = vmatpush2.msra.mxu0 0.0
  %1886 = vmatprep.subr.mxu0 0.0
  %1887 = vmatpush2.msra.mxu0 0.0
  %1888 = vmatprep.subr.mxu0 0.0
  %1889 = vmatpush2.msra.mxu0 0.0
  %1890 = vmatprep.subr.mxu0 0.0
  %1891 = vmatpush2.msra.mxu0 0.0
  %1892 = vmatprep.subr.mxu0 0.0
  %1893 = vmatpush2.msra.mxu0 0.0
  %1894 = vmatprep.subr.mxu0 0.0
  %1895 = vmatpush2.msra.mxu0 0.0
  %1896 = vmatprep.mubr.f32.mxu0 0.0
  %1897 = vmatmul.mubr.f32.gmra.mxu0 %v1827
  %v1898 = vpop.f32.mrf.mxu0
  %v1899 = vadd.f32 0.0, %v1898
  %v1900 = vpop.f32.mrf.mxu0
  %1901 = vmatprep.mubr.f32.mxu0 0.0
  %1902 = vmatmul.mubr.f32.gmra.mxu0 %v1830
  %v1903 = vpop.f32.mrf.mxu0
  %v1904 = vadd.f32 0.0, %v1903
  %v1905 = vpop.f32.mrf.mxu0
  %1906 = vdwg.mxu0
  %1907 = vmatprep.subr.mxu0 0.0
  %1908 = vmatpush1.msra.mxu0 0.0
  %1909 = vmatprep.subr.mxu0 0.0
  %1910 = vmatpush1.msra.mxu0 0.0
  %1911 = vmatprep.subr.mxu0 0.0
  %1912 = vmatpush1.msra.mxu0 0.0
  %1913 = vmatprep.subr.mxu0 0.0
  %1914 = vmatpush1.msra.mxu0 0.0
  %1915 = vmatprep.subr.mxu0 0.0
  %1916 = vmatpush1.msra.mxu0 0.0
  %1917 = vmatprep.subr.mxu0 0.0
  %1918 = vmatpush1.msra.mxu0 0.0
  %1919 = vmatprep.subr.mxu0 0.0
  %1920 = vmatpush1.msra.mxu0 0.0
  %1921 = vmatprep.subr.mxu0 0.0
  %1922 = vmatpush1.msra.mxu0 0.0
  %1923 = vmatprep.subr.mxu0 0.0
  %1924 = vmatpush1.msra.mxu0 0.0
  %1925 = vmatprep.subr.mxu0 0.0
  %1926 = vmatpush1.msra.mxu0 0.0
  %1927 = vmatprep.subr.mxu0 0.0
  %1928 = vmatpush1.msra.mxu0 0.0
  %1929 = vmatprep.subr.mxu0 0.0
  %1930 = vmatpush1.msra.mxu0 0.0
  %1931 = vmatprep.subr.mxu0 0.0
  %1932 = vmatpush1.msra.mxu0 0.0
  %1933 = vmatprep.subr.mxu0 0.0
  %1934 = vmatpush1.msra.mxu0 0.0
  %1935 = vmatprep.subr.mxu0 0.0
  %1936 = vmatpush1.msra.mxu0 %v1904
  %1937 = vmatprep.subr.mxu0 0.0
  %1938 = vmatpush1.msra.mxu0 %v1899
  %1939 = vmatprep.subr.mxu0 0.0
  %1940 = vmatpush2.msra.mxu0 0.0
  %1941 = vmatprep.subr.mxu0 0.0
  %1942 = vmatpush2.msra.mxu0 0.0
  %1943 = vmatprep.subr.mxu0 0.0
  %1944 = vmatpush2.msra.mxu0 0.0
  %1945 = vmatprep.subr.mxu0 0.0
  %1946 = vmatpush2.msra.mxu0 0.0
  %1947 = vmatprep.subr.mxu0 0.0
  %1948 = vmatpush2.msra.mxu0 0.0
  %1949 = vmatprep.subr.mxu0 0.0
  %1950 = vmatpush2.msra.mxu0 0.0
  %1951 = vmatprep.subr.mxu0 0.0
  %1952 = vmatpush2.msra.mxu0 0.0
  %1953 = vmatprep.subr.mxu0 0.0
  %1954 = vmatpush2.msra.mxu0 0.0
  %1955 = vmatprep.subr.mxu0 0.0
  %1956 = vmatpush2.msra.mxu0 0.0
  %1957 = vmatprep.subr.mxu0 0.0
  %1958 = vmatpush2.msra.mxu0 0.0
  %1959 = vmatprep.subr.mxu0 0.0
  %1960 = vmatpush2.msra.mxu0 0.0
  %1961 = vmatprep.subr.mxu0 0.0
  %1962 = vmatpush2.msra.mxu0 0.0
  %1963 = vmatprep.subr.mxu0 0.0
  %1964 = vmatpush2.msra.mxu0 0.0
  %1965 = vmatprep.subr.mxu0 0.0
  %1966 = vmatpush2.msra.mxu0 0.0
  %1967 = vmatprep.subr.mxu0 0.0
  %1968 = vmatpush2.msra.mxu0 0.0
  %1969 = vmatprep.subr.mxu0 0.0
  %1970 = vmatpush2.msra.mxu0 0.0
  %1971 = vmatprep.mubr.f32.mxu0 0.0
  %1972 = vmatmul.mubr.f32.gmra.mxu0 %v199
  %v1973 = vpop.f32.mrf.mxu0
  %v1974 = vadd.f32 0.0, %v1973
  %v1975 = vpop.f32.mrf.mxu0
  %1976 = vmatprep.mubr.f32.mxu0 0.0
  %1977 = vmatmul.mubr.f32.gmra.mxu0 %v202
  %v1978 = vpop.f32.mrf.mxu0
  %v1979 = vadd.f32 0.0, %v1978
  %v1980 = vpop.f32.mrf.mxu0
  %1981 = vmatprep.mubr.f32.mxu0 0.0
  %1982 = vmatmul.mubr.f32.gmra.mxu0 %v205
  %v1983 = vpop.f32.mrf.mxu0
  %v1984 = vadd.f32 0.0, %v1983
  %v1985 = vpop.f32.mrf.mxu0
  %1986 = vdwg.mxu0
  %s1987 = scalar_lea.vmem %s7, 216
  %1988 = vst.msk [vmem:[%s1987] sm:$0xff] %vm116, %v1974
  %1989 = vst.msk [vmem:[%s1987 + $0x8] sm:$0xff] %vm116, %v1979
  %1990 = vst.msk [vmem:[%s1987 + $0x10] sm:$0xff] %vm116, %v1984
  %s1991 = sadd.s32 %s92, 10
  %s1992 = sld [smem:[#allocation6 + %s1991]]
  %s1993 = sld [smem:[#allocation7 + %s1991]]
  %s1994 = sadd.s32 %s56, %s1992
  %s1995 = smul.u32 %s1994, 16
  %s1996 = scalar_lea.vmem [#allocation2], %s1995
  %v1997 = vld [vmem:[%s1996] sm:$0xff]
  %v1998 = vld [vmem:[%s1996 + $0x8] sm:$0xff]
  %s1999 = sadd.s32 %s56, %s1993
  %s2000 = smul.u32 %s1999, 16
  %s2001 = scalar_lea.vmem [#allocation2], %s2000
  %v2002 = vld [vmem:[%s2001] sm:$0xff]
  %v2003 = vld [vmem:[%s2001 + $0x8] sm:$0xff]
  %v2004 = vld [vmem:[%s3 + $0xa] sm:$0x1]
  %v2005 = vsub.f32 %v2002, %v1997
  %v2006 = vsub.f32 %v2003, %v1998
  %v2007 = vlaneseq
  %v2008 = vshrl.u32 %v2007, 7
  %v2009 = vsub.s32 0, %v2008
  %v2010 = vrot.slane %v2004, %v2009
  %v2011 = vmul.f32 %v2010, %v2005
  %v2012 = vmul.f32 %v2010, %v2006
  %v2013 = vadd.f32 %v1997, %v2011
  %v2014 = vadd.f32 %v1998, %v2012
  %v2016 = vsel %vm116, %v2013, 0
  %v2019 = vsel %vm116, %v2014, 0
  %2021 = vmatprep.subr.mxu0 0.0
  %2022 = vmatpush1.msra.mxu0 0.0
  %2023 = vmatprep.subr.mxu0 0.0
  %2024 = vmatpush1.msra.mxu0 0.0
  %2025 = vmatprep.subr.mxu0 0.0
  %2026 = vmatpush1.msra.mxu0 0.0
  %2027 = vmatprep.subr.mxu0 0.0
  %2028 = vmatpush1.msra.mxu0 0.0
  %2029 = vmatprep.subr.mxu0 0.0
  %2030 = vmatpush1.msra.mxu0 0.0
  %2031 = vmatprep.subr.mxu0 0.0
  %2032 = vmatpush1.msra.mxu0 0.0
  %2033 = vmatprep.subr.mxu0 0.0
  %2034 = vmatpush1.msra.mxu0 0.0
  %2035 = vmatprep.subr.mxu0 0.0
  %2036 = vmatpush1.msra.mxu0 0.0
  %2037 = vmatprep.subr.mxu0 0.0
  %2038 = vmatpush1.msra.mxu0 0.0
  %2039 = vmatprep.subr.mxu0 0.0
  %2040 = vmatpush1.msra.mxu0 0.0
  %2041 = vmatprep.subr.mxu0 0.0
  %2042 = vmatpush1.msra.mxu0 0.0
  %2043 = vmatprep.subr.mxu0 0.0
  %2044 = vmatpush1.msra.mxu0 0.0
  %2045 = vmatprep.subr.mxu0 0.0
  %2046 = vmatpush1.msra.mxu0 0.0
  %2047 = vmatprep.subr.mxu0 0.0
  %2048 = vmatpush1.msra.mxu0 0.0
  %2049 = vmatprep.subr.mxu0 0.0
  %2050 = vmatpush1.msra.mxu0 %v91
  %2051 = vmatprep.subr.mxu0 0.0
  %2052 = vmatpush1.msra.mxu0 %v90
  %2053 = vmatprep.subr.mxu0 0.0
  %2054 = vmatpush2.msra.mxu0 0.0
  %2055 = vmatprep.subr.mxu0 0.0
  %2056 = vmatpush2.msra.mxu0 0.0
  %2057 = vmatprep.subr.mxu0 0.0
  %2058 = vmatpush2.msra.mxu0 0.0
  %2059 = vmatprep.subr.mxu0 0.0
  %2060 = vmatpush2.msra.mxu0 0.0
  %2061 = vmatprep.subr.mxu0 0.0
  %2062 = vmatpush2.msra.mxu0 0.0
  %2063 = vmatprep.subr.mxu0 0.0
  %2064 = vmatpush2.msra.mxu0 0.0
  %2065 = vmatprep.subr.mxu0 0.0
  %2066 = vmatpush2.msra.mxu0 0.0
  %2067 = vmatprep.subr.mxu0 0.0
  %2068 = vmatpush2.msra.mxu0 0.0
  %2069 = vmatprep.subr.mxu0 0.0
  %2070 = vmatpush2.msra.mxu0 0.0
  %2071 = vmatprep.subr.mxu0 0.0
  %2072 = vmatpush2.msra.mxu0 0.0
  %2073 = vmatprep.subr.mxu0 0.0
  %2074 = vmatpush2.msra.mxu0 0.0
  %2075 = vmatprep.subr.mxu0 0.0
  %2076 = vmatpush2.msra.mxu0 0.0
  %2077 = vmatprep.subr.mxu0 0.0
  %2078 = vmatpush2.msra.mxu0 0.0
  %2079 = vmatprep.subr.mxu0 0.0
  %2080 = vmatpush2.msra.mxu0 0.0
  %2081 = vmatprep.subr.mxu0 0.0
  %2082 = vmatpush2.msra.mxu0 0.0
  %2083 = vmatprep.subr.mxu0 0.0
  %2084 = vmatpush2.msra.mxu0 0.0
  %2085 = vmatprep.mubr.f32.mxu0 0.0
  %2086 = vmatmul.mubr.f32.gmra.mxu0 %v2016
  %v2087 = vpop.f32.mrf.mxu0
  %v2088 = vadd.f32 0.0, %v2087
  %v2089 = vpop.f32.mrf.mxu0
  %2090 = vmatprep.mubr.f32.mxu0 0.0
  %2091 = vmatmul.mubr.f32.gmra.mxu0 %v2019
  %v2092 = vpop.f32.mrf.mxu0
  %v2093 = vadd.f32 0.0, %v2092
  %v2094 = vpop.f32.mrf.mxu0
  %2095 = vdwg.mxu0
  %2096 = vmatprep.subr.mxu0 0.0
  %2097 = vmatpush1.msra.mxu0 0.0
  %2098 = vmatprep.subr.mxu0 0.0
  %2099 = vmatpush1.msra.mxu0 0.0
  %2100 = vmatprep.subr.mxu0 0.0
  %2101 = vmatpush1.msra.mxu0 0.0
  %2102 = vmatprep.subr.mxu0 0.0
  %2103 = vmatpush1.msra.mxu0 0.0
  %2104 = vmatprep.subr.mxu0 0.0
  %2105 = vmatpush1.msra.mxu0 0.0
  %2106 = vmatprep.subr.mxu0 0.0
  %2107 = vmatpush1.msra.mxu0 0.0
  %2108 = vmatprep.subr.mxu0 0.0
  %2109 = vmatpush1.msra.mxu0 0.0
  %2110 = vmatprep.subr.mxu0 0.0
  %2111 = vmatpush1.msra.mxu0 0.0
  %2112 = vmatprep.subr.mxu0 0.0
  %2113 = vmatpush1.msra.mxu0 0.0
  %2114 = vmatprep.subr.mxu0 0.0
  %2115 = vmatpush1.msra.mxu0 0.0
  %2116 = vmatprep.subr.mxu0 0.0
  %2117 = vmatpush1.msra.mxu0 0.0
  %2118 = vmatprep.subr.mxu0 0.0
  %2119 = vmatpush1.msra.mxu0 0.0
  %2120 = vmatprep.subr.mxu0 0.0
  %2121 = vmatpush1.msra.mxu0 0.0
  %2122 = vmatprep.subr.mxu0 0.0
  %2123 = vmatpush1.msra.mxu0 0.0
  %2124 = vmatprep.subr.mxu0 0.0
  %2125 = vmatpush1.msra.mxu0 %v2093
  %2126 = vmatprep.subr.mxu0 0.0
  %2127 = vmatpush1.msra.mxu0 %v2088
  %2128 = vmatprep.subr.mxu0 0.0
  %2129 = vmatpush2.msra.mxu0 0.0
  %2130 = vmatprep.subr.mxu0 0.0
  %2131 = vmatpush2.msra.mxu0 0.0
  %2132 = vmatprep.subr.mxu0 0.0
  %2133 = vmatpush2.msra.mxu0 0.0
  %2134 = vmatprep.subr.mxu0 0.0
  %2135 = vmatpush2.msra.mxu0 0.0
  %2136 = vmatprep.subr.mxu0 0.0
  %2137 = vmatpush2.msra.mxu0 0.0
  %2138 = vmatprep.subr.mxu0 0.0
  %2139 = vmatpush2.msra.mxu0 0.0
  %2140 = vmatprep.subr.mxu0 0.0
  %2141 = vmatpush2.msra.mxu0 0.0
  %2142 = vmatprep.subr.mxu0 0.0
  %2143 = vmatpush2.msra.mxu0 0.0
  %2144 = vmatprep.subr.mxu0 0.0
  %2145 = vmatpush2.msra.mxu0 0.0
  %2146 = vmatprep.subr.mxu0 0.0
  %2147 = vmatpush2.msra.mxu0 0.0
  %2148 = vmatprep.subr.mxu0 0.0
  %2149 = vmatpush2.msra.mxu0 0.0
  %2150 = vmatprep.subr.mxu0 0.0
  %2151 = vmatpush2.msra.mxu0 0.0
  %2152 = vmatprep.subr.mxu0 0.0
  %2153 = vmatpush2.msra.mxu0 0.0
  %2154 = vmatprep.subr.mxu0 0.0
  %2155 = vmatpush2.msra.mxu0 0.0
  %2156 = vmatprep.subr.mxu0 0.0
  %2157 = vmatpush2.msra.mxu0 0.0
  %2158 = vmatprep.subr.mxu0 0.0
  %2159 = vmatpush2.msra.mxu0 0.0
  %2160 = vmatprep.mubr.f32.mxu0 0.0
  %2161 = vmatmul.mubr.f32.gmra.mxu0 %v199
  %v2162 = vpop.f32.mrf.mxu0
  %v2163 = vadd.f32 0.0, %v2162
  %v2164 = vpop.f32.mrf.mxu0
  %2165 = vmatprep.mubr.f32.mxu0 0.0
  %2166 = vmatmul.mubr.f32.gmra.mxu0 %v202
  %v2167 = vpop.f32.mrf.mxu0
  %v2168 = vadd.f32 0.0, %v2167
  %v2169 = vpop.f32.mrf.mxu0
  %2170 = vmatprep.mubr.f32.mxu0 0.0
  %2171 = vmatmul.mubr.f32.gmra.mxu0 %v205
  %v2172 = vpop.f32.mrf.mxu0
  %v2173 = vadd.f32 0.0, %v2172
  %v2174 = vpop.f32.mrf.mxu0
  %2175 = vdwg.mxu0
  %s2176 = scalar_lea.vmem %s7, 240
  %2177 = vst.msk [vmem:[%s2176] sm:$0xff] %vm116, %v2163
  %2178 = vst.msk [vmem:[%s2176 + $0x8] sm:$0xff] %vm116, %v2168
  %2179 = vst.msk [vmem:[%s2176 + $0x10] sm:$0xff] %vm116, %v2173
  %s2180 = sadd.s32 %s92, 11
  %s2181 = sld [smem:[#allocation6 + %s2180]]
  %s2182 = sld [smem:[#allocation7 + %s2180]]
  %s2183 = sadd.s32 %s56, %s2181
  %s2184 = smul.u32 %s2183, 16
  %s2185 = scalar_lea.vmem [#allocation2], %s2184
  %v2186 = vld [vmem:[%s2185] sm:$0xff]
  %v2187 = vld [vmem:[%s2185 + $0x8] sm:$0xff]
  %s2188 = sadd.s32 %s56, %s2182
  %s2189 = smul.u32 %s2188, 16
  %s2190 = scalar_lea.vmem [#allocation2], %s2189
  %v2191 = vld [vmem:[%s2190] sm:$0xff]
  %v2192 = vld [vmem:[%s2190 + $0x8] sm:$0xff]
  %v2193 = vld [vmem:[%s3 + $0xb] sm:$0x1]
  %v2194 = vsub.f32 %v2191, %v2186
  %v2195 = vsub.f32 %v2192, %v2187
  %v2196 = vlaneseq
  %v2197 = vshrl.u32 %v2196, 7
  %v2198 = vsub.s32 0, %v2197
  %v2199 = vrot.slane %v2193, %v2198
  %v2200 = vmul.f32 %v2199, %v2194
  %v2201 = vmul.f32 %v2199, %v2195
  %v2202 = vadd.f32 %v2186, %v2200
  %v2203 = vadd.f32 %v2187, %v2201
  %v2205 = vsel %vm116, %v2202, 0
  %v2208 = vsel %vm116, %v2203, 0
  %2210 = vmatprep.subr.mxu0 0.0
  %2211 = vmatpush1.msra.mxu0 0.0
  %2212 = vmatprep.subr.mxu0 0.0
  %2213 = vmatpush1.msra.mxu0 0.0
  %2214 = vmatprep.subr.mxu0 0.0
  %2215 = vmatpush1.msra.mxu0 0.0
  %2216 = vmatprep.subr.mxu0 0.0
  %2217 = vmatpush1.msra.mxu0 0.0
  %2218 = vmatprep.subr.mxu0 0.0
  %2219 = vmatpush1.msra.mxu0 0.0
  %2220 = vmatprep.subr.mxu0 0.0
  %2221 = vmatpush1.msra.mxu0 0.0
  %2222 = vmatprep.subr.mxu0 0.0
  %2223 = vmatpush1.msra.mxu0 0.0
  %2224 = vmatprep.subr.mxu0 0.0
  %2225 = vmatpush1.msra.mxu0 0.0
  %2226 = vmatprep.subr.mxu0 0.0
  %2227 = vmatpush1.msra.mxu0 0.0
  %2228 = vmatprep.subr.mxu0 0.0
  %2229 = vmatpush1.msra.mxu0 0.0
  %2230 = vmatprep.subr.mxu0 0.0
  %2231 = vmatpush1.msra.mxu0 0.0
  %2232 = vmatprep.subr.mxu0 0.0
  %2233 = vmatpush1.msra.mxu0 0.0
  %2234 = vmatprep.subr.mxu0 0.0
  %2235 = vmatpush1.msra.mxu0 0.0
  %2236 = vmatprep.subr.mxu0 0.0
  %2237 = vmatpush1.msra.mxu0 0.0
  %2238 = vmatprep.subr.mxu0 0.0
  %2239 = vmatpush1.msra.mxu0 %v91
  %2240 = vmatprep.subr.mxu0 0.0
  %2241 = vmatpush1.msra.mxu0 %v90
  %2242 = vmatprep.subr.mxu0 0.0
  %2243 = vmatpush2.msra.mxu0 0.0
  %2244 = vmatprep.subr.mxu0 0.0
  %2245 = vmatpush2.msra.mxu0 0.0
  %2246 = vmatprep.subr.mxu0 0.0
  %2247 = vmatpush2.msra.mxu0 0.0
  %2248 = vmatprep.subr.mxu0 0.0
  %2249 = vmatpush2.msra.mxu0 0.0
  %2250 = vmatprep.subr.mxu0 0.0
  %2251 = vmatpush2.msra.mxu0 0.0
  %2252 = vmatprep.subr.mxu0 0.0
  %2253 = vmatpush2.msra.mxu0 0.0
  %2254 = vmatprep.subr.mxu0 0.0
  %2255 = vmatpush2.msra.mxu0 0.0
  %2256 = vmatprep.subr.mxu0 0.0
  %2257 = vmatpush2.msra.mxu0 0.0
  %2258 = vmatprep.subr.mxu0 0.0
  %2259 = vmatpush2.msra.mxu0 0.0
  %2260 = vmatprep.subr.mxu0 0.0
  %2261 = vmatpush2.msra.mxu0 0.0
  %2262 = vmatprep.subr.mxu0 0.0
  %2263 = vmatpush2.msra.mxu0 0.0
  %2264 = vmatprep.subr.mxu0 0.0
  %2265 = vmatpush2.msra.mxu0 0.0
  %2266 = vmatprep.subr.mxu0 0.0
  %2267 = vmatpush2.msra.mxu0 0.0
  %2268 = vmatprep.subr.mxu0 0.0
  %2269 = vmatpush2.msra.mxu0 0.0
  %2270 = vmatprep.subr.mxu0 0.0
  %2271 = vmatpush2.msra.mxu0 0.0
  %2272 = vmatprep.subr.mxu0 0.0
  %2273 = vmatpush2.msra.mxu0 0.0
  %2274 = vmatprep.mubr.f32.mxu0 0.0
  %2275 = vmatmul.mubr.f32.gmra.mxu0 %v2205
  %v2276 = vpop.f32.mrf.mxu0
  %v2277 = vadd.f32 0.0, %v2276
  %v2278 = vpop.f32.mrf.mxu0
  %2279 = vmatprep.mubr.f32.mxu0 0.0
  %2280 = vmatmul.mubr.f32.gmra.mxu0 %v2208
  %v2281 = vpop.f32.mrf.mxu0
  %v2282 = vadd.f32 0.0, %v2281
  %v2283 = vpop.f32.mrf.mxu0
  %2284 = vdwg.mxu0
  %2285 = vmatprep.subr.mxu0 0.0
  %2286 = vmatpush1.msra.mxu0 0.0
  %2287 = vmatprep.subr.mxu0 0.0
  %2288 = vmatpush1.msra.mxu0 0.0
  %2289 = vmatprep.subr.mxu0 0.0
  %2290 = vmatpush1.msra.mxu0 0.0
  %2291 = vmatprep.subr.mxu0 0.0
  %2292 = vmatpush1.msra.mxu0 0.0
  %2293 = vmatprep.subr.mxu0 0.0
  %2294 = vmatpush1.msra.mxu0 0.0
  %2295 = vmatprep.subr.mxu0 0.0
  %2296 = vmatpush1.msra.mxu0 0.0
  %2297 = vmatprep.subr.mxu0 0.0
  %2298 = vmatpush1.msra.mxu0 0.0
  %2299 = vmatprep.subr.mxu0 0.0
  %2300 = vmatpush1.msra.mxu0 0.0
  %2301 = vmatprep.subr.mxu0 0.0
  %2302 = vmatpush1.msra.mxu0 0.0
  %2303 = vmatprep.subr.mxu0 0.0
  %2304 = vmatpush1.msra.mxu0 0.0
  %2305 = vmatprep.subr.mxu0 0.0
  %2306 = vmatpush1.msra.mxu0 0.0
  %2307 = vmatprep.subr.mxu0 0.0
  %2308 = vmatpush1.msra.mxu0 0.0
  %2309 = vmatprep.subr.mxu0 0.0
  %2310 = vmatpush1.msra.mxu0 0.0
  %2311 = vmatprep.subr.mxu0 0.0
  %2312 = vmatpush1.msra.mxu0 0.0
  %2313 = vmatprep.subr.mxu0 0.0
  %2314 = vmatpush1.msra.mxu0 %v2282
  %2315 = vmatprep.subr.mxu0 0.0
  %2316 = vmatpush1.msra.mxu0 %v2277
  %2317 = vmatprep.subr.mxu0 0.0
  %2318 = vmatpush2.msra.mxu0 0.0
  %2319 = vmatprep.subr.mxu0 0.0
  %2320 = vmatpush2.msra.mxu0 0.0
  %2321 = vmatprep.subr.mxu0 0.0
  %2322 = vmatpush2.msra.mxu0 0.0
  %2323 = vmatprep.subr.mxu0 0.0
  %2324 = vmatpush2.msra.mxu0 0.0
  %2325 = vmatprep.subr.mxu0 0.0
  %2326 = vmatpush2.msra.mxu0 0.0
  %2327 = vmatprep.subr.mxu0 0.0
  %2328 = vmatpush2.msra.mxu0 0.0
  %2329 = vmatprep.subr.mxu0 0.0
  %2330 = vmatpush2.msra.mxu0 0.0
  %2331 = vmatprep.subr.mxu0 0.0
  %2332 = vmatpush2.msra.mxu0 0.0
  %2333 = vmatprep.subr.mxu0 0.0
  %2334 = vmatpush2.msra.mxu0 0.0
  %2335 = vmatprep.subr.mxu0 0.0
  %2336 = vmatpush2.msra.mxu0 0.0
  %2337 = vmatprep.subr.mxu0 0.0
  %2338 = vmatpush2.msra.mxu0 0.0
  %2339 = vmatprep.subr.mxu0 0.0
  %2340 = vmatpush2.msra.mxu0 0.0
  %2341 = vmatprep.subr.mxu0 0.0
  %2342 = vmatpush2.msra.mxu0 0.0
  %2343 = vmatprep.subr.mxu0 0.0
  %2344 = vmatpush2.msra.mxu0 0.0
  %2345 = vmatprep.subr.mxu0 0.0
  %2346 = vmatpush2.msra.mxu0 0.0
  %2347 = vmatprep.subr.mxu0 0.0
  %2348 = vmatpush2.msra.mxu0 0.0
  %2349 = vmatprep.mubr.f32.mxu0 0.0
  %2350 = vmatmul.mubr.f32.gmra.mxu0 %v199
  %v2351 = vpop.f32.mrf.mxu0
  %v2352 = vadd.f32 0.0, %v2351
  %v2353 = vpop.f32.mrf.mxu0
  %2354 = vmatprep.mubr.f32.mxu0 0.0
  %2355 = vmatmul.mubr.f32.gmra.mxu0 %v202
  %v2356 = vpop.f32.mrf.mxu0
  %v2357 = vadd.f32 0.0, %v2356
  %v2358 = vpop.f32.mrf.mxu0
  %2359 = vmatprep.mubr.f32.mxu0 0.0
  %2360 = vmatmul.mubr.f32.gmra.mxu0 %v205
  %v2361 = vpop.f32.mrf.mxu0
  %v2362 = vadd.f32 0.0, %v2361
  %v2363 = vpop.f32.mrf.mxu0
  %2364 = vdwg.mxu0
  %s2365 = scalar_lea.vmem %s7, 264
  %2366 = vst.msk [vmem:[%s2365] sm:$0xff] %vm116, %v2352
  %2367 = vst.msk [vmem:[%s2365 + $0x8] sm:$0xff] %vm116, %v2357
  %2368 = vst.msk [vmem:[%s2365 + $0x10] sm:$0xff] %vm116, %v2362
  %s2369 = sadd.s32 %s92, 12
  %s2370 = sld [smem:[#allocation6 + %s2369]]
  %s2371 = sld [smem:[#allocation7 + %s2369]]
  %s2372 = sadd.s32 %s56, %s2370
  %s2373 = smul.u32 %s2372, 16
  %s2374 = scalar_lea.vmem [#allocation2], %s2373
  %v2375 = vld [vmem:[%s2374] sm:$0xff]
  %v2376 = vld [vmem:[%s2374 + $0x8] sm:$0xff]
  %s2377 = sadd.s32 %s56, %s2371
  %s2378 = smul.u32 %s2377, 16
  %s2379 = scalar_lea.vmem [#allocation2], %s2378
  %v2380 = vld [vmem:[%s2379] sm:$0xff]
  %v2381 = vld [vmem:[%s2379 + $0x8] sm:$0xff]
  %v2382 = vld [vmem:[%s3 + $0xc] sm:$0x1]
  %v2383 = vsub.f32 %v2380, %v2375
  %v2384 = vsub.f32 %v2381, %v2376
  %v2385 = vlaneseq
  %v2386 = vshrl.u32 %v2385, 7
  %v2387 = vsub.s32 0, %v2386
  %v2388 = vrot.slane %v2382, %v2387
  %v2389 = vmul.f32 %v2388, %v2383
  %v2390 = vmul.f32 %v2388, %v2384
  %v2391 = vadd.f32 %v2375, %v2389
  %v2392 = vadd.f32 %v2376, %v2390
  %v2394 = vsel %vm116, %v2391, 0
  %v2397 = vsel %vm116, %v2392, 0
  %2399 = vmatprep.subr.mxu0 0.0
  %2400 = vmatpush1.msra.mxu0 0.0
  %2401 = vmatprep.subr.mxu0 0.0
  %2402 = vmatpush1.msra.mxu0 0.0
  %2403 = vmatprep.subr.mxu0 0.0
  %2404 = vmatpush1.msra.mxu0 0.0
  %2405 = vmatprep.subr.mxu0 0.0
  %2406 = vmatpush1.msra.mxu0 0.0
  %2407 = vmatprep.subr.mxu0 0.0
  %2408 = vmatpush1.msra.mxu0 0.0
  %2409 = vmatprep.subr.mxu0 0.0
  %2410 = vmatpush1.msra.mxu0 0.0
  %2411 = vmatprep.subr.mxu0 0.0
  %2412 = vmatpush1.msra.mxu0 0.0
  %2413 = vmatprep.subr.mxu0 0.0
  %2414 = vmatpush1.msra.mxu0 0.0
  %2415 = vmatprep.subr.mxu0 0.0
  %2416 = vmatpush1.msra.mxu0 0.0
  %2417 = vmatprep.subr.mxu0 0.0
  %2418 = vmatpush1.msra.mxu0 0.0
  %2419 = vmatprep.subr.mxu0 0.0
  %2420 = vmatpush1.msra.mxu0 0.0
  %2421 = vmatprep.subr.mxu0 0.0
  %2422 = vmatpush1.msra.mxu0 0.0
  %2423 = vmatprep.subr.mxu0 0.0
  %2424 = vmatpush1.msra.mxu0 0.0
  %2425 = vmatprep.subr.mxu0 0.0
  %2426 = vmatpush1.msra.mxu0 0.0
  %2427 = vmatprep.subr.mxu0 0.0
  %2428 = vmatpush1.msra.mxu0 %v91
  %2429 = vmatprep.subr.mxu0 0.0
  %2430 = vmatpush1.msra.mxu0 %v90
  %2431 = vmatprep.subr.mxu0 0.0
  %2432 = vmatpush2.msra.mxu0 0.0
  %2433 = vmatprep.subr.mxu0 0.0
  %2434 = vmatpush2.msra.mxu0 0.0
  %2435 = vmatprep.subr.mxu0 0.0
  %2436 = vmatpush2.msra.mxu0 0.0
  %2437 = vmatprep.subr.mxu0 0.0
  %2438 = vmatpush2.msra.mxu0 0.0
  %2439 = vmatprep.subr.mxu0 0.0
  %2440 = vmatpush2.msra.mxu0 0.0
  %2441 = vmatprep.subr.mxu0 0.0
  %2442 = vmatpush2.msra.mxu0 0.0
  %2443 = vmatprep.subr.mxu0 0.0
  %2444 = vmatpush2.msra.mxu0 0.0
  %2445 = vmatprep.subr.mxu0 0.0
  %2446 = vmatpush2.msra.mxu0 0.0
  %2447 = vmatprep.subr.mxu0 0.0
  %2448 = vmatpush2.msra.mxu0 0.0
  %2449 = vmatprep.subr.mxu0 0.0
  %2450 = vmatpush2.msra.mxu0 0.0
  %2451 = vmatprep.subr.mxu0 0.0
  %2452 = vmatpush2.msra.mxu0 0.0
  %2453 = vmatprep.subr.mxu0 0.0
  %2454 = vmatpush2.msra.mxu0 0.0
  %2455 = vmatprep.subr.mxu0 0.0
  %2456 = vmatpush2.msra.mxu0 0.0
  %2457 = vmatprep.subr.mxu0 0.0
  %2458 = vmatpush2.msra.mxu0 0.0
  %2459 = vmatprep.subr.mxu0 0.0
  %2460 = vmatpush2.msra.mxu0 0.0
  %2461 = vmatprep.subr.mxu0 0.0
  %2462 = vmatpush2.msra.mxu0 0.0
  %2463 = vmatprep.mubr.f32.mxu0 0.0
  %2464 = vmatmul.mubr.f32.gmra.mxu0 %v2394
  %v2465 = vpop.f32.mrf.mxu0
  %v2466 = vadd.f32 0.0, %v2465
  %v2467 = vpop.f32.mrf.mxu0
  %2468 = vmatprep.mubr.f32.mxu0 0.0
  %2469 = vmatmul.mubr.f32.gmra.mxu0 %v2397
  %v2470 = vpop.f32.mrf.mxu0
  %v2471 = vadd.f32 0.0, %v2470
  %v2472 = vpop.f32.mrf.mxu0
  %2473 = vdwg.mxu0
  %2474 = vmatprep.subr.mxu0 0.0
  %2475 = vmatpush1.msra.mxu0 0.0
  %2476 = vmatprep.subr.mxu0 0.0
  %2477 = vmatpush1.msra.mxu0 0.0
  %2478 = vmatprep.subr.mxu0 0.0
  %2479 = vmatpush1.msra.mxu0 0.0
  %2480 = vmatprep.subr.mxu0 0.0
  %2481 = vmatpush1.msra.mxu0 0.0
  %2482 = vmatprep.subr.mxu0 0.0
  %2483 = vmatpush1.msra.mxu0 0.0
  %2484 = vmatprep.subr.mxu0 0.0
  %2485 = vmatpush1.msra.mxu0 0.0
  %2486 = vmatprep.subr.mxu0 0.0
  %2487 = vmatpush1.msra.mxu0 0.0
  %2488 = vmatprep.subr.mxu0 0.0
  %2489 = vmatpush1.msra.mxu0 0.0
  %2490 = vmatprep.subr.mxu0 0.0
  %2491 = vmatpush1.msra.mxu0 0.0
  %2492 = vmatprep.subr.mxu0 0.0
  %2493 = vmatpush1.msra.mxu0 0.0
  %2494 = vmatprep.subr.mxu0 0.0
  %2495 = vmatpush1.msra.mxu0 0.0
  %2496 = vmatprep.subr.mxu0 0.0
  %2497 = vmatpush1.msra.mxu0 0.0
  %2498 = vmatprep.subr.mxu0 0.0
  %2499 = vmatpush1.msra.mxu0 0.0
  %2500 = vmatprep.subr.mxu0 0.0
  %2501 = vmatpush1.msra.mxu0 0.0
  %2502 = vmatprep.subr.mxu0 0.0
  %2503 = vmatpush1.msra.mxu0 %v2471
  %2504 = vmatprep.subr.mxu0 0.0
  %2505 = vmatpush1.msra.mxu0 %v2466
  %2506 = vmatprep.subr.mxu0 0.0
  %2507 = vmatpush2.msra.mxu0 0.0
  %2508 = vmatprep.subr.mxu0 0.0
  %2509 = vmatpush2.msra.mxu0 0.0
  %2510 = vmatprep.subr.mxu0 0.0
  %2511 = vmatpush2.msra.mxu0 0.0
  %2512 = vmatprep.subr.mxu0 0.0
  %2513 = vmatpush2.msra.mxu0 0.0
  %2514 = vmatprep.subr.mxu0 0.0
  %2515 = vmatpush2.msra.mxu0 0.0
  %2516 = vmatprep.subr.mxu0 0.0
  %2517 = vmatpush2.msra.mxu0 0.0
  %2518 = vmatprep.subr.mxu0 0.0
  %2519 = vmatpush2.msra.mxu0 0.0
  %2520 = vmatprep.subr.mxu0 0.0
  %2521 = vmatpush2.msra.mxu0 0.0
  %2522 = vmatprep.subr.mxu0 0.0
  %2523 = vmatpush2.msra.mxu0 0.0
  %2524 = vmatprep.subr.mxu0 0.0
  %2525 = vmatpush2.msra.mxu0 0.0
  %2526 = vmatprep.subr.mxu0 0.0
  %2527 = vmatpush2.msra.mxu0 0.0
  %2528 = vmatprep.subr.mxu0 0.0
  %2529 = vmatpush2.msra.mxu0 0.0
  %2530 = vmatprep.subr.mxu0 0.0
  %2531 = vmatpush2.msra.mxu0 0.0
  %2532 = vmatprep.subr.mxu0 0.0
  %2533 = vmatpush2.msra.mxu0 0.0
  %2534 = vmatprep.subr.mxu0 0.0
  %2535 = vmatpush2.msra.mxu0 0.0
  %2536 = vmatprep.subr.mxu0 0.0
  %2537 = vmatpush2.msra.mxu0 0.0
  %2538 = vmatprep.mubr.f32.mxu0 0.0
  %2539 = vmatmul.mubr.f32.gmra.mxu0 %v199
  %v2540 = vpop.f32.mrf.mxu0
  %v2541 = vadd.f32 0.0, %v2540
  %v2542 = vpop.f32.mrf.mxu0
  %2543 = vmatprep.mubr.f32.mxu0 0.0
  %2544 = vmatmul.mubr.f32.gmra.mxu0 %v202
  %v2545 = vpop.f32.mrf.mxu0
  %v2546 = vadd.f32 0.0, %v2545
  %v2547 = vpop.f32.mrf.mxu0
  %2548 = vmatprep.mubr.f32.mxu0 0.0
  %2549 = vmatmul.mubr.f32.gmra.mxu0 %v205
  %v2550 = vpop.f32.mrf.mxu0
  %v2551 = vadd.f32 0.0, %v2550
  %v2552 = vpop.f32.mrf.mxu0
  %2553 = vdwg.mxu0
  %s2554 = scalar_lea.vmem %s7, 288
  %2555 = vst.msk [vmem:[%s2554] sm:$0xff] %vm116, %v2541
  %2556 = vst.msk [vmem:[%s2554 + $0x8] sm:$0xff] %vm116, %v2546
  %2557 = vst.msk [vmem:[%s2554 + $0x10] sm:$0xff] %vm116, %v2551
  %s2558 = sadd.s32 %s92, 13
  %s2559 = sld [smem:[#allocation6 + %s2558]]
  %s2560 = sld [smem:[#allocation7 + %s2558]]
  %s2561 = sadd.s32 %s56, %s2559
  %s2562 = smul.u32 %s2561, 16
  %s2563 = scalar_lea.vmem [#allocation2], %s2562
  %v2564 = vld [vmem:[%s2563] sm:$0xff]
  %v2565 = vld [vmem:[%s2563 + $0x8] sm:$0xff]
  %s2566 = sadd.s32 %s56, %s2560
  %s2567 = smul.u32 %s2566, 16
  %s2568 = scalar_lea.vmem [#allocation2], %s2567
  %v2569 = vld [vmem:[%s2568] sm:$0xff]
  %v2570 = vld [vmem:[%s2568 + $0x8] sm:$0xff]
  %v2571 = vld [vmem:[%s3 + $0xd] sm:$0x1]
  %v2572 = vsub.f32 %v2569, %v2564
  %v2573 = vsub.f32 %v2570, %v2565
  %v2574 = vlaneseq
  %v2575 = vshrl.u32 %v2574, 7
  %v2576 = vsub.s32 0, %v2575
  %v2577 = vrot.slane %v2571, %v2576
  %v2578 = vmul.f32 %v2577, %v2572
  %v2579 = vmul.f32 %v2577, %v2573
  %v2580 = vadd.f32 %v2564, %v2578
  %v2581 = vadd.f32 %v2565, %v2579
  %v2583 = vsel %vm116, %v2580, 0
  %v2586 = vsel %vm116, %v2581, 0
  %2588 = vmatprep.subr.mxu0 0.0
  %2589 = vmatpush1.msra.mxu0 0.0
  %2590 = vmatprep.subr.mxu0 0.0
  %2591 = vmatpush1.msra.mxu0 0.0
  %2592 = vmatprep.subr.mxu0 0.0
  %2593 = vmatpush1.msra.mxu0 0.0
  %2594 = vmatprep.subr.mxu0 0.0
  %2595 = vmatpush1.msra.mxu0 0.0
  %2596 = vmatprep.subr.mxu0 0.0
  %2597 = vmatpush1.msra.mxu0 0.0
  %2598 = vmatprep.subr.mxu0 0.0
  %2599 = vmatpush1.msra.mxu0 0.0
  %2600 = vmatprep.subr.mxu0 0.0
  %2601 = vmatpush1.msra.mxu0 0.0
  %2602 = vmatprep.subr.mxu0 0.0
  %2603 = vmatpush1.msra.mxu0 0.0
  %2604 = vmatprep.subr.mxu0 0.0
  %2605 = vmatpush1.msra.mxu0 0.0
  %2606 = vmatprep.subr.mxu0 0.0
  %2607 = vmatpush1.msra.mxu0 0.0
  %2608 = vmatprep.subr.mxu0 0.0
  %2609 = vmatpush1.msra.mxu0 0.0
  %2610 = vmatprep.subr.mxu0 0.0
  %2611 = vmatpush1.msra.mxu0 0.0
  %2612 = vmatprep.subr.mxu0 0.0
  %2613 = vmatpush1.msra.mxu0 0.0
  %2614 = vmatprep.subr.mxu0 0.0
  %2615 = vmatpush1.msra.mxu0 0.0
  %2616 = vmatprep.subr.mxu0 0.0
  %2617 = vmatpush1.msra.mxu0 %v91
  %2618 = vmatprep.subr.mxu0 0.0
  %2619 = vmatpush1.msra.mxu0 %v90
  %2620 = vmatprep.subr.mxu0 0.0
  %2621 = vmatpush2.msra.mxu0 0.0
  %2622 = vmatprep.subr.mxu0 0.0
  %2623 = vmatpush2.msra.mxu0 0.0
  %2624 = vmatprep.subr.mxu0 0.0
  %2625 = vmatpush2.msra.mxu0 0.0
  %2626 = vmatprep.subr.mxu0 0.0
  %2627 = vmatpush2.msra.mxu0 0.0
  %2628 = vmatprep.subr.mxu0 0.0
  %2629 = vmatpush2.msra.mxu0 0.0
  %2630 = vmatprep.subr.mxu0 0.0
  %2631 = vmatpush2.msra.mxu0 0.0
  %2632 = vmatprep.subr.mxu0 0.0
  %2633 = vmatpush2.msra.mxu0 0.0
  %2634 = vmatprep.subr.mxu0 0.0
  %2635 = vmatpush2.msra.mxu0 0.0
  %2636 = vmatprep.subr.mxu0 0.0
  %2637 = vmatpush2.msra.mxu0 0.0
  %2638 = vmatprep.subr.mxu0 0.0
  %2639 = vmatpush2.msra.mxu0 0.0
  %2640 = vmatprep.subr.mxu0 0.0
  %2641 = vmatpush2.msra.mxu0 0.0
  %2642 = vmatprep.subr.mxu0 0.0
  %2643 = vmatpush2.msra.mxu0 0.0
  %2644 = vmatprep.subr.mxu0 0.0
  %2645 = vmatpush2.msra.mxu0 0.0
  %2646 = vmatprep.subr.mxu0 0.0
  %2647 = vmatpush2.msra.mxu0 0.0
  %2648 = vmatprep.subr.mxu0 0.0
  %2649 = vmatpush2.msra.mxu0 0.0
  %2650 = vmatprep.subr.mxu0 0.0
  %2651 = vmatpush2.msra.mxu0 0.0
  %2652 = vmatprep.mubr.f32.mxu0 0.0
  %2653 = vmatmul.mubr.f32.gmra.mxu0 %v2583
  %v2654 = vpop.f32.mrf.mxu0
  %v2655 = vadd.f32 0.0, %v2654
  %v2656 = vpop.f32.mrf.mxu0
  %2657 = vmatprep.mubr.f32.mxu0 0.0
  %2658 = vmatmul.mubr.f32.gmra.mxu0 %v2586
  %v2659 = vpop.f32.mrf.mxu0
  %v2660 = vadd.f32 0.0, %v2659
  %v2661 = vpop.f32.mrf.mxu0
  %2662 = vdwg.mxu0
  %2663 = vmatprep.subr.mxu0 0.0
  %2664 = vmatpush1.msra.mxu0 0.0
  %2665 = vmatprep.subr.mxu0 0.0
  %2666 = vmatpush1.msra.mxu0 0.0
  %2667 = vmatprep.subr.mxu0 0.0
  %2668 = vmatpush1.msra.mxu0 0.0
  %2669 = vmatprep.subr.mxu0 0.0
  %2670 = vmatpush1.msra.mxu0 0.0
  %2671 = vmatprep.subr.mxu0 0.0
  %2672 = vmatpush1.msra.mxu0 0.0
  %2673 = vmatprep.subr.mxu0 0.0
  %2674 = vmatpush1.msra.mxu0 0.0
  %2675 = vmatprep.subr.mxu0 0.0
  %2676 = vmatpush1.msra.mxu0 0.0
  %2677 = vmatprep.subr.mxu0 0.0
  %2678 = vmatpush1.msra.mxu0 0.0
  %2679 = vmatprep.subr.mxu0 0.0
  %2680 = vmatpush1.msra.mxu0 0.0
  %2681 = vmatprep.subr.mxu0 0.0
  %2682 = vmatpush1.msra.mxu0 0.0
  %2683 = vmatprep.subr.mxu0 0.0
  %2684 = vmatpush1.msra.mxu0 0.0
  %2685 = vmatprep.subr.mxu0 0.0
  %2686 = vmatpush1.msra.mxu0 0.0
  %2687 = vmatprep.subr.mxu0 0.0
  %2688 = vmatpush1.msra.mxu0 0.0
  %2689 = vmatprep.subr.mxu0 0.0
  %2690 = vmatpush1.msra.mxu0 0.0
  %2691 = vmatprep.subr.mxu0 0.0
  %2692 = vmatpush1.msra.mxu0 %v2660
  %2693 = vmatprep.subr.mxu0 0.0
  %2694 = vmatpush1.msra.mxu0 %v2655
  %2695 = vmatprep.subr.mxu0 0.0
  %2696 = vmatpush2.msra.mxu0 0.0
  %2697 = vmatprep.subr.mxu0 0.0
  %2698 = vmatpush2.msra.mxu0 0.0
  %2699 = vmatprep.subr.mxu0 0.0
  %2700 = vmatpush2.msra.mxu0 0.0
  %2701 = vmatprep.subr.mxu0 0.0
  %2702 = vmatpush2.msra.mxu0 0.0
  %2703 = vmatprep.subr.mxu0 0.0
  %2704 = vmatpush2.msra.mxu0 0.0
  %2705 = vmatprep.subr.mxu0 0.0
  %2706 = vmatpush2.msra.mxu0 0.0
  %2707 = vmatprep.subr.mxu0 0.0
  %2708 = vmatpush2.msra.mxu0 0.0
  %2709 = vmatprep.subr.mxu0 0.0
  %2710 = vmatpush2.msra.mxu0 0.0
  %2711 = vmatprep.subr.mxu0 0.0
  %2712 = vmatpush2.msra.mxu0 0.0
  %2713 = vmatprep.subr.mxu0 0.0
  %2714 = vmatpush2.msra.mxu0 0.0
  %2715 = vmatprep.subr.mxu0 0.0
  %2716 = vmatpush2.msra.mxu0 0.0
  %2717 = vmatprep.subr.mxu0 0.0
  %2718 = vmatpush2.msra.mxu0 0.0
  %2719 = vmatprep.subr.mxu0 0.0
  %2720 = vmatpush2.msra.mxu0 0.0
  %2721 = vmatprep.subr.mxu0 0.0
  %2722 = vmatpush2.msra.mxu0 0.0
  %2723 = vmatprep.subr.mxu0 0.0
  %2724 = vmatpush2.msra.mxu0 0.0
  %2725 = vmatprep.subr.mxu0 0.0
  %2726 = vmatpush2.msra.mxu0 0.0
  %2727 = vmatprep.mubr.f32.mxu0 0.0
  %2728 = vmatmul.mubr.f32.gmra.mxu0 %v199
  %v2729 = vpop.f32.mrf.mxu0
  %v2730 = vadd.f32 0.0, %v2729
  %v2731 = vpop.f32.mrf.mxu0
  %2732 = vmatprep.mubr.f32.mxu0 0.0
  %2733 = vmatmul.mubr.f32.gmra.mxu0 %v202
  %v2734 = vpop.f32.mrf.mxu0
  %v2735 = vadd.f32 0.0, %v2734
  %v2736 = vpop.f32.mrf.mxu0
  %2737 = vmatprep.mubr.f32.mxu0 0.0
  %2738 = vmatmul.mubr.f32.gmra.mxu0 %v205
  %v2739 = vpop.f32.mrf.mxu0
  %v2740 = vadd.f32 0.0, %v2739
  %v2741 = vpop.f32.mrf.mxu0
  %2742 = vdwg.mxu0
  %s2743 = scalar_lea.vmem %s7, 312
  %2744 = vst.msk [vmem:[%s2743] sm:$0xff] %vm116, %v2730
  %2745 = vst.msk [vmem:[%s2743 + $0x8] sm:$0xff] %vm116, %v2735
  %2746 = vst.msk [vmem:[%s2743 + $0x10] sm:$0xff] %vm116, %v2740
  %s2747 = sadd.s32 %s92, 14
  %s2748 = sld [smem:[#allocation6 + %s2747]]
  %s2749 = sld [smem:[#allocation7 + %s2747]]
  %s2750 = sadd.s32 %s56, %s2748
  %s2751 = smul.u32 %s2750, 16
  %s2752 = scalar_lea.vmem [#allocation2], %s2751
  %v2753 = vld [vmem:[%s2752] sm:$0xff]
  %v2754 = vld [vmem:[%s2752 + $0x8] sm:$0xff]
  %s2755 = sadd.s32 %s56, %s2749
  %s2756 = smul.u32 %s2755, 16
  %s2757 = scalar_lea.vmem [#allocation2], %s2756
  %v2758 = vld [vmem:[%s2757] sm:$0xff]
  %v2759 = vld [vmem:[%s2757 + $0x8] sm:$0xff]
  %v2760 = vld [vmem:[%s3 + $0xe] sm:$0x1]
  %v2761 = vsub.f32 %v2758, %v2753
  %v2762 = vsub.f32 %v2759, %v2754
  %v2763 = vlaneseq
  %v2764 = vshrl.u32 %v2763, 7
  %v2765 = vsub.s32 0, %v2764
  %v2766 = vrot.slane %v2760, %v2765
  %v2767 = vmul.f32 %v2766, %v2761
  %v2768 = vmul.f32 %v2766, %v2762
  %v2769 = vadd.f32 %v2753, %v2767
  %v2770 = vadd.f32 %v2754, %v2768
  %v2772 = vsel %vm116, %v2769, 0
  %v2775 = vsel %vm116, %v2770, 0
  %2777 = vmatprep.subr.mxu0 0.0
  %2778 = vmatpush1.msra.mxu0 0.0
  %2779 = vmatprep.subr.mxu0 0.0
  %2780 = vmatpush1.msra.mxu0 0.0
  %2781 = vmatprep.subr.mxu0 0.0
  %2782 = vmatpush1.msra.mxu0 0.0
  %2783 = vmatprep.subr.mxu0 0.0
  %2784 = vmatpush1.msra.mxu0 0.0
  %2785 = vmatprep.subr.mxu0 0.0
  %2786 = vmatpush1.msra.mxu0 0.0
  %2787 = vmatprep.subr.mxu0 0.0
  %2788 = vmatpush1.msra.mxu0 0.0
  %2789 = vmatprep.subr.mxu0 0.0
  %2790 = vmatpush1.msra.mxu0 0.0
  %2791 = vmatprep.subr.mxu0 0.0
  %2792 = vmatpush1.msra.mxu0 0.0
  %2793 = vmatprep.subr.mxu0 0.0
  %2794 = vmatpush1.msra.mxu0 0.0
  %2795 = vmatprep.subr.mxu0 0.0
  %2796 = vmatpush1.msra.mxu0 0.0
  %2797 = vmatprep.subr.mxu0 0.0
  %2798 = vmatpush1.msra.mxu0 0.0
  %2799 = vmatprep.subr.mxu0 0.0
  %2800 = vmatpush1.msra.mxu0 0.0
  %2801 = vmatprep.subr.mxu0 0.0
  %2802 = vmatpush1.msra.mxu0 0.0
  %2803 = vmatprep.subr.mxu0 0.0
  %2804 = vmatpush1.msra.mxu0 0.0
  %2805 = vmatprep.subr.mxu0 0.0
  %2806 = vmatpush1.msra.mxu0 %v91
  %2807 = vmatprep.subr.mxu0 0.0
  %2808 = vmatpush1.msra.mxu0 %v90
  %2809 = vmatprep.subr.mxu0 0.0
  %2810 = vmatpush2.msra.mxu0 0.0
  %2811 = vmatprep.subr.mxu0 0.0
  %2812 = vmatpush2.msra.mxu0 0.0
  %2813 = vmatprep.subr.mxu0 0.0
  %2814 = vmatpush2.msra.mxu0 0.0
  %2815 = vmatprep.subr.mxu0 0.0
  %2816 = vmatpush2.msra.mxu0 0.0
  %2817 = vmatprep.subr.mxu0 0.0
  %2818 = vmatpush2.msra.mxu0 0.0
  %2819 = vmatprep.subr.mxu0 0.0
  %2820 = vmatpush2.msra.mxu0 0.0
  %2821 = vmatprep.subr.mxu0 0.0
  %2822 = vmatpush2.msra.mxu0 0.0
  %2823 = vmatprep.subr.mxu0 0.0
  %2824 = vmatpush2.msra.mxu0 0.0
  %2825 = vmatprep.subr.mxu0 0.0
  %2826 = vmatpush2.msra.mxu0 0.0
  %2827 = vmatprep.subr.mxu0 0.0
  %2828 = vmatpush2.msra.mxu0 0.0
  %2829 = vmatprep.subr.mxu0 0.0
  %2830 = vmatpush2.msra.mxu0 0.0
  %2831 = vmatprep.subr.mxu0 0.0
  %2832 = vmatpush2.msra.mxu0 0.0
  %2833 = vmatprep.subr.mxu0 0.0
  %2834 = vmatpush2.msra.mxu0 0.0
  %2835 = vmatprep.subr.mxu0 0.0
  %2836 = vmatpush2.msra.mxu0 0.0
  %2837 = vmatprep.subr.mxu0 0.0
  %2838 = vmatpush2.msra.mxu0 0.0
  %2839 = vmatprep.subr.mxu0 0.0
  %2840 = vmatpush2.msra.mxu0 0.0
  %2841 = vmatprep.mubr.f32.mxu0 0.0
  %2842 = vmatmul.mubr.f32.gmra.mxu0 %v2772
  %v2843 = vpop.f32.mrf.mxu0
  %v2844 = vadd.f32 0.0, %v2843
  %v2845 = vpop.f32.mrf.mxu0
  %2846 = vmatprep.mubr.f32.mxu0 0.0
  %2847 = vmatmul.mubr.f32.gmra.mxu0 %v2775
  %v2848 = vpop.f32.mrf.mxu0
  %v2849 = vadd.f32 0.0, %v2848
  %v2850 = vpop.f32.mrf.mxu0
  %2851 = vdwg.mxu0
  %2852 = vmatprep.subr.mxu0 0.0
  %2853 = vmatpush1.msra.mxu0 0.0
  %2854 = vmatprep.subr.mxu0 0.0
  %2855 = vmatpush1.msra.mxu0 0.0
  %2856 = vmatprep.subr.mxu0 0.0
  %2857 = vmatpush1.msra.mxu0 0.0
  %2858 = vmatprep.subr.mxu0 0.0
  %2859 = vmatpush1.msra.mxu0 0.0
  %2860 = vmatprep.subr.mxu0 0.0
  %2861 = vmatpush1.msra.mxu0 0.0
  %2862 = vmatprep.subr.mxu0 0.0
  %2863 = vmatpush1.msra.mxu0 0.0
  %2864 = vmatprep.subr.mxu0 0.0
  %2865 = vmatpush1.msra.mxu0 0.0
  %2866 = vmatprep.subr.mxu0 0.0
  %2867 = vmatpush1.msra.mxu0 0.0
  %2868 = vmatprep.subr.mxu0 0.0
  %2869 = vmatpush1.msra.mxu0 0.0
  %2870 = vmatprep.subr.mxu0 0.0
  %2871 = vmatpush1.msra.mxu0 0.0
  %2872 = vmatprep.subr.mxu0 0.0
  %2873 = vmatpush1.msra.mxu0 0.0
  %2874 = vmatprep.subr.mxu0 0.0
  %2875 = vmatpush1.msra.mxu0 0.0
  %2876 = vmatprep.subr.mxu0 0.0
  %2877 = vmatpush1.msra.mxu0 0.0
  %2878 = vmatprep.subr.mxu0 0.0
  %2879 = vmatpush1.msra.mxu0 0.0
  %2880 = vmatprep.subr.mxu0 0.0
  %2881 = vmatpush1.msra.mxu0 %v2849
  %2882 = vmatprep.subr.mxu0 0.0
  %2883 = vmatpush1.msra.mxu0 %v2844
  %2884 = vmatprep.subr.mxu0 0.0
  %2885 = vmatpush2.msra.mxu0 0.0
  %2886 = vmatprep.subr.mxu0 0.0
  %2887 = vmatpush2.msra.mxu0 0.0
  %2888 = vmatprep.subr.mxu0 0.0
  %2889 = vmatpush2.msra.mxu0 0.0
  %2890 = vmatprep.subr.mxu0 0.0
  %2891 = vmatpush2.msra.mxu0 0.0
  %2892 = vmatprep.subr.mxu0 0.0
  %2893 = vmatpush2.msra.mxu0 0.0
  %2894 = vmatprep.subr.mxu0 0.0
  %2895 = vmatpush2.msra.mxu0 0.0
  %2896 = vmatprep.subr.mxu0 0.0
  %2897 = vmatpush2.msra.mxu0 0.0
  %2898 = vmatprep.subr.mxu0 0.0
  %2899 = vmatpush2.msra.mxu0 0.0
  %2900 = vmatprep.subr.mxu0 0.0
  %2901 = vmatpush2.msra.mxu0 0.0
  %2902 = vmatprep.subr.mxu0 0.0
  %2903 = vmatpush2.msra.mxu0 0.0
  %2904 = vmatprep.subr.mxu0 0.0
  %2905 = vmatpush2.msra.mxu0 0.0
  %2906 = vmatprep.subr.mxu0 0.0
  %2907 = vmatpush2.msra.mxu0 0.0
  %2908 = vmatprep.subr.mxu0 0.0
  %2909 = vmatpush2.msra.mxu0 0.0
  %2910 = vmatprep.subr.mxu0 0.0
  %2911 = vmatpush2.msra.mxu0 0.0
  %2912 = vmatprep.subr.mxu0 0.0
  %2913 = vmatpush2.msra.mxu0 0.0
  %2914 = vmatprep.subr.mxu0 0.0
  %2915 = vmatpush2.msra.mxu0 0.0
  %2916 = vmatprep.mubr.f32.mxu0 0.0
  %2917 = vmatmul.mubr.f32.gmra.mxu0 %v199
  %v2918 = vpop.f32.mrf.mxu0
  %v2919 = vadd.f32 0.0, %v2918
  %v2920 = vpop.f32.mrf.mxu0
  %2921 = vmatprep.mubr.f32.mxu0 0.0
  %2922 = vmatmul.mubr.f32.gmra.mxu0 %v202
  %v2923 = vpop.f32.mrf.mxu0
  %v2924 = vadd.f32 0.0, %v2923
  %v2925 = vpop.f32.mrf.mxu0
  %2926 = vmatprep.mubr.f32.mxu0 0.0
  %2927 = vmatmul.mubr.f32.gmra.mxu0 %v205
  %v2928 = vpop.f32.mrf.mxu0
  %v2929 = vadd.f32 0.0, %v2928
  %v2930 = vpop.f32.mrf.mxu0
  %2931 = vdwg.mxu0
  %s2932 = scalar_lea.vmem %s7, 336
  %2933 = vst.msk [vmem:[%s2932] sm:$0xff] %vm116, %v2919
  %2934 = vst.msk [vmem:[%s2932 + $0x8] sm:$0xff] %vm116, %v2924
  %2935 = vst.msk [vmem:[%s2932 + $0x10] sm:$0xff] %vm116, %v2929
  %s2936 = sadd.s32 %s92, 15
  %s2937 = sld [smem:[#allocation6 + %s2936]]
  %s2938 = sld [smem:[#allocation7 + %s2936]]
  %s2939 = sadd.s32 %s56, %s2937
  %s2940 = smul.u32 %s2939, 16
  %s2941 = scalar_lea.vmem [#allocation2], %s2940
  %v2942 = vld [vmem:[%s2941] sm:$0xff]
  %v2943 = vld [vmem:[%s2941 + $0x8] sm:$0xff]
  %s2944 = sadd.s32 %s56, %s2938
  %s2945 = smul.u32 %s2944, 16
  %s2946 = scalar_lea.vmem [#allocation2], %s2945
  %v2947 = vld [vmem:[%s2946] sm:$0xff]
  %v2948 = vld [vmem:[%s2946 + $0x8] sm:$0xff]
  %v2949 = vld [vmem:[%s3 + $0xf] sm:$0x1]
  %v2950 = vsub.f32 %v2947, %v2942
  %v2951 = vsub.f32 %v2948, %v2943
  %v2952 = vlaneseq
  %v2953 = vshrl.u32 %v2952, 7
  %v2954 = vsub.s32 0, %v2953
  %v2955 = vrot.slane %v2949, %v2954
  %v2956 = vmul.f32 %v2955, %v2950
  %v2957 = vmul.f32 %v2955, %v2951
  %v2958 = vadd.f32 %v2942, %v2956
  %v2959 = vadd.f32 %v2943, %v2957
  %v2961 = vsel %vm116, %v2958, 0
  %v2964 = vsel %vm116, %v2959, 0
  %2966 = vmatprep.subr.mxu0 0.0
  %2967 = vmatpush1.msra.mxu0 0.0
  %2968 = vmatprep.subr.mxu0 0.0
  %2969 = vmatpush1.msra.mxu0 0.0
  %2970 = vmatprep.subr.mxu0 0.0
  %2971 = vmatpush1.msra.mxu0 0.0
  %2972 = vmatprep.subr.mxu0 0.0
  %2973 = vmatpush1.msra.mxu0 0.0
  %2974 = vmatprep.subr.mxu0 0.0
  %2975 = vmatpush1.msra.mxu0 0.0
  %2976 = vmatprep.subr.mxu0 0.0
  %2977 = vmatpush1.msra.mxu0 0.0
  %2978 = vmatprep.subr.mxu0 0.0
  %2979 = vmatpush1.msra.mxu0 0.0
  %2980 = vmatprep.subr.mxu0 0.0
  %2981 = vmatpush1.msra.mxu0 0.0
  %2982 = vmatprep.subr.mxu0 0.0
  %2983 = vmatpush1.msra.mxu0 0.0
  %2984 = vmatprep.subr.mxu0 0.0
  %2985 = vmatpush1.msra.mxu0 0.0
  %2986 = vmatprep.subr.mxu0 0.0
  %2987 = vmatpush1.msra.mxu0 0.0
  %2988 = vmatprep.subr.mxu0 0.0
  %2989 = vmatpush1.msra.mxu0 0.0
  %2990 = vmatprep.subr.mxu0 0.0
  %2991 = vmatpush1.msra.mxu0 0.0
  %2992 = vmatprep.subr.mxu0 0.0
  %2993 = vmatpush1.msra.mxu0 0.0
  %2994 = vmatprep.subr.mxu0 0.0
  %2995 = vmatpush1.msra.mxu0 %v91
  %2996 = vmatprep.subr.mxu0 0.0
  %2997 = vmatpush1.msra.mxu0 %v90
  %2998 = vmatprep.subr.mxu0 0.0
  %2999 = vmatpush2.msra.mxu0 0.0
  %3000 = vmatprep.subr.mxu0 0.0
  %3001 = vmatpush2.msra.mxu0 0.0
  %3002 = vmatprep.subr.mxu0 0.0
  %3003 = vmatpush2.msra.mxu0 0.0
  %3004 = vmatprep.subr.mxu0 0.0
  %3005 = vmatpush2.msra.mxu0 0.0
  %3006 = vmatprep.subr.mxu0 0.0
  %3007 = vmatpush2.msra.mxu0 0.0
  %3008 = vmatprep.subr.mxu0 0.0
  %3009 = vmatpush2.msra.mxu0 0.0
  %3010 = vmatprep.subr.mxu0 0.0
  %3011 = vmatpush2.msra.mxu0 0.0
  %3012 = vmatprep.subr.mxu0 0.0
  %3013 = vmatpush2.msra.mxu0 0.0
  %3014 = vmatprep.subr.mxu0 0.0
  %3015 = vmatpush2.msra.mxu0 0.0
  %3016 = vmatprep.subr.mxu0 0.0
  %3017 = vmatpush2.msra.mxu0 0.0
  %3018 = vmatprep.subr.mxu0 0.0
  %3019 = vmatpush2.msra.mxu0 0.0
  %3020 = vmatprep.subr.mxu0 0.0
  %3021 = vmatpush2.msra.mxu0 0.0
  %3022 = vmatprep.subr.mxu0 0.0
  %3023 = vmatpush2.msra.mxu0 0.0
  %3024 = vmatprep.subr.mxu0 0.0
  %3025 = vmatpush2.msra.mxu0 0.0
  %3026 = vmatprep.subr.mxu0 0.0
  %3027 = vmatpush2.msra.mxu0 0.0
  %3028 = vmatprep.subr.mxu0 0.0
  %3029 = vmatpush2.msra.mxu0 0.0
  %3030 = vmatprep.mubr.f32.mxu0 0.0
  %3031 = vmatmul.mubr.f32.gmra.mxu0 %v2961
  %v3032 = vpop.f32.mrf.mxu0
  %v3033 = vadd.f32 0.0, %v3032
  %v3034 = vpop.f32.mrf.mxu0
  %3035 = vmatprep.mubr.f32.mxu0 0.0
  %3036 = vmatmul.mubr.f32.gmra.mxu0 %v2964
  %v3037 = vpop.f32.mrf.mxu0
  %v3038 = vadd.f32 0.0, %v3037
  %v3039 = vpop.f32.mrf.mxu0
  %3040 = vdwg.mxu0
  %3041 = vmatprep.subr.mxu0 0.0
  %3042 = vmatpush1.msra.mxu0 0.0
  %3043 = vmatprep.subr.mxu0 0.0
  %3044 = vmatpush1.msra.mxu0 0.0
  %3045 = vmatprep.subr.mxu0 0.0
  %3046 = vmatpush1.msra.mxu0 0.0
  %3047 = vmatprep.subr.mxu0 0.0
  %3048 = vmatpush1.msra.mxu0 0.0
  %3049 = vmatprep.subr.mxu0 0.0
  %3050 = vmatpush1.msra.mxu0 0.0
  %3051 = vmatprep.subr.mxu0 0.0
  %3052 = vmatpush1.msra.mxu0 0.0
  %3053 = vmatprep.subr.mxu0 0.0
  %3054 = vmatpush1.msra.mxu0 0.0
  %3055 = vmatprep.subr.mxu0 0.0
  %3056 = vmatpush1.msra.mxu0 0.0
  %3057 = vmatprep.subr.mxu0 0.0
  %3058 = vmatpush1.msra.mxu0 0.0
  %3059 = vmatprep.subr.mxu0 0.0
  %3060 = vmatpush1.msra.mxu0 0.0
  %3061 = vmatprep.subr.mxu0 0.0
  %3062 = vmatpush1.msra.mxu0 0.0
  %3063 = vmatprep.subr.mxu0 0.0
  %3064 = vmatpush1.msra.mxu0 0.0
  %3065 = vmatprep.subr.mxu0 0.0
  %3066 = vmatpush1.msra.mxu0 0.0
  %3067 = vmatprep.subr.mxu0 0.0
  %3068 = vmatpush1.msra.mxu0 0.0
  %3069 = vmatprep.subr.mxu0 0.0
  %3070 = vmatpush1.msra.mxu0 %v3038
  %3071 = vmatprep.subr.mxu0 0.0
  %3072 = vmatpush1.msra.mxu0 %v3033
  %3073 = vmatprep.subr.mxu0 0.0
  %3074 = vmatpush2.msra.mxu0 0.0
  %3075 = vmatprep.subr.mxu0 0.0
  %3076 = vmatpush2.msra.mxu0 0.0
  %3077 = vmatprep.subr.mxu0 0.0
  %3078 = vmatpush2.msra.mxu0 0.0
  %3079 = vmatprep.subr.mxu0 0.0
  %3080 = vmatpush2.msra.mxu0 0.0
  %3081 = vmatprep.subr.mxu0 0.0
  %3082 = vmatpush2.msra.mxu0 0.0
  %3083 = vmatprep.subr.mxu0 0.0
  %3084 = vmatpush2.msra.mxu0 0.0
  %3085 = vmatprep.subr.mxu0 0.0
  %3086 = vmatpush2.msra.mxu0 0.0
  %3087 = vmatprep.subr.mxu0 0.0
  %3088 = vmatpush2.msra.mxu0 0.0
  %3089 = vmatprep.subr.mxu0 0.0
  %3090 = vmatpush2.msra.mxu0 0.0
  %3091 = vmatprep.subr.mxu0 0.0
  %3092 = vmatpush2.msra.mxu0 0.0
  %3093 = vmatprep.subr.mxu0 0.0
  %3094 = vmatpush2.msra.mxu0 0.0
  %3095 = vmatprep.subr.mxu0 0.0
  %3096 = vmatpush2.msra.mxu0 0.0
  %3097 = vmatprep.subr.mxu0 0.0
  %3098 = vmatpush2.msra.mxu0 0.0
  %3099 = vmatprep.subr.mxu0 0.0
  %3100 = vmatpush2.msra.mxu0 0.0
  %3101 = vmatprep.subr.mxu0 0.0
  %3102 = vmatpush2.msra.mxu0 0.0
  %3103 = vmatprep.subr.mxu0 0.0
  %3104 = vmatpush2.msra.mxu0 0.0
  %3105 = vmatprep.mubr.f32.mxu0 0.0
  %3106 = vmatmul.mubr.f32.gmra.mxu0 %v199
  %v3107 = vpop.f32.mrf.mxu0
  %v3108 = vadd.f32 0.0, %v3107
  %v3109 = vpop.f32.mrf.mxu0
  %3110 = vmatprep.mubr.f32.mxu0 0.0
  %3111 = vmatmul.mubr.f32.gmra.mxu0 %v202
  %v3112 = vpop.f32.mrf.mxu0
  %v3113 = vadd.f32 0.0, %v3112
  %v3114 = vpop.f32.mrf.mxu0
  %3115 = vmatprep.mubr.f32.mxu0 0.0
  %3116 = vmatmul.mubr.f32.gmra.mxu0 %v205
  %v3117 = vpop.f32.mrf.mxu0
  %v3118 = vadd.f32 0.0, %v3117
  %v3119 = vpop.f32.mrf.mxu0
  %3120 = vdwg.mxu0
  %s3121 = scalar_lea.vmem %s7, 360
  %3122 = vst.msk [vmem:[%s3121] sm:$0xff] %vm116, %v3108
  %3123 = vst.msk [vmem:[%s3121 + $0x8] sm:$0xff] %vm116, %v3113
  %3124 = vst.msk [vmem:[%s3121 + $0x10] sm:$0xff] %vm116, %v3118
  // Predicated region
  $region30: #{tpu_custom_call.1} parent=0 // pred_check
    _
  $region31: #{tpu_custom_call.1} parent=0 // pred_check_branch
    %3126 = sbr.rel (0) target = $region33
  $region32: #{tpu_custom_call.1} parent=0 // pred_region
    _
  $region33: #{tpu_custom_call.1} parent=0 // pred_fallthru
    _
  // Predicated region
  $region34: #{tpu_custom_call.1} parent=0 // pred_check
    _
  $region35: #{tpu_custom_call.1} parent=0 // pred_check_branch
    %3128 = sbr.rel (0) target = $region37
  $region36: #{tpu_custom_call.1} parent=0 // pred_region
    _
  $region37: #{tpu_custom_call.1} parent=0 // pred_fallthru
    _
  %3129 = vsyncmov [#allocation3]
  %s3130 = vpop.sfrf %3129
  %p3131 = scmp.eq.s32.totalorder %s3130, 0
  %p3132 = pneg %p3131
  %3134 = shalt.err (%p3132)
  %s3135 = scalar_lea.sflag [#allocation3], 1
  %3136 = vsyncmov %s3135
  %s3137 = vpop.sfrf %3136
  %p3138 = scmp.eq.s32.totalorder %s3137, 0
  %p3139 = pneg %p3138
  %3141 = shalt.err (%p3139)

</llo_original>
